<compile_context>
chip_gen: v5e
topology: v5e:2x2
jax: 0.10.0
libtpu: 0.0.40
codegen_flags: <defaults>
</compile_context>

<pallas_src>
import math
import jax
import jax.numpy as jnp
from jax.experimental import pallas as pl
from jax.experimental.pallas import tpu as pltpu

# ---- model hyper-parameters (small, consistent with the module) -------------
IMG = 16          # img_size
CH = 3            # in_chans
PATCH = 4         # patch_size
D = 32            # embedding_dim
H = 4             # attention heads
DH = D // H       # head dim (8)
L = 2             # depth
DM = 64           # mlp hidden dim
NCLS = 10         # num_classes
N = (IMG // PATCH) ** 2      # 16 patches
PD = PATCH * PATCH * CH      # 48 = patch_size^2 * in_chans
S = N + 1                    # 17 tokens (cls + patches)
S_PAD = 24                   # tokens padded to a multiple of 8 sublanes
NCLS_PAD = 128               # lane-dense logits store, sliced in the wrapper
EPS = 1e-5
NEG_INF = -1e30


def _layer_norm(x, w, b):
    mu = jnp.mean(x, axis=-1, keepdims=True)
    var = jnp.mean((x - mu) ** 2, axis=-1, keepdims=True)
    return (x - mu) * jax.lax.rsqrt(var + EPS) * w + b


def _make_vit_kernel(bt):
    """Build the kernel for a batch tile of size `bt` (whole batch by default)."""
    T = bt * S_PAD
    scale = 1.0 / math.sqrt(DH)

    def vit_kernel(patch_ref, pe_w_ref, pe_b_ref, cls_ref, pos_ref,
                   ln1w_ref, ln1b_ref, wqkv_ref, bqkv_ref, wo_ref, bo_ref,
                   ln2w_ref, ln2b_ref, w1_ref, b1_ref, w2_ref, b2_ref,
                   lnfw_ref, lnfb_ref, hw_ref, hb_ref,
                   out_ref, xbuf_ref):
        # ---- patch embedding: all batch rows at once, (bt*N, PD) @ (PD, D)
        patches = patch_ref[...].reshape(bt * N, PD)
        emb = jnp.dot(patches, pe_w_ref[...],
                      preferred_element_type=jnp.float32) + pe_b_ref[...]
        emb = emb.reshape(bt, N, D) + pos_ref[...]            # (bt, N, D)

        # ---- assemble the padded token buffer in VMEM scratch (no concat):
        #      row 0 = cls, rows 1..N = patches, rows N+1..S_PAD-1 = zeros.
        xbuf_ref[:, 0:1, :] = jnp.broadcast_to(cls_ref[...], (bt, 1, D))
        xbuf_ref[:, 1:1 + N, :] = emb
        xbuf_ref[:, 1 + N:S_PAD, :] = jnp.zeros(
            (bt, S_PAD - 1 - N, D), jnp.float32)
        x = xbuf_ref[...].reshape(T, D)                        # (bt*S_PAD, D)

        # key-column validity mask (padded tokens must not receive weight)
        col = jax.lax.broadcasted_iota(jnp.int32, (bt, S_PAD, S_PAD), 2)
        kvalid = col < S

        for l in range(L):                                     # static unroll
            # ---- multi-head self-attention (pre-LN), fused QKV projection
            xn = _layer_norm(x, ln1w_ref[l], ln1b_ref[l])      # (T, D)
            qkv = jnp.dot(xn, wqkv_ref[l],
                          preferred_element_type=jnp.float32) + bqkv_ref[l]
            attn = jnp.zeros((T, D), jnp.float32)
            for h in range(H):                                 # static unroll
                qh = qkv[:, h * DH:(h + 1) * DH].reshape(bt, S_PAD, DH)
                kh = qkv[:, D + h * DH:D + (h + 1) * DH].reshape(bt, S_PAD, DH)
                vh = qkv[:, 2 * D + h * DH:2 * D + (h + 1) * DH].reshape(
                    bt, S_PAD, DH)
                s = jnp.einsum('bqd,bkd->bqk', qh, kh,
                               preferred_element_type=jnp.float32) * scale
                s = jnp.where(kvalid, s, NEG_INF)
                s = s - jnp.max(s, axis=-1, keepdims=True)
                p = jnp.exp(s)
                p = p * pl.reciprocal(jnp.sum(p, axis=-1, keepdims=True),
                                      approx=True)
                oh = jnp.einsum('bqk,bkd->bqd', p, vh,
                                preferred_element_type=jnp.float32)
                # fold the per-head slice of Wo here -> no concat over heads
                attn = attn + jnp.dot(oh.reshape(T, DH), wo_ref[l * H + h],
                                      preferred_element_type=jnp.float32)
            x = x + attn + bo_ref[l]

            # ---- MLP (pre-LN) with GELU
            xn2 = _layer_norm(x, ln2w_ref[l], ln2b_ref[l])
            h1 = jnp.dot(xn2, w1_ref[l],
                         preferred_element_type=jnp.float32) + b1_ref[l]
            # TODO(synk): PyTorch nn.GELU defaults to exact erf; tanh approx used here.
            h1 = jax.nn.gelu(h1, approximate=True)
            x = x + jnp.dot(h1, w2_ref[l],
                            preferred_element_type=jnp.float32) + b2_ref[l]

        # ---- final LN on cls rows only, classifier head, lane-dense store
        x3 = x.reshape(bt, S_PAD, D)
        clsx = x3[:, 0:1, :].reshape(bt, D)
        clsn = _layer_norm(clsx, lnfw_ref[...], lnfb_ref[...])
        out_ref[...] = jnp.dot(clsn, hw_ref[...],
                               preferred_element_type=jnp.float32) + hb_ref[...]

    return vit_kernel


def vit_forward(x_nchw, p, batch_tile=None):
    B = x_nchw.shape[0]
    bt = B if batch_tile is None else batch_tile
    assert B % bt == 0, "batch_tile must divide batch"

    # Rearrange 'b c (h p1) (w p2) -> b (h w) (p1 p2 c)'  (layout glue only)
    xp = x_nchw.reshape(B, CH, IMG // PATCH, PATCH, IMG // PATCH, PATCH)
    xp = xp.transpose(0, 2, 4, 3, 5, 1).reshape(B, N, PD)

    f32 = jnp.float32
    # ---- trace-time parameter fusion / re-layout (free, outside the kernel)
    wqkv = jnp.concatenate([p['wq'], p['wk'], p['wv']], axis=-1)         # (L,D,3D)
    bqkv = jnp.concatenate([p['bq'], p['bk'], p['bv']], axis=-1)[:, None, :]
    wo_h = p['wo'].reshape(L * H, DH, D)                                 # per-head Wo
    hw_pad = jnp.zeros((D, NCLS_PAD), f32).at[:, :NCLS].set(p['hw'])
    hb_pad = jnp.zeros((1, NCLS_PAD), f32).at[:, :NCLS].set(p['hb'])

    args = [xp,
            p['pe_w'], p['pe_b'], p['cls'], p['pos'],
            p['ln1w'][:, None, :], p['ln1b'][:, None, :],
            wqkv, bqkv, wo_h, p['bo'][:, None, :],
            p['ln2w'][:, None, :], p['ln2b'][:, None, :],
            p['w1'], p['b1'][:, None, :], p['w2'], p['b2'][:, None, :],
            p['lnfw'], p['lnfb'], hw_pad, hb_pad]

    def full_spec(a):
        nd = a.ndim
        return pl.BlockSpec(a.shape, lambda i, _nd=nd: (0,) * _nd)

    in_specs = [pl.BlockSpec((bt, N, PD), lambda i: (i, 0, 0))]
    in_specs += [full_spec(a) for a in args[1:]]

    out = pl.pallas_call(
        _make_vit_kernel(bt),
        out_shape=jax.ShapeDtypeStruct((B, NCLS_PAD), jnp.float32),
        grid_spec=pltpu.PrefetchScalarGridSpec(
            num_scalar_prefetch=0,
            grid=(B // bt,),
            in_specs=in_specs,
            out_specs=pl.BlockSpec((bt, NCLS_PAD), lambda i: (i, 0)),
            scratch_shapes=[pltpu.VMEM((bt, S_PAD, D), jnp.float32)],
        ),
        compiler_params=pltpu.CompilerParams(
            dimension_semantics=("parallel",)),   # megacore split on v7x
    )(*args)
    return out[:, :NCLS]


def init_params(key):
    ks = jax.random.split(key, 24)
    f32 = jnp.float32

    def nrm(k, shape, scale=0.02):
        return (scale * jax.random.normal(k, shape)).astype(f32)

    p = {}
    p['pe_w'] = nrm(ks[0], (PD, D));  p['pe_b'] = nrm(ks[1], (1, D))
    p['cls'] = nrm(ks[2], (1, D), 1.0)          # torch.randn-like
    p['pos'] = nrm(ks[3], (N, D), 1.0)          # torch.randn-like
    p['ln1w'] = jnp.ones((L, D), f32);  p['ln1b'] = jnp.zeros((L, D), f32)
    p['wq'] = nrm(ks[4], (L, D, D));   p['bq'] = nrm(ks[5], (L, D))
    p['wk'] = nrm(ks[6], (L, D, D));   p['bk'] = nrm(ks[7], (L, D))
    p['wv'] = nrm(ks[8], (L, D, D));   p['bv'] = nrm(ks[9], (L, D))
    p['wo'] = nrm(ks[10], (L, D, D));  p['bo'] = nrm(ks[11], (L, D))
    p['ln2w'] = jnp.ones((L, D), f32); p['ln2b'] = jnp.zeros((L, D), f32)
    p['w1'] = nrm(ks[12], (L, D, DM)); p['b1'] = nrm(ks[13], (L, DM))
    p['w2'] = nrm(ks[14], (L, DM, D)); p['b2'] = nrm(ks[15], (L, D))
    p['lnfw'] = jnp.ones((1, D), f32); p['lnfb'] = jnp.zeros((1, D), f32)
    p['hw'] = nrm(ks[16], (D, NCLS));  p['hb'] = nrm(ks[17], (1, NCLS))
    return p


def vit_reference(x_nchw, p):
    """Pure-JAX reference implementing the same math (for validation)."""
    B = x_nchw.shape[0]
    xp = x_nchw.reshape(B, CH, IMG // PATCH, PATCH, IMG // PATCH, PATCH)
    xp = xp.transpose(0, 2, 4, 3, 5, 1).reshape(B, N, PD)
    x = xp @ p['pe_w'] + p['pe_b'] + p['pos']
    cls = jnp.broadcast_to(p['cls'][None], (B, 1, D))
    x = jnp.concatenate([cls, x], axis=1)
    scale = 1.0 / math.sqrt(DH)

    def ln(x, w, b):
        mu = x.mean(-1, keepdims=True)
        var = ((x - mu) ** 2).mean(-1, keepdims=True)
        return (x - mu) * jax.lax.rsqrt(var + EPS) * w + b

    for l in range(L):
        xn = ln(x, p['ln1w'][l], p['ln1b'][l])
        q = (xn @ p['wq'][l] + p['bq'][l]).reshape(B, S, H, DH).transpose(0, 2, 1, 3)
        k = (xn @ p['wk'][l] + p['bk'][l]).reshape(B, S, H, DH).transpose(0, 2, 1, 3)
        v = (xn @ p['wv'][l] + p['bv'][l]).reshape(B, S, H, DH).transpose(0, 2, 1, 3)
        s = jnp.einsum('bhqd,bhkd->bhqk', q, k) * scale
        a = jax.nn.softmax(s, axis=-1)
        o = jnp.einsum('bhqk,bhkd->bhqd', a, v).transpose(0, 2, 1, 3).reshape(B, S, D)
        x = x + o @ p['wo'][l] + p['bo'][l]
        xn2 = ln(x, p['ln2w'][l], p['ln2b'][l])
        h1 = jax.nn.gelu(xn2 @ p['w1'][l] + p['b1'][l], approximate=True)
        x = x + h1 @ p['w2'][l] + p['b2'][l]
    x = ln(x, p['lnfw'], p['lnfb'])
    return x[:, 0, :] @ p['hw'] + p['hb']


if __name__ == "__main__":
    key = jax.random.PRNGKey(0)
    kx, kp = jax.random.split(key)
    x = jax.random.normal(kx, (2, CH, IMG, IMG), jnp.float32)   # NCHW like PyTorch
    params = init_params(kp)

    out = jax.block_until_ready(vit_forward(x, params))
    assert out.shape == (2, NCLS), out.shape

    ref = vit_reference(x, params)
    err = jnp.max(jnp.abs(out - ref))
    assert jnp.allclose(out, ref, atol=2e-3, rtol=2e-3), f"max abs err {err}"

    print("KERNEL_OK")
</pallas_src>

<mosaic_0001>
module attributes {stable_mosaic.version = 11 : i64} {
  func.func @vit_kernel(%arg0: i32, %arg1: memref<2x16x48xf32, #tpu.memory_space<vmem>>, %arg2: memref<48x32xf32, #tpu.memory_space<vmem>>, %arg3: memref<1x32xf32, #tpu.memory_space<vmem>>, %arg4: memref<1x32xf32, #tpu.memory_space<vmem>>, %arg5: memref<16x32xf32, #tpu.memory_space<vmem>>, %arg6: memref<2x1x32xf32, #tpu.memory_space<vmem>>, %arg7: memref<2x1x32xf32, #tpu.memory_space<vmem>>, %arg8: memref<2x32x96xf32, #tpu.memory_space<vmem>>, %arg9: memref<2x1x96xf32, #tpu.memory_space<vmem>>, %arg10: memref<8x8x32xf32, #tpu.memory_space<vmem>>, %arg11: memref<2x1x32xf32, #tpu.memory_space<vmem>>, %arg12: memref<2x1x32xf32, #tpu.memory_space<vmem>>, %arg13: memref<2x1x32xf32, #tpu.memory_space<vmem>>, %arg14: memref<2x32x64xf32, #tpu.memory_space<vmem>>, %arg15: memref<2x1x64xf32, #tpu.memory_space<vmem>>, %arg16: memref<2x64x32xf32, #tpu.memory_space<vmem>>, %arg17: memref<2x1x32xf32, #tpu.memory_space<vmem>>, %arg18: memref<1x32xf32, #tpu.memory_space<vmem>>, %arg19: memref<1x32xf32, #tpu.memory_space<vmem>>, %arg20: memref<32x128xf32, #tpu.memory_space<vmem>>, %arg21: memref<1x128xf32, #tpu.memory_space<vmem>>, %arg22: memref<2x128xf32, #tpu.memory_space<vmem>>, %arg23: memref<2x24x32xf32, #tpu.memory_space<vmem>>) attributes {dimension_semantics = [#tpu.dimension_semantics<parallel>], iteration_bounds = array<i64: 1>, scalar_prefetch = 0 : i64, scratch_operands = 1 : i64, tpu.core_type = #tpu.core_type<tc>, window_params = [{transform_indices = @transform_0, window_bounds = array<i64: 2, 16, 48>}, {pipeline_mode = #tpu.pipeline_mode<synchronous>, transform_indices = @transform_1, window_bounds = array<i64: 48, 32>}, {pipeline_mode = #tpu.pipeline_mode<synchronous>, transform_indices = @transform_2, window_bounds = array<i64: 1, 32>}, {pipeline_mode = #tpu.pipeline_mode<synchronous>, transform_indices = @transform_3, window_bounds = array<i64: 1, 32>}, {pipeline_mode = #tpu.pipeline_mode<synchronous>, transform_indices = @transform_4, window_bounds = array<i64: 16, 32>}, {pipeline_mode = #tpu.pipeline_mode<synchronous>, transform_indices = @transform_5, window_bounds = array<i64: 2, 1, 32>}, {pipeline_mode = #tpu.pipeline_mode<synchronous>, transform_indices = @transform_6, window_bounds = array<i64: 2, 1, 32>}, {pipeline_mode = #tpu.pipeline_mode<synchronous>, transform_indices = @transform_7, window_bounds = array<i64: 2, 32, 96>}, {pipeline_mode = #tpu.pipeline_mode<synchronous>, transform_indices = @transform_8, window_bounds = array<i64: 2, 1, 96>}, {pipeline_mode = #tpu.pipeline_mode<synchronous>, transform_indices = @transform_9, window_bounds = array<i64: 8, 8, 32>}, {pipeline_mode = #tpu.pipeline_mode<synchronous>, transform_indices = @transform_10, window_bounds = array<i64: 2, 1, 32>}, {pipeline_mode = #tpu.pipeline_mode<synchronous>, transform_indices = @transform_11, window_bounds = array<i64: 2, 1, 32>}, {pipeline_mode = #tpu.pipeline_mode<synchronous>, transform_indices = @transform_12, window_bounds = array<i64: 2, 1, 32>}, {pipeline_mode = #tpu.pipeline_mode<synchronous>, transform_indices = @transform_13, window_bounds = array<i64: 2, 32, 64>}, {pipeline_mode = #tpu.pipeline_mode<synchronous>, transform_indices = @transform_14, window_bounds = array<i64: 2, 1, 64>}, {pipeline_mode = #tpu.pipeline_mode<synchronous>, transform_indices = @transform_15, window_bounds = array<i64: 2, 64, 32>}, {pipeline_mode = #tpu.pipeline_mode<synchronous>, transform_indices = @transform_16, window_bounds = array<i64: 2, 1, 32>}, {pipeline_mode = #tpu.pipeline_mode<synchronous>, transform_indices = @transform_17, window_bounds = array<i64: 1, 32>}, {pipeline_mode = #tpu.pipeline_mode<synchronous>, transform_indices = @transform_18, window_bounds = array<i64: 1, 32>}, {pipeline_mode = #tpu.pipeline_mode<synchronous>, transform_indices = @transform_19, window_bounds = array<i64: 32, 128>}, {pipeline_mode = #tpu.pipeline_mode<synchronous>, transform_indices = @transform_20, window_bounds = array<i64: 1, 128>}, {transform_indices = @transform_21, window_bounds = array<i64: 2, 128>}]} {
    %c0 = arith.constant 0 : index
    %c0_0 = arith.constant 0 : index
    %c0_1 = arith.constant 0 : index
    %0 = vector.load %arg1[%c0, %c0_0, %c0_1] : memref<2x16x48xf32, #tpu.memory_space<vmem>>, vector<2x16x48xf32>
    %1 = vector.shape_cast %0 : vector<2x16x48xf32> to vector<32x48xf32>
    %c0_2 = arith.constant 0 : index
    %c0_3 = arith.constant 0 : index
    %2 = vector.load %arg2[%c0_2, %c0_3] : memref<48x32xf32, #tpu.memory_space<vmem>>, vector<48x32xf32>
    %cst = arith.constant dense<0.000000e+00> : vector<32x32xf32>
    %3 = tpu.matmul %1, %2, %cst {dimension_numbers = #tpu.dot_dimension_numbers<[1], [0], [0], [1], [0, 0, 1, 1], [], []>} : vector<32x48xf32>, vector<48x32xf32>, vector<32x32xf32> -> vector<32x32xf32>
    %c0_4 = arith.constant 0 : index
    %c0_5 = arith.constant 0 : index
    %4 = vector.load %arg3[%c0_4, %c0_5] : memref<1x32xf32, #tpu.memory_space<vmem>>, vector<1x32xf32>
    %5 = vector.broadcast %4 : vector<1x32xf32> to vector<32x32xf32>
    %6 = arith.addf %3, %5 : vector<32x32xf32>
    %7 = vector.shape_cast %6 : vector<32x32xf32> to vector<2x16x32xf32>
    %c0_6 = arith.constant 0 : index
    %c0_7 = arith.constant 0 : index
    %8 = vector.load %arg5[%c0_6, %c0_7] : memref<16x32xf32, #tpu.memory_space<vmem>>, vector<16x32xf32>
    %9 = vector.shape_cast %8 : vector<16x32xf32> to vector<1x16x32xf32>
    %10 = vector.broadcast %9 : vector<1x16x32xf32> to vector<2x16x32xf32>
    %11 = arith.addf %7, %10 : vector<2x16x32xf32>
    %c0_8 = arith.constant 0 : index
    %c0_9 = arith.constant 0 : index
    %12 = vector.load %arg4[%c0_8, %c0_9] : memref<1x32xf32, #tpu.memory_space<vmem>>, vector<1x32xf32>
    %13 = vector.shape_cast %12 : vector<1x32xf32> to vector<1x1x32xf32>
    %14 = vector.broadcast %13 : vector<1x1x32xf32> to vector<2x1x32xf32>
    %c0_10 = arith.constant 0 : index
    %c0_11 = arith.constant 0 : index
    %c0_12 = arith.constant 0 : index
    %15 = vector.load %arg23[%c0_10, %c0_11, %c0_12] : memref<2x24x32xf32, #tpu.memory_space<vmem>>, vector<2x1x32xf32>
    tpu.vector_store %arg23[%c0_10, %c0_11, %c0_12], %14 {strides = array<i32>} : memref<2x24x32xf32, #tpu.memory_space<vmem>>, vector<2x1x32xf32>,
    %c0_13 = arith.constant 0 : index
    %c1 = arith.constant 1 : index
    %c0_14 = arith.constant 0 : index
    %16 = vector.load %arg23[%c0_13, %c1, %c0_14] : memref<2x24x32xf32, #tpu.memory_space<vmem>>, vector<2x16x32xf32>
    tpu.vector_store %arg23[%c0_13, %c1, %c0_14], %11 {strides = array<i32>} : memref<2x24x32xf32, #tpu.memory_space<vmem>>, vector<2x16x32xf32>,
    %cst_15 = arith.constant 0.000000e+00 : f32
    %17 = vector.broadcast %cst_15 : f32 to vector<2x7x32xf32>
    %c0_16 = arith.constant 0 : index
    %c17 = arith.constant 17 : index
    %c0_17 = arith.constant 0 : index
    %18 = vector.load %arg23[%c0_16, %c17, %c0_17] : memref<2x24x32xf32, #tpu.memory_space<vmem>>, vector<2x7x32xf32>
    tpu.vector_store %arg23[%c0_16, %c17, %c0_17], %17 {strides = array<i32>} : memref<2x24x32xf32, #tpu.memory_space<vmem>>, vector<2x7x32xf32>,
    %c0_18 = arith.constant 0 : index
    %c0_19 = arith.constant 0 : index
    %c0_20 = arith.constant 0 : index
    %19 = vector.load %arg23[%c0_18, %c0_19, %c0_20] : memref<2x24x32xf32, #tpu.memory_space<vmem>>, vector<2x24x32xf32>
    %20 = vector.shape_cast %19 : vector<2x24x32xf32> to vector<48x32xf32>
    %21 = tpu.iota {dimensions = array<i32: 2>} : vector<2x24x24xi32>
    %c17_i32 = arith.constant 17 : i32
    %22 = vector.broadcast %c17_i32 : i32 to vector<2x24x24xi32>
    %23 = arith.cmpi slt, %21, %22 : vector<2x24x24xi32>
    %c0_21 = arith.constant 0 : index
    %c0_22 = arith.constant 0 : index
    %c0_23 = arith.constant 0 : index
    %24 = vector.load %arg6[%c0_21, %c0_22, %c0_23] : memref<2x1x32xf32, #tpu.memory_space<vmem>>, vector<1x1x32xf32>
    %25 = vector.shape_cast %24 : vector<1x1x32xf32> to vector<1x32xf32>
    %c0_24 = arith.constant 0 : index
    %c0_25 = arith.constant 0 : index
    %c0_26 = arith.constant 0 : index
    %26 = vector.load %arg7[%c0_24, %c0_25, %c0_26] : memref<2x1x32xf32, #tpu.memory_space<vmem>>, vector<1x1x32xf32>
    %27 = vector.shape_cast %26 : vector<1x1x32xf32> to vector<1x32xf32>
    %cst_27 = arith.constant dense<0.000000e+00> : vector<48xf32>
    %28 = vector.multi_reduction <add>, %20, %cst_27 [1] : vector<48x32xf32> to vector<48xf32>
    %29 = vector.shape_cast %28 : vector<48xf32> to vector<48x1xf32>
    %cst_28 = arith.constant 3.200000e+01 : f32
    %30 = vector.broadcast %cst_28 : f32 to vector<48x1xf32>
    %31 = arith.divf %29, %30 : vector<48x1xf32>
    %32 = vector.broadcast %31 : vector<48x1xf32> to vector<48x32xf32>
    %33 = arith.subf %20, %32 : vector<48x32xf32>
    %34 = arith.mulf %33, %33 : vector<48x32xf32>
    %cst_29 = arith.constant dense<0.000000e+00> : vector<48xf32>
    %35 = vector.multi_reduction <add>, %34, %cst_29 [1] : vector<48x32xf32> to vector<48xf32>
    %36 = vector.shape_cast %35 : vector<48xf32> to vector<48x1xf32>
    %cst_30 = arith.constant 3.200000e+01 : f32
    %37 = vector.broadcast %cst_30 : f32 to vector<48x1xf32>
    %38 = arith.divf %36, %37 : vector<48x1xf32>
    %39 = vector.broadcast %31 : vector<48x1xf32> to vector<48x32xf32>
    %40 = arith.subf %20, %39 : vector<48x32xf32>
    %cst_31 = arith.constant 9.99999974E-6 : f32
    %41 = vector.broadcast %cst_31 : f32 to vector<48x1xf32>
    %42 = arith.addf %38, %41 : vector<48x1xf32>
    %43 = math.rsqrt %42 : vector<48x1xf32>
    %44 = vector.broadcast %43 : vector<48x1xf32> to vector<48x32xf32>
    %45 = arith.mulf %40, %44 : vector<48x32xf32>
    %46 = vector.broadcast %25 : vector<1x32xf32> to vector<48x32xf32>
    %47 = arith.mulf %45, %46 : vector<48x32xf32>
    %48 = vector.broadcast %27 : vector<1x32xf32> to vector<48x32xf32>
    %49 = arith.addf %47, %48 : vector<48x32xf32>
    %c0_32 = arith.constant 0 : index
    %c0_33 = arith.constant 0 : index
    %c0_34 = arith.constant 0 : index
    %50 = vector.load %arg8[%c0_32, %c0_33, %c0_34] : memref<2x32x96xf32, #tpu.memory_space<vmem>>, vector<1x32x96xf32>
    %51 = vector.shape_cast %50 : vector<1x32x96xf32> to vector<32x96xf32>
    %cst_35 = arith.constant dense<0.000000e+00> : vector<48x96xf32>
    %52 = tpu.matmul %49, %51, %cst_35 {dimension_numbers = #tpu.dot_dimension_numbers<[1], [0], [0], [1], [0, 0, 1, 1], [], []>} : vector<48x32xf32>, vector<32x96xf32>, vector<48x96xf32> -> vector<48x96xf32>
    %c0_36 = arith.constant 0 : index
    %c0_37 = arith.constant 0 : index
    %c0_38 = arith.constant 0 : index
    %53 = vector.load %arg9[%c0_36, %c0_37, %c0_38] : memref<2x1x96xf32, #tpu.memory_space<vmem>>, vector<1x1x96xf32>
    %54 = vector.shape_cast %53 : vector<1x1x96xf32> to vector<1x96xf32>
    %55 = vector.broadcast %54 : vector<1x96xf32> to vector<48x96xf32>
    %56 = arith.addf %52, %55 : vector<48x96xf32>
    %cst_39 = arith.constant 0.000000e+00 : f32
    %57 = vector.broadcast %cst_39 : f32 to vector<48x32xf32>
    %58 = vector.extract_strided_slice %56 {offsets = [0, 0], sizes = [48, 8], strides = [1, 1]} : vector<48x96xf32> to vector<48x8xf32>
    %59 = vector.shape_cast %58 : vector<48x8xf32> to vector<2x24x8xf32>
    %60 = vector.extract_strided_slice %56 {offsets = [0, 32], sizes = [48, 8], strides = [1, 1]} : vector<48x96xf32> to vector<48x8xf32>
    %61 = vector.shape_cast %60 : vector<48x8xf32> to vector<2x24x8xf32>
    %62 = vector.extract_strided_slice %56 {offsets = [0, 64], sizes = [48, 8], strides = [1, 1]} : vector<48x96xf32> to vector<48x8xf32>
    %63 = vector.shape_cast %62 : vector<48x8xf32> to vector<2x24x8xf32>
    "tpu.trace_start"() <{level = 10 : i32, message = "bqd,bkd->bqk"}> : () -> ()
    %cst_40 = arith.constant dense<0.000000e+00> : vector<2x24x24xf32>
    %64 = tpu.matmul %59, %61, %cst_40 {dimension_numbers = #tpu.dot_dimension_numbers<[2], [2], [1], [1], [0, 0, 0, 1, 1, 1], [0], [0]>} : vector<2x24x8xf32>, vector<2x24x8xf32>, vector<2x24x24xf32> -> vector<2x24x24xf32>
    "tpu.trace_stop"() : () -> ()
    %cst_41 = arith.constant 0.353553385 : f32
    %65 = vector.broadcast %cst_41 : f32 to vector<2x24x24xf32>
    %66 = arith.mulf %64, %65 : vector<2x24x24xf32>
    %cst_42 = arith.constant -1.000000e+30 : f32
    %67 = vector.broadcast %cst_42 : f32 to vector<2x24x24xf32>
    %68 = arith.select %23, %66, %67 : vector<2x24x24xi1>, vector<2x24x24xf32>
    %cst_43 = arith.constant dense<0xFF800000> : vector<2x24xf32>
    %69 = vector.multi_reduction <maximumf>, %68, %cst_43 [2] : vector<2x24x24xf32> to vector<2x24xf32>
    %70 = vector.shape_cast %69 : vector<2x24xf32> to vector<2x24x1xf32>
    %71 = vector.broadcast %70 : vector<2x24x1xf32> to vector<2x24x24xf32>
    %72 = arith.subf %68, %71 : vector<2x24x24xf32>
    %73 = math.exp %72 : vector<2x24x24xf32>
    %cst_44 = arith.constant dense<0.000000e+00> : vector<2x24xf32>
    %74 = vector.multi_reduction <add>, %73, %cst_44 [2] : vector<2x24x24xf32> to vector<2x24xf32>
    %75 = vector.shape_cast %74 : vector<2x24xf32> to vector<2x24x1xf32>
    %76 = tpu.reciprocal %75 {approx = true} : vector<2x24x1xf32> -> vector<2x24x1xf32>
    %77 = vector.broadcast %76 : vector<2x24x1xf32> to vector<2x24x24xf32>
    %78 = arith.mulf %73, %77 : vector<2x24x24xf32>
    "tpu.trace_start"() <{level = 10 : i32, message = "bqk,bkd->bqd"}> : () -> ()
    %cst_45 = arith.constant dense<0.000000e+00> : vector<2x24x8xf32>
    %79 = tpu.matmul %78, %63, %cst_45 {dimension_numbers = #tpu.dot_dimension_numbers<[2], [1], [1], [2], [0, 0, 0, 1, 1, 2], [0], [0]>} : vector<2x24x24xf32>, vector<2x24x8xf32>, vector<2x24x8xf32> -> vector<2x24x8xf32>
    "tpu.trace_stop"() : () -> ()
    %80 = vector.shape_cast %79 : vector<2x24x8xf32> to vector<48x8xf32>
    %c0_46 = arith.constant 0 : index
    %c0_47 = arith.constant 0 : index
    %c0_48 = arith.constant 0 : index
    %81 = vector.load %arg10[%c0_46, %c0_47, %c0_48] : memref<8x8x32xf32, #tpu.memory_space<vmem>>, vector<1x8x32xf32>
    %82 = vector.shape_cast %81 : vector<1x8x32xf32> to vector<8x32xf32>
    %cst_49 = arith.constant dense<0.000000e+00> : vector<48x32xf32>
    %83 = tpu.matmul %80, %82, %cst_49 {dimension_numbers = #tpu.dot_dimension_numbers<[1], [0], [0], [1], [0, 0, 1, 1], [], []>} : vector<48x8xf32>, vector<8x32xf32>, vector<48x32xf32> -> vector<48x32xf32>
    %84 = arith.addf %57, %83 : vector<48x32xf32>
    %85 = vector.extract_strided_slice %56 {offsets = [0, 8], sizes = [48, 8], strides = [1, 1]} : vector<48x96xf32> to vector<48x8xf32>
    %86 = vector.shape_cast %85 : vector<48x8xf32> to vector<2x24x8xf32>
    %87 = vector.extract_strided_slice %56 {offsets = [0, 40], sizes = [48, 8], strides = [1, 1]} : vector<48x96xf32> to vector<48x8xf32>
    %88 = vector.shape_cast %87 : vector<48x8xf32> to vector<2x24x8xf32>
    %89 = vector.extract_strided_slice %56 {offsets = [0, 72], sizes = [48, 8], strides = [1, 1]} : vector<48x96xf32> to vector<48x8xf32>
    %90 = vector.shape_cast %89 : vector<48x8xf32> to vector<2x24x8xf32>
    "tpu.trace_start"() <{level = 10 : i32, message = "bqd,bkd->bqk"}> : () -> ()
    %cst_50 = arith.constant dense<0.000000e+00> : vector<2x24x24xf32>
    %91 = tpu.matmul %86, %88, %cst_50 {dimension_numbers = #tpu.dot_dimension_numbers<[2], [2], [1], [1], [0, 0, 0, 1, 1, 1], [0], [0]>} : vector<2x24x8xf32>, vector<2x24x8xf32>, vector<2x24x24xf32> -> vector<2x24x24xf32>
    "tpu.trace_stop"() : () -> ()
    %cst_51 = arith.constant 0.353553385 : f32
    %92 = vector.broadcast %cst_51 : f32 to vector<2x24x24xf32>
    %93 = arith.mulf %91, %92 : vector<2x24x24xf32>
    %cst_52 = arith.constant -1.000000e+30 : f32
    %94 = vector.broadcast %cst_52 : f32 to vector<2x24x24xf32>
    %95 = arith.select %23, %93, %94 : vector<2x24x24xi1>, vector<2x24x24xf32>
    %cst_53 = arith.constant dense<0xFF800000> : vector<2x24xf32>
    %96 = vector.multi_reduction <maximumf>, %95, %cst_53 [2] : vector<2x24x24xf32> to vector<2x24xf32>
    %97 = vector.shape_cast %96 : vector<2x24xf32> to vector<2x24x1xf32>
    %98 = vector.broadcast %97 : vector<2x24x1xf32> to vector<2x24x24xf32>
    %99 = arith.subf %95, %98 : vector<2x24x24xf32>
    %100 = math.exp %99 : vector<2x24x24xf32>
    %cst_54 = arith.constant dense<0.000000e+00> : vector<2x24xf32>
    %101 = vector.multi_reduction <add>, %100, %cst_54 [2] : vector<2x24x24xf32> to vector<2x24xf32>
    %102 = vector.shape_cast %101 : vector<2x24xf32> to vector<2x24x1xf32>
    %103 = tpu.reciprocal %102 {approx = true} : vector<2x24x1xf32> -> vector<2x24x1xf32>
    %104 = vector.broadcast %103 : vector<2x24x1xf32> to vector<2x24x24xf32>
    %105 = arith.mulf %100, %104 : vector<2x24x24xf32>
    "tpu.trace_start"() <{level = 10 : i32, message = "bqk,bkd->bqd"}> : () -> ()
    %cst_55 = arith.constant dense<0.000000e+00> : vector<2x24x8xf32>
    %106 = tpu.matmul %105, %90, %cst_55 {dimension_numbers = #tpu.dot_dimension_numbers<[2], [1], [1], [2], [0, 0, 0, 1, 1, 2], [0], [0]>} : vector<2x24x24xf32>, vector<2x24x8xf32>, vector<2x24x8xf32> -> vector<2x24x8xf32>
    "tpu.trace_stop"() : () -> ()
    %107 = vector.shape_cast %106 : vector<2x24x8xf32> to vector<48x8xf32>
    %c1_56 = arith.constant 1 : index
    %c0_57 = arith.constant 0 : index
    %c0_58 = arith.constant 0 : index
    %108 = vector.load %arg10[%c1_56, %c0_57, %c0_58] : memref<8x8x32xf32, #tpu.memory_space<vmem>>, vector<1x8x32xf32>
    %109 = vector.shape_cast %108 : vector<1x8x32xf32> to vector<8x32xf32>
    %cst_59 = arith.constant dense<0.000000e+00> : vector<48x32xf32>
    %110 = tpu.matmul %107, %109, %cst_59 {dimension_numbers = #tpu.dot_dimension_numbers<[1], [0], [0], [1], [0, 0, 1, 1], [], []>} : vector<48x8xf32>, vector<8x32xf32>, vector<48x32xf32> -> vector<48x32xf32>
    %111 = arith.addf %84, %110 : vector<48x32xf32>
    %112 = vector.extract_strided_slice %56 {offsets = [0, 16], sizes = [48, 8], strides = [1, 1]} : vector<48x96xf32> to vector<48x8xf32>
    %113 = vector.shape_cast %112 : vector<48x8xf32> to vector<2x24x8xf32>
    %114 = vector.extract_strided_slice %56 {offsets = [0, 48], sizes = [48, 8], strides = [1, 1]} : vector<48x96xf32> to vector<48x8xf32>
    %115 = vector.shape_cast %114 : vector<48x8xf32> to vector<2x24x8xf32>
    %116 = vector.extract_strided_slice %56 {offsets = [0, 80], sizes = [48, 8], strides = [1, 1]} : vector<48x96xf32> to vector<48x8xf32>
    %117 = vector.shape_cast %116 : vector<48x8xf32> to vector<2x24x8xf32>
    "tpu.trace_start"() <{level = 10 : i32, message = "bqd,bkd->bqk"}> : () -> ()
    %cst_60 = arith.constant dense<0.000000e+00> : vector<2x24x24xf32>
    %118 = tpu.matmul %113, %115, %cst_60 {dimension_numbers = #tpu.dot_dimension_numbers<[2], [2], [1], [1], [0, 0, 0, 1, 1, 1], [0], [0]>} : vector<2x24x8xf32>, vector<2x24x8xf32>, vector<2x24x24xf32> -> vector<2x24x24xf32>
    "tpu.trace_stop"() : () -> ()
    %cst_61 = arith.constant 0.353553385 : f32
    %119 = vector.broadcast %cst_61 : f32 to vector<2x24x24xf32>
    %120 = arith.mulf %118, %119 : vector<2x24x24xf32>
    %cst_62 = arith.constant -1.000000e+30 : f32
    %121 = vector.broadcast %cst_62 : f32 to vector<2x24x24xf32>
    %122 = arith.select %23, %120, %121 : vector<2x24x24xi1>, vector<2x24x24xf32>
    %cst_63 = arith.constant dense<0xFF800000> : vector<2x24xf32>
    %123 = vector.multi_reduction <maximumf>, %122, %cst_63 [2] : vector<2x24x24xf32> to vector<2x24xf32>
    %124 = vector.shape_cast %123 : vector<2x24xf32> to vector<2x24x1xf32>
    %125 = vector.broadcast %124 : vector<2x24x1xf32> to vector<2x24x24xf32>
    %126 = arith.subf %122, %125 : vector<2x24x24xf32>
    %127 = math.exp %126 : vector<2x24x24xf32>
    %cst_64 = arith.constant dense<0.000000e+00> : vector<2x24xf32>
    %128 = vector.multi_reduction <add>, %127, %cst_64 [2] : vector<2x24x24xf32> to vector<2x24xf32>
    %129 = vector.shape_cast %128 : vector<2x24xf32> to vector<2x24x1xf32>
    %130 = tpu.reciprocal %129 {approx = true} : vector<2x24x1xf32> -> vector<2x24x1xf32>
    %131 = vector.broadcast %130 : vector<2x24x1xf32> to vector<2x24x24xf32>
    %132 = arith.mulf %127, %131 : vector<2x24x24xf32>
    "tpu.trace_start"() <{level = 10 : i32, message = "bqk,bkd->bqd"}> : () -> ()
    %cst_65 = arith.constant dense<0.000000e+00> : vector<2x24x8xf32>
    %133 = tpu.matmul %132, %117, %cst_65 {dimension_numbers = #tpu.dot_dimension_numbers<[2], [1], [1], [2], [0, 0, 0, 1, 1, 2], [0], [0]>} : vector<2x24x24xf32>, vector<2x24x8xf32>, vector<2x24x8xf32> -> vector<2x24x8xf32>
    "tpu.trace_stop"() : () -> ()
    %134 = vector.shape_cast %133 : vector<2x24x8xf32> to vector<48x8xf32>
    %c2 = arith.constant 2 : index
    %c0_66 = arith.constant 0 : index
    %c0_67 = arith.constant 0 : index
    %135 = vector.load %arg10[%c2, %c0_66, %c0_67] : memref<8x8x32xf32, #tpu.memory_space<vmem>>, vector<1x8x32xf32>
    %136 = vector.shape_cast %135 : vector<1x8x32xf32> to vector<8x32xf32>
    %cst_68 = arith.constant dense<0.000000e+00> : vector<48x32xf32>
    %137 = tpu.matmul %134, %136, %cst_68 {dimension_numbers = #tpu.dot_dimension_numbers<[1], [0], [0], [1], [0, 0, 1, 1], [], []>} : vector<48x8xf32>, vector<8x32xf32>, vector<48x32xf32> -> vector<48x32xf32>
    %138 = arith.addf %111, %137 : vector<48x32xf32>
    %139 = vector.extract_strided_slice %56 {offsets = [0, 24], sizes = [48, 8], strides = [1, 1]} : vector<48x96xf32> to vector<48x8xf32>
    %140 = vector.shape_cast %139 : vector<48x8xf32> to vector<2x24x8xf32>
    %141 = vector.extract_strided_slice %56 {offsets = [0, 56], sizes = [48, 8], strides = [1, 1]} : vector<48x96xf32> to vector<48x8xf32>
    %142 = vector.shape_cast %141 : vector<48x8xf32> to vector<2x24x8xf32>
    %143 = vector.extract_strided_slice %56 {offsets = [0, 88], sizes = [48, 8], strides = [1, 1]} : vector<48x96xf32> to vector<48x8xf32>
    %144 = vector.shape_cast %143 : vector<48x8xf32> to vector<2x24x8xf32>
    "tpu.trace_start"() <{level = 10 : i32, message = "bqd,bkd->bqk"}> : () -> ()
    %cst_69 = arith.constant dense<0.000000e+00> : vector<2x24x24xf32>
    %145 = tpu.matmul %140, %142, %cst_69 {dimension_numbers = #tpu.dot_dimension_numbers<[2], [2], [1], [1], [0, 0, 0, 1, 1, 1], [0], [0]>} : vector<2x24x8xf32>, vector<2x24x8xf32>, vector<2x24x24xf32> -> vector<2x24x24xf32>
    "tpu.trace_stop"() : () -> ()
    %cst_70 = arith.constant 0.353553385 : f32
    %146 = vector.broadcast %cst_70 : f32 to vector<2x24x24xf32>
    %147 = arith.mulf %145, %146 : vector<2x24x24xf32>
    %cst_71 = arith.constant -1.000000e+30 : f32
    %148 = vector.broadcast %cst_71 : f32 to vector<2x24x24xf32>
    %149 = arith.select %23, %147, %148 : vector<2x24x24xi1>, vector<2x24x24xf32>
    %cst_72 = arith.constant dense<0xFF800000> : vector<2x24xf32>
    %150 = vector.multi_reduction <maximumf>, %149, %cst_72 [2] : vector<2x24x24xf32> to vector<2x24xf32>
    %151 = vector.shape_cast %150 : vector<2x24xf32> to vector<2x24x1xf32>
    %152 = vector.broadcast %151 : vector<2x24x1xf32> to vector<2x24x24xf32>
    %153 = arith.subf %149, %152 : vector<2x24x24xf32>
    %154 = math.exp %153 : vector<2x24x24xf32>
    %cst_73 = arith.constant dense<0.000000e+00> : vector<2x24xf32>
    %155 = vector.multi_reduction <add>, %154, %cst_73 [2] : vector<2x24x24xf32> to vector<2x24xf32>
    %156 = vector.shape_cast %155 : vector<2x24xf32> to vector<2x24x1xf32>
    %157 = tpu.reciprocal %156 {approx = true} : vector<2x24x1xf32> -> vector<2x24x1xf32>
    %158 = vector.broadcast %157 : vector<2x24x1xf32> to vector<2x24x24xf32>
    %159 = arith.mulf %154, %158 : vector<2x24x24xf32>
    "tpu.trace_start"() <{level = 10 : i32, message = "bqk,bkd->bqd"}> : () -> ()
    %cst_74 = arith.constant dense<0.000000e+00> : vector<2x24x8xf32>
    %160 = tpu.matmul %159, %144, %cst_74 {dimension_numbers = #tpu.dot_dimension_numbers<[2], [1], [1], [2], [0, 0, 0, 1, 1, 2], [0], [0]>} : vector<2x24x24xf32>, vector<2x24x8xf32>, vector<2x24x8xf32> -> vector<2x24x8xf32>
    "tpu.trace_stop"() : () -> ()
    %161 = vector.shape_cast %160 : vector<2x24x8xf32> to vector<48x8xf32>
    %c3 = arith.constant 3 : index
    %c0_75 = arith.constant 0 : index
    %c0_76 = arith.constant 0 : index
    %162 = vector.load %arg10[%c3, %c0_75, %c0_76] : memref<8x8x32xf32, #tpu.memory_space<vmem>>, vector<1x8x32xf32>
    %163 = vector.shape_cast %162 : vector<1x8x32xf32> to vector<8x32xf32>
    %cst_77 = arith.constant dense<0.000000e+00> : vector<48x32xf32>
    %164 = tpu.matmul %161, %163, %cst_77 {dimension_numbers = #tpu.dot_dimension_numbers<[1], [0], [0], [1], [0, 0, 1, 1], [], []>} : vector<48x8xf32>, vector<8x32xf32>, vector<48x32xf32> -> vector<48x32xf32>
    %165 = arith.addf %138, %164 : vector<48x32xf32>
    %166 = arith.addf %20, %165 : vector<48x32xf32>
    %c0_78 = arith.constant 0 : index
    %c0_79 = arith.constant 0 : index
    %c0_80 = arith.constant 0 : index
    %167 = vector.load %arg11[%c0_78, %c0_79, %c0_80] : memref<2x1x32xf32, #tpu.memory_space<vmem>>, vector<1x1x32xf32>
    %168 = vector.shape_cast %167 : vector<1x1x32xf32> to vector<1x32xf32>
    %169 = vector.broadcast %168 : vector<1x32xf32> to vector<48x32xf32>
    %170 = arith.addf %166, %169 : vector<48x32xf32>
    %c0_81 = arith.constant 0 : index
    %c0_82 = arith.constant 0 : index
    %c0_83 = arith.constant 0 : index
    %171 = vector.load %arg12[%c0_81, %c0_82, %c0_83] : memref<2x1x32xf32, #tpu.memory_space<vmem>>, vector<1x1x32xf32>
    %172 = vector.shape_cast %171 : vector<1x1x32xf32> to vector<1x32xf32>
    %c0_84 = arith.constant 0 : index
    %c0_85 = arith.constant 0 : index
    %c0_86 = arith.constant 0 : index
    %173 = vector.load %arg13[%c0_84, %c0_85, %c0_86] : memref<2x1x32xf32, #tpu.memory_space<vmem>>, vector<1x1x32xf32>
    %174 = vector.shape_cast %173 : vector<1x1x32xf32> to vector<1x32xf32>
    %cst_87 = arith.constant dense<0.000000e+00> : vector<48xf32>
    %175 = vector.multi_reduction <add>, %170, %cst_87 [1] : vector<48x32xf32> to vector<48xf32>
    %176 = vector.shape_cast %175 : vector<48xf32> to vector<48x1xf32>
    %cst_88 = arith.constant 3.200000e+01 : f32
    %177 = vector.broadcast %cst_88 : f32 to vector<48x1xf32>
    %178 = arith.divf %176, %177 : vector<48x1xf32>
    %179 = vector.broadcast %178 : vector<48x1xf32> to vector<48x32xf32>
    %180 = arith.subf %170, %179 : vector<48x32xf32>
    %181 = arith.mulf %180, %180 : vector<48x32xf32>
    %cst_89 = arith.constant dense<0.000000e+00> : vector<48xf32>
    %182 = vector.multi_reduction <add>, %181, %cst_89 [1] : vector<48x32xf32> to vector<48xf32>
    %183 = vector.shape_cast %182 : vector<48xf32> to vector<48x1xf32>
    %cst_90 = arith.constant 3.200000e+01 : f32
    %184 = vector.broadcast %cst_90 : f32 to vector<48x1xf32>
    %185 = arith.divf %183, %184 : vector<48x1xf32>
    %186 = vector.broadcast %178 : vector<48x1xf32> to vector<48x32xf32>
    %187 = arith.subf %170, %186 : vector<48x32xf32>
    %cst_91 = arith.constant 9.99999974E-6 : f32
    %188 = vector.broadcast %cst_91 : f32 to vector<48x1xf32>
    %189 = arith.addf %185, %188 : vector<48x1xf32>
    %190 = math.rsqrt %189 : vector<48x1xf32>
    %191 = vector.broadcast %190 : vector<48x1xf32> to vector<48x32xf32>
    %192 = arith.mulf %187, %191 : vector<48x32xf32>
    %193 = vector.broadcast %172 : vector<1x32xf32> to vector<48x32xf32>
    %194 = arith.mulf %192, %193 : vector<48x32xf32>
    %195 = vector.broadcast %174 : vector<1x32xf32> to vector<48x32xf32>
    %196 = arith.addf %194, %195 : vector<48x32xf32>
    %c0_92 = arith.constant 0 : index
    %c0_93 = arith.constant 0 : index
    %c0_94 = arith.constant 0 : index
    %197 = vector.load %arg14[%c0_92, %c0_93, %c0_94] : memref<2x32x64xf32, #tpu.memory_space<vmem>>, vector<1x32x64xf32>
    %198 = vector.shape_cast %197 : vector<1x32x64xf32> to vector<32x64xf32>
    %cst_95 = arith.constant dense<0.000000e+00> : vector<48x64xf32>
    %199 = tpu.matmul %196, %198, %cst_95 {dimension_numbers = #tpu.dot_dimension_numbers<[1], [0], [0], [1], [0, 0, 1, 1], [], []>} : vector<48x32xf32>, vector<32x64xf32>, vector<48x64xf32> -> vector<48x64xf32>
    %c0_96 = arith.constant 0 : index
    %c0_97 = arith.constant 0 : index
    %c0_98 = arith.constant 0 : index
    %200 = vector.load %arg15[%c0_96, %c0_97, %c0_98] : memref<2x1x64xf32, #tpu.memory_space<vmem>>, vector<1x1x64xf32>
    %201 = vector.shape_cast %200 : vector<1x1x64xf32> to vector<1x64xf32>
    %202 = vector.broadcast %201 : vector<1x64xf32> to vector<48x64xf32>
    %203 = arith.addf %199, %202 : vector<48x64xf32>
    %204 = arith.mulf %203, %203 : vector<48x64xf32>
    %205 = arith.mulf %203, %204 : vector<48x64xf32>
    %cst_99 = arith.constant 4.471500e-02 : f32
    %206 = vector.broadcast %cst_99 : f32 to vector<48x64xf32>
    %207 = arith.mulf %206, %205 : vector<48x64xf32>
    %208 = arith.addf %203, %207 : vector<48x64xf32>
    %cst_100 = arith.constant 0.797884583 : f32
    %209 = vector.broadcast %cst_100 : f32 to vector<48x64xf32>
    %210 = arith.mulf %209, %208 : vector<48x64xf32>
    %211 = math.tanh %210 : vector<48x64xf32>
    %cst_101 = arith.constant 1.000000e+00 : f32
    %212 = vector.broadcast %cst_101 : f32 to vector<48x64xf32>
    %213 = arith.addf %212, %211 : vector<48x64xf32>
    %cst_102 = arith.constant 5.000000e-01 : f32
    %214 = vector.broadcast %cst_102 : f32 to vector<48x64xf32>
    %215 = arith.mulf %214, %213 : vector<48x64xf32>
    %216 = arith.mulf %203, %215 : vector<48x64xf32>
    %c0_103 = arith.constant 0 : index
    %c0_104 = arith.constant 0 : index
    %c0_105 = arith.constant 0 : index
    %217 = vector.load %arg16[%c0_103, %c0_104, %c0_105] : memref<2x64x32xf32, #tpu.memory_space<vmem>>, vector<1x64x32xf32>
    %218 = vector.shape_cast %217 : vector<1x64x32xf32> to vector<64x32xf32>
    %cst_106 = arith.constant dense<0.000000e+00> : vector<48x32xf32>
    %219 = tpu.matmul %216, %218, %cst_106 {dimension_numbers = #tpu.dot_dimension_numbers<[1], [0], [0], [1], [0, 0, 1, 1], [], []>} : vector<48x64xf32>, vector<64x32xf32>, vector<48x32xf32> -> vector<48x32xf32>
    %220 = arith.addf %170, %219 : vector<48x32xf32>
    %c0_107 = arith.constant 0 : index
    %c0_108 = arith.constant 0 : index
    %c0_109 = arith.constant 0 : index
    %221 = vector.load %arg17[%c0_107, %c0_108, %c0_109] : memref<2x1x32xf32, #tpu.memory_space<vmem>>, vector<1x1x32xf32>
    %222 = vector.shape_cast %221 : vector<1x1x32xf32> to vector<1x32xf32>
    %223 = vector.broadcast %222 : vector<1x32xf32> to vector<48x32xf32>
    %224 = arith.addf %220, %223 : vector<48x32xf32>
    %c1_110 = arith.constant 1 : index
    %c0_111 = arith.constant 0 : index
    %c0_112 = arith.constant 0 : index
    %225 = vector.load %arg6[%c1_110, %c0_111, %c0_112] : memref<2x1x32xf32, #tpu.memory_space<vmem>>, vector<1x1x32xf32>
    %226 = vector.shape_cast %225 : vector<1x1x32xf32> to vector<1x32xf32>
    %c1_113 = arith.constant 1 : index
    %c0_114 = arith.constant 0 : index
    %c0_115 = arith.constant 0 : index
    %227 = vector.load %arg7[%c1_113, %c0_114, %c0_115] : memref<2x1x32xf32, #tpu.memory_space<vmem>>, vector<1x1x32xf32>
    %228 = vector.shape_cast %227 : vector<1x1x32xf32> to vector<1x32xf32>
    %cst_116 = arith.constant dense<0.000000e+00> : vector<48xf32>
    %229 = vector.multi_reduction <add>, %224, %cst_116 [1] : vector<48x32xf32> to vector<48xf32>
    %230 = vector.shape_cast %229 : vector<48xf32> to vector<48x1xf32>
    %cst_117 = arith.constant 3.200000e+01 : f32
    %231 = vector.broadcast %cst_117 : f32 to vector<48x1xf32>
    %232 = arith.divf %230, %231 : vector<48x1xf32>
    %233 = vector.broadcast %232 : vector<48x1xf32> to vector<48x32xf32>
    %234 = arith.subf %224, %233 : vector<48x32xf32>
    %235 = arith.mulf %234, %234 : vector<48x32xf32>
    %cst_118 = arith.constant dense<0.000000e+00> : vector<48xf32>
    %236 = vector.multi_reduction <add>, %235, %cst_118 [1] : vector<48x32xf32> to vector<48xf32>
    %237 = vector.shape_cast %236 : vector<48xf32> to vector<48x1xf32>
    %cst_119 = arith.constant 3.200000e+01 : f32
    %238 = vector.broadcast %cst_119 : f32 to vector<48x1xf32>
    %239 = arith.divf %237, %238 : vector<48x1xf32>
    %240 = vector.broadcast %232 : vector<48x1xf32> to vector<48x32xf32>
    %241 = arith.subf %224, %240 : vector<48x32xf32>
    %cst_120 = arith.constant 9.99999974E-6 : f32
    %242 = vector.broadcast %cst_120 : f32 to vector<48x1xf32>
    %243 = arith.addf %239, %242 : vector<48x1xf32>
    %244 = math.rsqrt %243 : vector<48x1xf32>
    %245 = vector.broadcast %244 : vector<48x1xf32> to vector<48x32xf32>
    %246 = arith.mulf %241, %245 : vector<48x32xf32>
    %247 = vector.broadcast %226 : vector<1x32xf32> to vector<48x32xf32>
    %248 = arith.mulf %246, %247 : vector<48x32xf32>
    %249 = vector.broadcast %228 : vector<1x32xf32> to vector<48x32xf32>
    %250 = arith.addf %248, %249 : vector<48x32xf32>
    %c1_121 = arith.constant 1 : index
    %c0_122 = arith.constant 0 : index
    %c0_123 = arith.constant 0 : index
    %251 = vector.load %arg8[%c1_121, %c0_122, %c0_123] : memref<2x32x96xf32, #tpu.memory_space<vmem>>, vector<1x32x96xf32>
    %252 = vector.shape_cast %251 : vector<1x32x96xf32> to vector<32x96xf32>
    %cst_124 = arith.constant dense<0.000000e+00> : vector<48x96xf32>
    %253 = tpu.matmul %250, %252, %cst_124 {dimension_numbers = #tpu.dot_dimension_numbers<[1], [0], [0], [1], [0, 0, 1, 1], [], []>} : vector<48x32xf32>, vector<32x96xf32>, vector<48x96xf32> -> vector<48x96xf32>
    %c1_125 = arith.constant 1 : index
    %c0_126 = arith.constant 0 : index
    %c0_127 = arith.constant 0 : index
    %254 = vector.load %arg9[%c1_125, %c0_126, %c0_127] : memref<2x1x96xf32, #tpu.memory_space<vmem>>, vector<1x1x96xf32>
    %255 = vector.shape_cast %254 : vector<1x1x96xf32> to vector<1x96xf32>
    %256 = vector.broadcast %255 : vector<1x96xf32> to vector<48x96xf32>
    %257 = arith.addf %253, %256 : vector<48x96xf32>
    %cst_128 = arith.constant 0.000000e+00 : f32
    %258 = vector.broadcast %cst_128 : f32 to vector<48x32xf32>
    %259 = vector.extract_strided_slice %257 {offsets = [0, 0], sizes = [48, 8], strides = [1, 1]} : vector<48x96xf32> to vector<48x8xf32>
    %260 = vector.shape_cast %259 : vector<48x8xf32> to vector<2x24x8xf32>
    %261 = vector.extract_strided_slice %257 {offsets = [0, 32], sizes = [48, 8], strides = [1, 1]} : vector<48x96xf32> to vector<48x8xf32>
    %262 = vector.shape_cast %261 : vector<48x8xf32> to vector<2x24x8xf32>
    %263 = vector.extract_strided_slice %257 {offsets = [0, 64], sizes = [48, 8], strides = [1, 1]} : vector<48x96xf32> to vector<48x8xf32>
    %264 = vector.shape_cast %263 : vector<48x8xf32> to vector<2x24x8xf32>
    "tpu.trace_start"() <{level = 10 : i32, message = "bqd,bkd->bqk"}> : () -> ()
    %cst_129 = arith.constant dense<0.000000e+00> : vector<2x24x24xf32>
    %265 = tpu.matmul %260, %262, %cst_129 {dimension_numbers = #tpu.dot_dimension_numbers<[2], [2], [1], [1], [0, 0, 0, 1, 1, 1], [0], [0]>} : vector<2x24x8xf32>, vector<2x24x8xf32>, vector<2x24x24xf32> -> vector<2x24x24xf32>
    "tpu.trace_stop"() : () -> ()
    %cst_130 = arith.constant 0.353553385 : f32
    %266 = vector.broadcast %cst_130 : f32 to vector<2x24x24xf32>
    %267 = arith.mulf %265, %266 : vector<2x24x24xf32>
    %cst_131 = arith.constant -1.000000e+30 : f32
    %268 = vector.broadcast %cst_131 : f32 to vector<2x24x24xf32>
    %269 = arith.select %23, %267, %268 : vector<2x24x24xi1>, vector<2x24x24xf32>
    %cst_132 = arith.constant dense<0xFF800000> : vector<2x24xf32>
    %270 = vector.multi_reduction <maximumf>, %269, %cst_132 [2] : vector<2x24x24xf32> to vector<2x24xf32>
    %271 = vector.shape_cast %270 : vector<2x24xf32> to vector<2x24x1xf32>
    %272 = vector.broadcast %271 : vector<2x24x1xf32> to vector<2x24x24xf32>
    %273 = arith.subf %269, %272 : vector<2x24x24xf32>
    %274 = math.exp %273 : vector<2x24x24xf32>
    %cst_133 = arith.constant dense<0.000000e+00> : vector<2x24xf32>
    %275 = vector.multi_reduction <add>, %274, %cst_133 [2] : vector<2x24x24xf32> to vector<2x24xf32>
    %276 = vector.shape_cast %275 : vector<2x24xf32> to vector<2x24x1xf32>
    %277 = tpu.reciprocal %276 {approx = true} : vector<2x24x1xf32> -> vector<2x24x1xf32>
    %278 = vector.broadcast %277 : vector<2x24x1xf32> to vector<2x24x24xf32>
    %279 = arith.mulf %274, %278 : vector<2x24x24xf32>
    "tpu.trace_start"() <{level = 10 : i32, message = "bqk,bkd->bqd"}> : () -> ()
    %cst_134 = arith.constant dense<0.000000e+00> : vector<2x24x8xf32>
    %280 = tpu.matmul %279, %264, %cst_134 {dimension_numbers = #tpu.dot_dimension_numbers<[2], [1], [1], [2], [0, 0, 0, 1, 1, 2], [0], [0]>} : vector<2x24x24xf32>, vector<2x24x8xf32>, vector<2x24x8xf32> -> vector<2x24x8xf32>
    "tpu.trace_stop"() : () -> ()
    %281 = vector.shape_cast %280 : vector<2x24x8xf32> to vector<48x8xf32>
    %c4 = arith.constant 4 : index
    %c0_135 = arith.constant 0 : index
    %c0_136 = arith.constant 0 : index
    %282 = vector.load %arg10[%c4, %c0_135, %c0_136] : memref<8x8x32xf32, #tpu.memory_space<vmem>>, vector<1x8x32xf32>
    %283 = vector.shape_cast %282 : vector<1x8x32xf32> to vector<8x32xf32>
    %cst_137 = arith.constant dense<0.000000e+00> : vector<48x32xf32>
    %284 = tpu.matmul %281, %283, %cst_137 {dimension_numbers = #tpu.dot_dimension_numbers<[1], [0], [0], [1], [0, 0, 1, 1], [], []>} : vector<48x8xf32>, vector<8x32xf32>, vector<48x32xf32> -> vector<48x32xf32>
    %285 = arith.addf %258, %284 : vector<48x32xf32>
    %286 = vector.extract_strided_slice %257 {offsets = [0, 8], sizes = [48, 8], strides = [1, 1]} : vector<48x96xf32> to vector<48x8xf32>
    %287 = vector.shape_cast %286 : vector<48x8xf32> to vector<2x24x8xf32>
    %288 = vector.extract_strided_slice %257 {offsets = [0, 40], sizes = [48, 8], strides = [1, 1]} : vector<48x96xf32> to vector<48x8xf32>
    %289 = vector.shape_cast %288 : vector<48x8xf32> to vector<2x24x8xf32>
    %290 = vector.extract_strided_slice %257 {offsets = [0, 72], sizes = [48, 8], strides = [1, 1]} : vector<48x96xf32> to vector<48x8xf32>
    %291 = vector.shape_cast %290 : vector<48x8xf32> to vector<2x24x8xf32>
    "tpu.trace_start"() <{level = 10 : i32, message = "bqd,bkd->bqk"}> : () -> ()
    %cst_138 = arith.constant dense<0.000000e+00> : vector<2x24x24xf32>
    %292 = tpu.matmul %287, %289, %cst_138 {dimension_numbers = #tpu.dot_dimension_numbers<[2], [2], [1], [1], [0, 0, 0, 1, 1, 1], [0], [0]>} : vector<2x24x8xf32>, vector<2x24x8xf32>, vector<2x24x24xf32> -> vector<2x24x24xf32>
    "tpu.trace_stop"() : () -> ()
    %cst_139 = arith.constant 0.353553385 : f32
    %293 = vector.broadcast %cst_139 : f32 to vector<2x24x24xf32>
    %294 = arith.mulf %292, %293 : vector<2x24x24xf32>
    %cst_140 = arith.constant -1.000000e+30 : f32
    %295 = vector.broadcast %cst_140 : f32 to vector<2x24x24xf32>
    %296 = arith.select %23, %294, %295 : vector<2x24x24xi1>, vector<2x24x24xf32>
    %cst_141 = arith.constant dense<0xFF800000> : vector<2x24xf32>
    %297 = vector.multi_reduction <maximumf>, %296, %cst_141 [2] : vector<2x24x24xf32> to vector<2x24xf32>
    %298 = vector.shape_cast %297 : vector<2x24xf32> to vector<2x24x1xf32>
    %299 = vector.broadcast %298 : vector<2x24x1xf32> to vector<2x24x24xf32>
    %300 = arith.subf %296, %299 : vector<2x24x24xf32>
    %301 = math.exp %300 : vector<2x24x24xf32>
    %cst_142 = arith.constant dense<0.000000e+00> : vector<2x24xf32>
    %302 = vector.multi_reduction <add>, %301, %cst_142 [2] : vector<2x24x24xf32> to vector<2x24xf32>
    %303 = vector.shape_cast %302 : vector<2x24xf32> to vector<2x24x1xf32>
    %304 = tpu.reciprocal %303 {approx = true} : vector<2x24x1xf32> -> vector<2x24x1xf32>
    %305 = vector.broadcast %304 : vector<2x24x1xf32> to vector<2x24x24xf32>
    %306 = arith.mulf %301, %305 : vector<2x24x24xf32>
    "tpu.trace_start"() <{level = 10 : i32, message = "bqk,bkd->bqd"}> : () -> ()
    %cst_143 = arith.constant dense<0.000000e+00> : vector<2x24x8xf32>
    %307 = tpu.matmul %306, %291, %cst_143 {dimension_numbers = #tpu.dot_dimension_numbers<[2], [1], [1], [2], [0, 0, 0, 1, 1, 2], [0], [0]>} : vector<2x24x24xf32>, vector<2x24x8xf32>, vector<2x24x8xf32> -> vector<2x24x8xf32>
    "tpu.trace_stop"() : () -> ()
    %308 = vector.shape_cast %307 : vector<2x24x8xf32> to vector<48x8xf32>
    %c5 = arith.constant 5 : index
    %c0_144 = arith.constant 0 : index
    %c0_145 = arith.constant 0 : index
    %309 = vector.load %arg10[%c5, %c0_144, %c0_145] : memref<8x8x32xf32, #tpu.memory_space<vmem>>, vector<1x8x32xf32>
    %310 = vector.shape_cast %309 : vector<1x8x32xf32> to vector<8x32xf32>
    %cst_146 = arith.constant dense<0.000000e+00> : vector<48x32xf32>
    %311 = tpu.matmul %308, %310, %cst_146 {dimension_numbers = #tpu.dot_dimension_numbers<[1], [0], [0], [1], [0, 0, 1, 1], [], []>} : vector<48x8xf32>, vector<8x32xf32>, vector<48x32xf32> -> vector<48x32xf32>
    %312 = arith.addf %285, %311 : vector<48x32xf32>
    %313 = vector.extract_strided_slice %257 {offsets = [0, 16], sizes = [48, 8], strides = [1, 1]} : vector<48x96xf32> to vector<48x8xf32>
    %314 = vector.shape_cast %313 : vector<48x8xf32> to vector<2x24x8xf32>
    %315 = vector.extract_strided_slice %257 {offsets = [0, 48], sizes = [48, 8], strides = [1, 1]} : vector<48x96xf32> to vector<48x8xf32>
    %316 = vector.shape_cast %315 : vector<48x8xf32> to vector<2x24x8xf32>
    %317 = vector.extract_strided_slice %257 {offsets = [0, 80], sizes = [48, 8], strides = [1, 1]} : vector<48x96xf32> to vector<48x8xf32>
    %318 = vector.shape_cast %317 : vector<48x8xf32> to vector<2x24x8xf32>
    "tpu.trace_start"() <{level = 10 : i32, message = "bqd,bkd->bqk"}> : () -> ()
    %cst_147 = arith.constant dense<0.000000e+00> : vector<2x24x24xf32>
    %319 = tpu.matmul %314, %316, %cst_147 {dimension_numbers = #tpu.dot_dimension_numbers<[2], [2], [1], [1], [0, 0, 0, 1, 1, 1], [0], [0]>} : vector<2x24x8xf32>, vector<2x24x8xf32>, vector<2x24x24xf32> -> vector<2x24x24xf32>
    "tpu.trace_stop"() : () -> ()
    %cst_148 = arith.constant 0.353553385 : f32
    %320 = vector.broadcast %cst_148 : f32 to vector<2x24x24xf32>
    %321 = arith.mulf %319, %320 : vector<2x24x24xf32>
    %cst_149 = arith.constant -1.000000e+30 : f32
    %322 = vector.broadcast %cst_149 : f32 to vector<2x24x24xf32>
    %323 = arith.select %23, %321, %322 : vector<2x24x24xi1>, vector<2x24x24xf32>
    %cst_150 = arith.constant dense<0xFF800000> : vector<2x24xf32>
    %324 = vector.multi_reduction <maximumf>, %323, %cst_150 [2] : vector<2x24x24xf32> to vector<2x24xf32>
    %325 = vector.shape_cast %324 : vector<2x24xf32> to vector<2x24x1xf32>
    %326 = vector.broadcast %325 : vector<2x24x1xf32> to vector<2x24x24xf32>
    %327 = arith.subf %323, %326 : vector<2x24x24xf32>
    %328 = math.exp %327 : vector<2x24x24xf32>
    %cst_151 = arith.constant dense<0.000000e+00> : vector<2x24xf32>
    %329 = vector.multi_reduction <add>, %328, %cst_151 [2] : vector<2x24x24xf32> to vector<2x24xf32>
    %330 = vector.shape_cast %329 : vector<2x24xf32> to vector<2x24x1xf32>
    %331 = tpu.reciprocal %330 {approx = true} : vector<2x24x1xf32> -> vector<2x24x1xf32>
    %332 = vector.broadcast %331 : vector<2x24x1xf32> to vector<2x24x24xf32>
    %333 = arith.mulf %328, %332 : vector<2x24x24xf32>
    "tpu.trace_start"() <{level = 10 : i32, message = "bqk,bkd->bqd"}> : () -> ()
    %cst_152 = arith.constant dense<0.000000e+00> : vector<2x24x8xf32>
    %334 = tpu.matmul %333, %318, %cst_152 {dimension_numbers = #tpu.dot_dimension_numbers<[2], [1], [1], [2], [0, 0, 0, 1, 1, 2], [0], [0]>} : vector<2x24x24xf32>, vector<2x24x8xf32>, vector<2x24x8xf32> -> vector<2x24x8xf32>
    "tpu.trace_stop"() : () -> ()
    %335 = vector.shape_cast %334 : vector<2x24x8xf32> to vector<48x8xf32>
    %c6 = arith.constant 6 : index
    %c0_153 = arith.constant 0 : index
    %c0_154 = arith.constant 0 : index
    %336 = vector.load %arg10[%c6, %c0_153, %c0_154] : memref<8x8x32xf32, #tpu.memory_space<vmem>>, vector<1x8x32xf32>
    %337 = vector.shape_cast %336 : vector<1x8x32xf32> to vector<8x32xf32>
    %cst_155 = arith.constant dense<0.000000e+00> : vector<48x32xf32>
    %338 = tpu.matmul %335, %337, %cst_155 {dimension_numbers = #tpu.dot_dimension_numbers<[1], [0], [0], [1], [0, 0, 1, 1], [], []>} : vector<48x8xf32>, vector<8x32xf32>, vector<48x32xf32> -> vector<48x32xf32>
    %339 = arith.addf %312, %338 : vector<48x32xf32>
    %340 = vector.extract_strided_slice %257 {offsets = [0, 24], sizes = [48, 8], strides = [1, 1]} : vector<48x96xf32> to vector<48x8xf32>
    %341 = vector.shape_cast %340 : vector<48x8xf32> to vector<2x24x8xf32>
    %342 = vector.extract_strided_slice %257 {offsets = [0, 56], sizes = [48, 8], strides = [1, 1]} : vector<48x96xf32> to vector<48x8xf32>
    %343 = vector.shape_cast %342 : vector<48x8xf32> to vector<2x24x8xf32>
    %344 = vector.extract_strided_slice %257 {offsets = [0, 88], sizes = [48, 8], strides = [1, 1]} : vector<48x96xf32> to vector<48x8xf32>
    %345 = vector.shape_cast %344 : vector<48x8xf32> to vector<2x24x8xf32>
    "tpu.trace_start"() <{level = 10 : i32, message = "bqd,bkd->bqk"}> : () -> ()
    %cst_156 = arith.constant dense<0.000000e+00> : vector<2x24x24xf32>
    %346 = tpu.matmul %341, %343, %cst_156 {dimension_numbers = #tpu.dot_dimension_numbers<[2], [2], [1], [1], [0, 0, 0, 1, 1, 1], [0], [0]>} : vector<2x24x8xf32>, vector<2x24x8xf32>, vector<2x24x24xf32> -> vector<2x24x24xf32>
    "tpu.trace_stop"() : () -> ()
    %cst_157 = arith.constant 0.353553385 : f32
    %347 = vector.broadcast %cst_157 : f32 to vector<2x24x24xf32>
    %348 = arith.mulf %346, %347 : vector<2x24x24xf32>
    %cst_158 = arith.constant -1.000000e+30 : f32
    %349 = vector.broadcast %cst_158 : f32 to vector<2x24x24xf32>
    %350 = arith.select %23, %348, %349 : vector<2x24x24xi1>, vector<2x24x24xf32>
    %cst_159 = arith.constant dense<0xFF800000> : vector<2x24xf32>
    %351 = vector.multi_reduction <maximumf>, %350, %cst_159 [2] : vector<2x24x24xf32> to vector<2x24xf32>
    %352 = vector.shape_cast %351 : vector<2x24xf32> to vector<2x24x1xf32>
    %353 = vector.broadcast %352 : vector<2x24x1xf32> to vector<2x24x24xf32>
    %354 = arith.subf %350, %353 : vector<2x24x24xf32>
    %355 = math.exp %354 : vector<2x24x24xf32>
    %cst_160 = arith.constant dense<0.000000e+00> : vector<2x24xf32>
    %356 = vector.multi_reduction <add>, %355, %cst_160 [2] : vector<2x24x24xf32> to vector<2x24xf32>
    %357 = vector.shape_cast %356 : vector<2x24xf32> to vector<2x24x1xf32>
    %358 = tpu.reciprocal %357 {approx = true} : vector<2x24x1xf32> -> vector<2x24x1xf32>
    %359 = vector.broadcast %358 : vector<2x24x1xf32> to vector<2x24x24xf32>
    %360 = arith.mulf %355, %359 : vector<2x24x24xf32>
    "tpu.trace_start"() <{level = 10 : i32, message = "bqk,bkd->bqd"}> : () -> ()
    %cst_161 = arith.constant dense<0.000000e+00> : vector<2x24x8xf32>
    %361 = tpu.matmul %360, %345, %cst_161 {dimension_numbers = #tpu.dot_dimension_numbers<[2], [1], [1], [2], [0, 0, 0, 1, 1, 2], [0], [0]>} : vector<2x24x24xf32>, vector<2x24x8xf32>, vector<2x24x8xf32> -> vector<2x24x8xf32>
    "tpu.trace_stop"() : () -> ()
    %362 = vector.shape_cast %361 : vector<2x24x8xf32> to vector<48x8xf32>
    %c7 = arith.constant 7 : index
    %c0_162 = arith.constant 0 : index
    %c0_163 = arith.constant 0 : index
    %363 = vector.load %arg10[%c7, %c0_162, %c0_163] : memref<8x8x32xf32, #tpu.memory_space<vmem>>, vector<1x8x32xf32>
    %364 = vector.shape_cast %363 : vector<1x8x32xf32> to vector<8x32xf32>
    %cst_164 = arith.constant dense<0.000000e+00> : vector<48x32xf32>
    %365 = tpu.matmul %362, %364, %cst_164 {dimension_numbers = #tpu.dot_dimension_numbers<[1], [0], [0], [1], [0, 0, 1, 1], [], []>} : vector<48x8xf32>, vector<8x32xf32>, vector<48x32xf32> -> vector<48x32xf32>
    %366 = arith.addf %339, %365 : vector<48x32xf32>
    %367 = arith.addf %224, %366 : vector<48x32xf32>
    %c1_165 = arith.constant 1 : index
    %c0_166 = arith.constant 0 : index
    %c0_167 = arith.constant 0 : index
    %368 = vector.load %arg11[%c1_165, %c0_166, %c0_167] : memref<2x1x32xf32, #tpu.memory_space<vmem>>, vector<1x1x32xf32>
    %369 = vector.shape_cast %368 : vector<1x1x32xf32> to vector<1x32xf32>
    %370 = vector.broadcast %369 : vector<1x32xf32> to vector<48x32xf32>
    %371 = arith.addf %367, %370 : vector<48x32xf32>
    %c1_168 = arith.constant 1 : index
    %c0_169 = arith.constant 0 : index
    %c0_170 = arith.constant 0 : index
    %372 = vector.load %arg12[%c1_168, %c0_169, %c0_170] : memref<2x1x32xf32, #tpu.memory_space<vmem>>, vector<1x1x32xf32>
    %373 = vector.shape_cast %372 : vector<1x1x32xf32> to vector<1x32xf32>
    %c1_171 = arith.constant 1 : index
    %c0_172 = arith.constant 0 : index
    %c0_173 = arith.constant 0 : index
    %374 = vector.load %arg13[%c1_171, %c0_172, %c0_173] : memref<2x1x32xf32, #tpu.memory_space<vmem>>, vector<1x1x32xf32>
    %375 = vector.shape_cast %374 : vector<1x1x32xf32> to vector<1x32xf32>
    %cst_174 = arith.constant dense<0.000000e+00> : vector<48xf32>
    %376 = vector.multi_reduction <add>, %371, %cst_174 [1] : vector<48x32xf32> to vector<48xf32>
    %377 = vector.shape_cast %376 : vector<48xf32> to vector<48x1xf32>
    %cst_175 = arith.constant 3.200000e+01 : f32
    %378 = vector.broadcast %cst_175 : f32 to vector<48x1xf32>
    %379 = arith.divf %377, %378 : vector<48x1xf32>
    %380 = vector.broadcast %379 : vector<48x1xf32> to vector<48x32xf32>
    %381 = arith.subf %371, %380 : vector<48x32xf32>
    %382 = arith.mulf %381, %381 : vector<48x32xf32>
    %cst_176 = arith.constant dense<0.000000e+00> : vector<48xf32>
    %383 = vector.multi_reduction <add>, %382, %cst_176 [1] : vector<48x32xf32> to vector<48xf32>
    %384 = vector.shape_cast %383 : vector<48xf32> to vector<48x1xf32>
    %cst_177 = arith.constant 3.200000e+01 : f32
    %385 = vector.broadcast %cst_177 : f32 to vector<48x1xf32>
    %386 = arith.divf %384, %385 : vector<48x1xf32>
    %387 = vector.broadcast %379 : vector<48x1xf32> to vector<48x32xf32>
    %388 = arith.subf %371, %387 : vector<48x32xf32>
    %cst_178 = arith.constant 9.99999974E-6 : f32
    %389 = vector.broadcast %cst_178 : f32 to vector<48x1xf32>
    %390 = arith.addf %386, %389 : vector<48x1xf32>
    %391 = math.rsqrt %390 : vector<48x1xf32>
    %392 = vector.broadcast %391 : vector<48x1xf32> to vector<48x32xf32>
    %393 = arith.mulf %388, %392 : vector<48x32xf32>
    %394 = vector.broadcast %373 : vector<1x32xf32> to vector<48x32xf32>
    %395 = arith.mulf %393, %394 : vector<48x32xf32>
    %396 = vector.broadcast %375 : vector<1x32xf32> to vector<48x32xf32>
    %397 = arith.addf %395, %396 : vector<48x32xf32>
    %c1_179 = arith.constant 1 : index
    %c0_180 = arith.constant 0 : index
    %c0_181 = arith.constant 0 : index
    %398 = vector.load %arg14[%c1_179, %c0_180, %c0_181] : memref<2x32x64xf32, #tpu.memory_space<vmem>>, vector<1x32x64xf32>
    %399 = vector.shape_cast %398 : vector<1x32x64xf32> to vector<32x64xf32>
    %cst_182 = arith.constant dense<0.000000e+00> : vector<48x64xf32>
    %400 = tpu.matmul %397, %399, %cst_182 {dimension_numbers = #tpu.dot_dimension_numbers<[1], [0], [0], [1], [0, 0, 1, 1], [], []>} : vector<48x32xf32>, vector<32x64xf32>, vector<48x64xf32> -> vector<48x64xf32>
    %c1_183 = arith.constant 1 : index
    %c0_184 = arith.constant 0 : index
    %c0_185 = arith.constant 0 : index
    %401 = vector.load %arg15[%c1_183, %c0_184, %c0_185] : memref<2x1x64xf32, #tpu.memory_space<vmem>>, vector<1x1x64xf32>
    %402 = vector.shape_cast %401 : vector<1x1x64xf32> to vector<1x64xf32>
    %403 = vector.broadcast %402 : vector<1x64xf32> to vector<48x64xf32>
    %404 = arith.addf %400, %403 : vector<48x64xf32>
    %405 = arith.mulf %404, %404 : vector<48x64xf32>
    %406 = arith.mulf %404, %405 : vector<48x64xf32>
    %cst_186 = arith.constant 4.471500e-02 : f32
    %407 = vector.broadcast %cst_186 : f32 to vector<48x64xf32>
    %408 = arith.mulf %407, %406 : vector<48x64xf32>
    %409 = arith.addf %404, %408 : vector<48x64xf32>
    %cst_187 = arith.constant 0.797884583 : f32
    %410 = vector.broadcast %cst_187 : f32 to vector<48x64xf32>
    %411 = arith.mulf %410, %409 : vector<48x64xf32>
    %412 = math.tanh %411 : vector<48x64xf32>
    %cst_188 = arith.constant 1.000000e+00 : f32
    %413 = vector.broadcast %cst_188 : f32 to vector<48x64xf32>
    %414 = arith.addf %413, %412 : vector<48x64xf32>
    %cst_189 = arith.constant 5.000000e-01 : f32
    %415 = vector.broadcast %cst_189 : f32 to vector<48x64xf32>
    %416 = arith.mulf %415, %414 : vector<48x64xf32>
    %417 = arith.mulf %404, %416 : vector<48x64xf32>
    %c1_190 = arith.constant 1 : index
    %c0_191 = arith.constant 0 : index
    %c0_192 = arith.constant 0 : index
    %418 = vector.load %arg16[%c1_190, %c0_191, %c0_192] : memref<2x64x32xf32, #tpu.memory_space<vmem>>, vector<1x64x32xf32>
    %419 = vector.shape_cast %418 : vector<1x64x32xf32> to vector<64x32xf32>
    %cst_193 = arith.constant dense<0.000000e+00> : vector<48x32xf32>
    %420 = tpu.matmul %417, %419, %cst_193 {dimension_numbers = #tpu.dot_dimension_numbers<[1], [0], [0], [1], [0, 0, 1, 1], [], []>} : vector<48x64xf32>, vector<64x32xf32>, vector<48x32xf32> -> vector<48x32xf32>
    %421 = arith.addf %371, %420 : vector<48x32xf32>
    %c1_194 = arith.constant 1 : index
    %c0_195 = arith.constant 0 : index
    %c0_196 = arith.constant 0 : index
    %422 = vector.load %arg17[%c1_194, %c0_195, %c0_196] : memref<2x1x32xf32, #tpu.memory_space<vmem>>, vector<1x1x32xf32>
    %423 = vector.shape_cast %422 : vector<1x1x32xf32> to vector<1x32xf32>
    %424 = vector.broadcast %423 : vector<1x32xf32> to vector<48x32xf32>
    %425 = arith.addf %421, %424 : vector<48x32xf32>
    %426 = vector.shape_cast %425 : vector<48x32xf32> to vector<2x24x32xf32>
    %427 = vector.extract_strided_slice %426 {offsets = [0, 0, 0], sizes = [2, 1, 32], strides = [1, 1, 1]} : vector<2x24x32xf32> to vector<2x1x32xf32>
    %428 = vector.shape_cast %427 : vector<2x1x32xf32> to vector<2x32xf32>
    %c0_197 = arith.constant 0 : index
    %c0_198 = arith.constant 0 : index
    %429 = vector.load %arg18[%c0_197, %c0_198] : memref<1x32xf32, #tpu.memory_space<vmem>>, vector<1x32xf32>
    %c0_199 = arith.constant 0 : index
    %c0_200 = arith.constant 0 : index
    %430 = vector.load %arg19[%c0_199, %c0_200] : memref<1x32xf32, #tpu.memory_space<vmem>>, vector<1x32xf32>
    %cst_201 = arith.constant dense<0.000000e+00> : vector<2xf32>
    %431 = vector.multi_reduction <add>, %428, %cst_201 [1] : vector<2x32xf32> to vector<2xf32>
    %432 = vector.shape_cast %431 : vector<2xf32> to vector<2x1xf32>
    %cst_202 = arith.constant 3.200000e+01 : f32
    %433 = vector.broadcast %cst_202 : f32 to vector<2x1xf32>
    %434 = arith.divf %432, %433 : vector<2x1xf32>
    %435 = vector.broadcast %434 : vector<2x1xf32> to vector<2x32xf32>
    %436 = arith.subf %428, %435 : vector<2x32xf32>
    %437 = arith.mulf %436, %436 : vector<2x32xf32>
    %cst_203 = arith.constant dense<0.000000e+00> : vector<2xf32>
    %438 = vector.multi_reduction <add>, %437, %cst_203 [1] : vector<2x32xf32> to vector<2xf32>
    %439 = vector.shape_cast %438 : vector<2xf32> to vector<2x1xf32>
    %cst_204 = arith.constant 3.200000e+01 : f32
    %440 = vector.broadcast %cst_204 : f32 to vector<2x1xf32>
    %441 = arith.divf %439, %440 : vector<2x1xf32>
    %442 = vector.broadcast %434 : vector<2x1xf32> to vector<2x32xf32>
    %443 = arith.subf %428, %442 : vector<2x32xf32>
    %cst_205 = arith.constant 9.99999974E-6 : f32
    %444 = vector.broadcast %cst_205 : f32 to vector<2x1xf32>
    %445 = arith.addf %441, %444 : vector<2x1xf32>
    %446 = math.rsqrt %445 : vector<2x1xf32>
    %447 = vector.broadcast %446 : vector<2x1xf32> to vector<2x32xf32>
    %448 = arith.mulf %443, %447 : vector<2x32xf32>
    %449 = vector.broadcast %429 : vector<1x32xf32> to vector<2x32xf32>
    %450 = arith.mulf %448, %449 : vector<2x32xf32>
    %451 = vector.broadcast %430 : vector<1x32xf32> to vector<2x32xf32>
    %452 = arith.addf %450, %451 : vector<2x32xf32>
    %c0_206 = arith.constant 0 : index
    %c0_207 = arith.constant 0 : index
    %453 = vector.load %arg20[%c0_206, %c0_207] : memref<32x128xf32, #tpu.memory_space<vmem>>, vector<32x128xf32>
    %cst_208 = arith.constant dense<0.000000e+00> : vector<2x128xf32>
    %454 = tpu.matmul %452, %453, %cst_208 {dimension_numbers = #tpu.dot_dimension_numbers<[1], [0], [0], [1], [0, 0, 1, 1], [], []>} : vector<2x32xf32>, vector<32x128xf32>, vector<2x128xf32> -> vector<2x128xf32>
    %c0_209 = arith.constant 0 : index
    %c0_210 = arith.constant 0 : index
    %455 = vector.load %arg21[%c0_209, %c0_210] : memref<1x128xf32, #tpu.memory_space<vmem>>, vector<1x128xf32>
    %456 = vector.broadcast %455 : vector<1x128xf32> to vector<2x128xf32>
    %457 = arith.addf %454, %456 : vector<2x128xf32>
    %c0_211 = arith.constant 0 : index
    %c0_212 = arith.constant 0 : index
    %458 = vector.load %arg22[%c0_211, %c0_212] : memref<2x128xf32, #tpu.memory_space<vmem>>, vector<2x128xf32>
    tpu.vector_store %arg22[%c0_211, %c0_212], %457 {strides = array<i32>} : memref<2x128xf32, #tpu.memory_space<vmem>>, vector<2x128xf32>,
    return
  }
  func.func @transform_0(%arg0: i32) -> (i32, i32, i32) {
    %c0_i32 = arith.constant 0 : i32
    %c0_i32_0 = arith.constant 0 : i32
    %c0_i32_1 = arith.constant 0 : i32
    return %arg0, %c0_i32, %c0_i32_0 : i32, i32, i32
  }
  func.func @transform_1(%arg0: i32) -> (i32, i32) {
    %c0_i32 = arith.constant 0 : i32
    %c0_i32_0 = arith.constant 0 : i32
    %c0_i32_1 = arith.constant 0 : i32
    return %c0_i32, %c0_i32_0 : i32, i32
  }
  func.func @transform_2(%arg0: i32) -> (i32, i32) {
    %c0_i32 = arith.constant 0 : i32
    %c0_i32_0 = arith.constant 0 : i32
    %c0_i32_1 = arith.constant 0 : i32
    return %c0_i32, %c0_i32_0 : i32, i32
  }
  func.func @transform_3(%arg0: i32) -> (i32, i32) {
    %c0_i32 = arith.constant 0 : i32
    %c0_i32_0 = arith.constant 0 : i32
    %c0_i32_1 = arith.constant 0 : i32
    return %c0_i32, %c0_i32_0 : i32, i32
  }
  func.func @transform_4(%arg0: i32) -> (i32, i32) {
    %c0_i32 = arith.constant 0 : i32
    %c0_i32_0 = arith.constant 0 : i32
    %c0_i32_1 = arith.constant 0 : i32
    return %c0_i32, %c0_i32_0 : i32, i32
  }
  func.func @transform_5(%arg0: i32) -> (i32, i32, i32) {
    %c0_i32 = arith.constant 0 : i32
    %c0_i32_0 = arith.constant 0 : i32
    %c0_i32_1 = arith.constant 0 : i32
    %c0_i32_2 = arith.constant 0 : i32
    return %c0_i32, %c0_i32_0, %c0_i32_1 : i32, i32, i32
  }
  func.func @transform_6(%arg0: i32) -> (i32, i32, i32) {
    %c0_i32 = arith.constant 0 : i32
    %c0_i32_0 = arith.constant 0 : i32
    %c0_i32_1 = arith.constant 0 : i32
    %c0_i32_2 = arith.constant 0 : i32
    return %c0_i32, %c0_i32_0, %c0_i32_1 : i32, i32, i32
  }
  func.func @transform_7(%arg0: i32) -> (i32, i32, i32) {
    %c0_i32 = arith.constant 0 : i32
    %c0_i32_0 = arith.constant 0 : i32
    %c0_i32_1 = arith.constant 0 : i32
    %c0_i32_2 = arith.constant 0 : i32
    return %c0_i32, %c0_i32_0, %c0_i32_1 : i32, i32, i32
  }
  func.func @transform_8(%arg0: i32) -> (i32, i32, i32) {
    %c0_i32 = arith.constant 0 : i32
    %c0_i32_0 = arith.constant 0 : i32
    %c0_i32_1 = arith.constant 0 : i32
    %c0_i32_2 = arith.constant 0 : i32
    return %c0_i32, %c0_i32_0, %c0_i32_1 : i32, i32, i32
  }
  func.func @transform_9(%arg0: i32) -> (i32, i32, i32) {
    %c0_i32 = arith.constant 0 : i32
    %c0_i32_0 = arith.constant 0 : i32
    %c0_i32_1 = arith.constant 0 : i32
    %c0_i32_2 = arith.constant 0 : i32
    return %c0_i32, %c0_i32_0, %c0_i32_1 : i32, i32, i32
  }
  func.func @transform_10(%arg0: i32) -> (i32, i32, i32) {
    %c0_i32 = arith.constant 0 : i32
    %c0_i32_0 = arith.constant 0 : i32
    %c0_i32_1 = arith.constant 0 : i32
    %c0_i32_2 = arith.constant 0 : i32
    return %c0_i32, %c0_i32_0, %c0_i32_1 : i32, i32, i32
  }
  func.func @transform_11(%arg0: i32) -> (i32, i32, i32) {
    %c0_i32 = arith.constant 0 : i32
    %c0_i32_0 = arith.constant 0 : i32
    %c0_i32_1 = arith.constant 0 : i32
    %c0_i32_2 = arith.constant 0 : i32
    return %c0_i32, %c0_i32_0, %c0_i32_1 : i32, i32, i32
  }
  func.func @transform_12(%arg0: i32) -> (i32, i32, i32) {
    %c0_i32 = arith.constant 0 : i32
    %c0_i32_0 = arith.constant 0 : i32
    %c0_i32_1 = arith.constant 0 : i32
    %c0_i32_2 = arith.constant 0 : i32
    return %c0_i32, %c0_i32_0, %c0_i32_1 : i32, i32, i32
  }
  func.func @transform_13(%arg0: i32) -> (i32, i32, i32) {
    %c0_i32 = arith.constant 0 : i32
    %c0_i32_0 = arith.constant 0 : i32
    %c0_i32_1 = arith.constant 0 : i32
    %c0_i32_2 = arith.constant 0 : i32
    return %c0_i32, %c0_i32_0, %c0_i32_1 : i32, i32, i32
  }
  func.func @transform_14(%arg0: i32) -> (i32, i32, i32) {
    %c0_i32 = arith.constant 0 : i32
    %c0_i32_0 = arith.constant 0 : i32
    %c0_i32_1 = arith.constant 0 : i32
    %c0_i32_2 = arith.constant 0 : i32
    return %c0_i32, %c0_i32_0, %c0_i32_1 : i32, i32, i32
  }
  func.func @transform_15(%arg0: i32) -> (i32, i32, i32) {
    %c0_i32 = arith.constant 0 : i32
    %c0_i32_0 = arith.constant 0 : i32
    %c0_i32_1 = arith.constant 0 : i32
    %c0_i32_2 = arith.constant 0 : i32
    return %c0_i32, %c0_i32_0, %c0_i32_1 : i32, i32, i32
  }
  func.func @transform_16(%arg0: i32) -> (i32, i32, i32) {
    %c0_i32 = arith.constant 0 : i32
    %c0_i32_0 = arith.constant 0 : i32
    %c0_i32_1 = arith.constant 0 : i32
    %c0_i32_2 = arith.constant 0 : i32
    return %c0_i32, %c0_i32_0, %c0_i32_1 : i32, i32, i32
  }
  func.func @transform_17(%arg0: i32) -> (i32, i32) {
    %c0_i32 = arith.constant 0 : i32
    %c0_i32_0 = arith.constant 0 : i32
    %c0_i32_1 = arith.constant 0 : i32
    return %c0_i32, %c0_i32_0 : i32, i32
  }
  func.func @transform_18(%arg0: i32) -> (i32, i32) {
    %c0_i32 = arith.constant 0 : i32
    %c0_i32_0 = arith.constant 0 : i32
    %c0_i32_1 = arith.constant 0 : i32
    return %c0_i32, %c0_i32_0 : i32, i32
  }
  func.func @transform_19(%arg0: i32) -> (i32, i32) {
    %c0_i32 = arith.constant 0 : i32
    %c0_i32_0 = arith.constant 0 : i32
    %c0_i32_1 = arith.constant 0 : i32
    return %c0_i32, %c0_i32_0 : i32, i32
  }
  func.func @transform_20(%arg0: i32) -> (i32, i32) {
    %c0_i32 = arith.constant 0 : i32
    %c0_i32_0 = arith.constant 0 : i32
    %c0_i32_1 = arith.constant 0 : i32
    return %c0_i32, %c0_i32_0 : i32, i32
  }
  func.func @transform_21(%arg0: i32) -> (i32, i32) {
    %c0_i32 = arith.constant 0 : i32
    %c0_i32_0 = arith.constant 0 : i32
    return %arg0, %c0_i32 : i32, i32
  }
}

</mosaic_0001>

<llo_original>
// kernel: tpu_custom_call.1
$region0: #{tpu_custom_call.1}
  #allocation0 [shape = 'u32[]', space=smem, size = 0x4, offset = 0x4, fixed_abs, tag = 'smem constant byte address 0x4 - core index']
  #allocation1 [shape = 'u32[72,128]{1,0:T(1,128)}', space=vmem, size = 0x9000, scoped, tag = 'internal scratch']
  #allocation2 [shape = 'f32[2,24,32]{2,1,0:T(8,128)}', space=vmem, size = 0x6000, scoped, tag = 'scratch operand']
  %s0 = inlined_call_operand.hbm [shape: f32[2,16,48], index: 0, kind: input, shape index: {}]
  %s1 = inlined_call_operand.vmem [shape: f32[48,32], index: 1, kind: input, shape index: {}]
  %s2 = inlined_call_operand.hbm [shape: f32[1,32], index: 2, kind: input, shape index: {}]
  %s3 = inlined_call_operand.hbm [shape: f32[1,32], index: 3, kind: input, shape index: {}]
  %s4 = inlined_call_operand.vmem [shape: f32[16,32], index: 4, kind: input, shape index: {}]
  %s5 = inlined_call_operand.vmem [shape: f32[2,1,32], index: 5, kind: input, shape index: {}]
  %s6 = inlined_call_operand.vmem [shape: f32[2,1,32], index: 6, kind: input, shape index: {}]
  %s7 = inlined_call_operand.vmem [shape: f32[2,32,96], index: 7, kind: input, shape index: {}]
  %s8 = inlined_call_operand.vmem [shape: f32[2,1,96], index: 8, kind: input, shape index: {}]
  %s9 = inlined_call_operand.vmem [shape: f32[8,8,32], index: 9, kind: input, shape index: {}]
  %s10 = inlined_call_operand.vmem [shape: f32[2,1,32], index: 10, kind: input, shape index: {}]
  %s11 = inlined_call_operand.vmem [shape: f32[2,1,32], index: 11, kind: input, shape index: {}]
  %s12 = inlined_call_operand.vmem [shape: f32[2,1,32], index: 12, kind: input, shape index: {}]
  %s13 = inlined_call_operand.vmem [shape: f32[2,32,64], index: 13, kind: input, shape index: {}]
  %s14 = inlined_call_operand.vmem [shape: f32[2,1,64], index: 14, kind: input, shape index: {}]
  %s15 = inlined_call_operand.vmem [shape: f32[2,64,32], index: 15, kind: input, shape index: {}]
  %s16 = inlined_call_operand.hbm [shape: f32[2,1,32], index: 16, kind: input, shape index: {}]
  %s17 = inlined_call_operand.vmem [shape: f32[1,32], index: 17, kind: input, shape index: {}]
  %s18 = inlined_call_operand.hbm [shape: f32[1,32], index: 18, kind: input, shape index: {}]
  %s19 = inlined_call_operand.hbm [shape: f32[32,128], index: 19, kind: input, shape index: {}]
  %s20 = inlined_call_operand.vmem [shape: f32[1,128], index: 20, kind: input, shape index: {}]
  %s21 = inlined_call_operand.hbm [shape: f32[2,128], index: 21, kind: output, shape index: {}]
  %s22 = sld [smem:[#allocation0]]
  $region118: #{tpu_custom_call.1} parent=0
    _
  %s24 = ssub.s32 1, %s22
  %s25 = scalar_select 0, %s24, %s22
  $region1: #{tpu_custom_call.1} parent=0
    #allocation3 [shape = 'u8[16384]{0}', space=vmem, size = 0x4000, scoped, tag = 'input window, operand 0, single buffered']
    #allocation4 [shape = 's32[1]{0}', space=sflag, size = 0x4, scoped, tag = 'scoped memory for tpu_custom_call.1']
    #allocation5 [shape = 's32[1]{0}', space=sflag, size = 0x4, scoped, tag = 'scoped memory for tpu_custom_call.1']
    #allocation6 [shape = 'u8[512]{0}', space=vmem, size = 0x400, scoped, tag = 'input window, operand 2, single buffered']
    #allocation7 [shape = 's32[1]{0}', space=sflag, size = 0x4, scoped, tag = 'scoped memory for tpu_custom_call.1']
    #allocation8 [shape = 'u8[512]{0}', space=vmem, size = 0x400, scoped, tag = 'input window, operand 3, single buffered']
    #allocation9 [shape = 'u8[1024]{0}', space=vmem, size = 0x400, scoped, tag = 'input window, operand 16, single buffered']
    #allocation10 [shape = 's32[1]{0}', space=sflag, size = 0x4, scoped, tag = 'scoped memory for tpu_custom_call.1']
    #allocation11 [shape = 'u8[512]{0}', space=vmem, size = 0x400, scoped, tag = 'input window, operand 18, single buffered']
    #allocation12 [shape = 'u8[16384]{0}', space=vmem, size = 0x4000, scoped, tag = 'input window, operand 19, single buffered']
    #allocation13 [shape = 's32[1]{0}', space=sflag, size = 0x4, scoped, tag = 'scoped memory for tpu_custom_call.1']
    #allocation14 [shape = 'u8[1024]{0}', space=vmem, size = 0x400, scoped, tag = 'output window, operand 0, single buffered']
    %26 = vsyncpa [#allocation4], 0
    %27 = vsyncpa [#allocation7], 0
    %28 = vsyncpa [#allocation10], 0
    %29 = vsyncpa [#allocation13], 0
    %30 = vsyncpa [#allocation5], 0
    // Predicated region
    $region2: #{tpu_custom_call.1} parent=1 // pred_check
      _
    $region3: #{tpu_custom_call.1} parent=1 // pred_check_branch
      %32 = sbr.rel (0) target = $region5
    $region4: #{tpu_custom_call.1} parent=1 // pred_region
      %34 = vsyncadd [#allocation4], 0
      %s35 = sshll.u32 %s0, 4
      %s36 = int_to_ptr.hbm [resolvable:$true] %s35
      %s37 = sshll.u32 [#allocation3], 4
      %s38 = int_to_ptr.vmem [resolvable:$true] %s37
      %43 = dma.hbm_to_vmem [thread:$0]  %s36, 512, %s38, [#allocation4], 128, 128, 8
    $region5: #{tpu_custom_call.1} parent=1 // pred_fallthru
      _
    // Predicated region
    $region6: #{tpu_custom_call.1} parent=1 // pred_check
      _
    $region7: #{tpu_custom_call.1} parent=1 // pred_check_branch
      %45 = sbr.rel (0) target = $region9
    $region8: #{tpu_custom_call.1} parent=1 // pred_region
      _
    $region9: #{tpu_custom_call.1} parent=1 // pred_fallthru
      _
    // Predicated region
    $region10: #{tpu_custom_call.1} parent=1 // pred_check
      _
    $region11: #{tpu_custom_call.1} parent=1 // pred_check_branch
      %47 = sbr.rel (0) target = $region13
    $region12: #{tpu_custom_call.1} parent=1 // pred_region
      %49 = vsyncadd [#allocation7], 0
      %s51 = sshll.u32 %s2, 4
      %s52 = int_to_ptr.hbm [resolvable:$true] %s51
      %s53 = sshll.u32 [#allocation6], 4
      %s54 = int_to_ptr.vmem [resolvable:$true] %s53
      %56 = dma.hbm_to_vmem [thread:$0]  %s52, 16, %s54, [#allocation7]
    $region13: #{tpu_custom_call.1} parent=1 // pred_fallthru
      _
    // Predicated region
    $region14: #{tpu_custom_call.1} parent=1 // pred_check
      _
    $region15: #{tpu_custom_call.1} parent=1 // pred_check_branch
      %58 = sbr.rel (0) target = $region17
    $region16: #{tpu_custom_call.1} parent=1 // pred_region
      %60 = vsyncadd [#allocation7], 0
      %s62 = sshll.u32 %s3, 4
      %s63 = int_to_ptr.hbm [resolvable:$true] %s62
      %s64 = sshll.u32 [#allocation8], 4
      %s65 = int_to_ptr.vmem [resolvable:$true] %s64
      %67 = dma.hbm_to_vmem [thread:$0]  %s63, 16, %s65, [#allocation7]
    $region17: #{tpu_custom_call.1} parent=1 // pred_fallthru
      _
    // Predicated region
    $region18: #{tpu_custom_call.1} parent=1 // pred_check
      _
    $region19: #{tpu_custom_call.1} parent=1 // pred_check_branch
      %69 = sbr.rel (0) target = $region21
    $region20: #{tpu_custom_call.1} parent=1 // pred_region
      _
    $region21: #{tpu_custom_call.1} parent=1 // pred_fallthru
      _
    // Predicated region
    $region22: #{tpu_custom_call.1} parent=1 // pred_check
      _
    $region23: #{tpu_custom_call.1} parent=1 // pred_check_branch
      %71 = sbr.rel (0) target = $region25
    $region24: #{tpu_custom_call.1} parent=1 // pred_region
      _
    $region25: #{tpu_custom_call.1} parent=1 // pred_fallthru
      _
    // Predicated region
    $region26: #{tpu_custom_call.1} parent=1 // pred_check
      _
    $region27: #{tpu_custom_call.1} parent=1 // pred_check_branch
      %73 = sbr.rel (0) target = $region29
    $region28: #{tpu_custom_call.1} parent=1 // pred_region
      _
    $region29: #{tpu_custom_call.1} parent=1 // pred_fallthru
      _
    // Predicated region
    $region30: #{tpu_custom_call.1} parent=1 // pred_check
      _
    $region31: #{tpu_custom_call.1} parent=1 // pred_check_branch
      %75 = sbr.rel (0) target = $region33
    $region32: #{tpu_custom_call.1} parent=1 // pred_region
      _
    $region33: #{tpu_custom_call.1} parent=1 // pred_fallthru
      _
    // Predicated region
    $region34: #{tpu_custom_call.1} parent=1 // pred_check
      _
    $region35: #{tpu_custom_call.1} parent=1 // pred_check_branch
      %77 = sbr.rel (0) target = $region37
    $region36: #{tpu_custom_call.1} parent=1 // pred_region
      _
    $region37: #{tpu_custom_call.1} parent=1 // pred_fallthru
      _
    // Predicated region
    $region38: #{tpu_custom_call.1} parent=1 // pred_check
      _
    $region39: #{tpu_custom_call.1} parent=1 // pred_check_branch
      %79 = sbr.rel (0) target = $region41
    $region40: #{tpu_custom_call.1} parent=1 // pred_region
      _
    $region41: #{tpu_custom_call.1} parent=1 // pred_fallthru
      _
    // Predicated region
    $region42: #{tpu_custom_call.1} parent=1 // pred_check
      _
    $region43: #{tpu_custom_call.1} parent=1 // pred_check_branch
      %81 = sbr.rel (0) target = $region45
    $region44: #{tpu_custom_call.1} parent=1 // pred_region
      _
    $region45: #{tpu_custom_call.1} parent=1 // pred_fallthru
      _
    // Predicated region
    $region46: #{tpu_custom_call.1} parent=1 // pred_check
      _
    $region47: #{tpu_custom_call.1} parent=1 // pred_check_branch
      %83 = sbr.rel (0) target = $region49
    $region48: #{tpu_custom_call.1} parent=1 // pred_region
      _
    $region49: #{tpu_custom_call.1} parent=1 // pred_fallthru
      _
    // Predicated region
    $region50: #{tpu_custom_call.1} parent=1 // pred_check
      _
    $region51: #{tpu_custom_call.1} parent=1 // pred_check_branch
      %85 = sbr.rel (0) target = $region53
    $region52: #{tpu_custom_call.1} parent=1 // pred_region
      _
    $region53: #{tpu_custom_call.1} parent=1 // pred_fallthru
      _
    // Predicated region
    $region54: #{tpu_custom_call.1} parent=1 // pred_check
      _
    $region55: #{tpu_custom_call.1} parent=1 // pred_check_branch
      %87 = sbr.rel (0) target = $region57
    $region56: #{tpu_custom_call.1} parent=1 // pred_region
      _
    $region57: #{tpu_custom_call.1} parent=1 // pred_fallthru
      _
    // Predicated region
    $region58: #{tpu_custom_call.1} parent=1 // pred_check
      _
    $region59: #{tpu_custom_call.1} parent=1 // pred_check_branch
      %89 = sbr.rel (0) target = $region61
    $region60: #{tpu_custom_call.1} parent=1 // pred_region
      _
    $region61: #{tpu_custom_call.1} parent=1 // pred_fallthru
      _
    // Predicated region
    $region62: #{tpu_custom_call.1} parent=1 // pred_check
      _
    $region63: #{tpu_custom_call.1} parent=1 // pred_check_branch
      %91 = sbr.rel (0) target = $region65
    $region64: #{tpu_custom_call.1} parent=1 // pred_region
      _
    $region65: #{tpu_custom_call.1} parent=1 // pred_fallthru
      _
    // Predicated region
    $region66: #{tpu_custom_call.1} parent=1 // pred_check
      _
    $region67: #{tpu_custom_call.1} parent=1 // pred_check_branch
      %93 = sbr.rel (0) target = $region69
    $region68: #{tpu_custom_call.1} parent=1 // pred_region
      %95 = vsyncadd [#allocation10], 0
      %s96 = sshll.u32 %s16, 4
      %s97 = int_to_ptr.hbm [resolvable:$true] %s96
      %s98 = sshll.u32 [#allocation9], 4
      %s99 = int_to_ptr.vmem [resolvable:$true] %s98
      %104 = dma.hbm_to_vmem [thread:$0]  %s97, 32, %s99, [#allocation10], 16, 16, 1
    $region69: #{tpu_custom_call.1} parent=1 // pred_fallthru
      _
    // Predicated region
    $region70: #{tpu_custom_call.1} parent=1 // pred_check
      _
    $region71: #{tpu_custom_call.1} parent=1 // pred_check_branch
      %106 = sbr.rel (0) target = $region73
    $region72: #{tpu_custom_call.1} parent=1 // pred_region
      _
    $region73: #{tpu_custom_call.1} parent=1 // pred_fallthru
      _
    // Predicated region
    $region74: #{tpu_custom_call.1} parent=1 // pred_check
      _
    $region75: #{tpu_custom_call.1} parent=1 // pred_check_branch
      %108 = sbr.rel (0) target = $region77
    $region76: #{tpu_custom_call.1} parent=1 // pred_region
      %110 = vsyncadd [#allocation10], 0
      %s112 = sshll.u32 %s18, 4
      %s113 = int_to_ptr.hbm [resolvable:$true] %s112
      %s114 = sshll.u32 [#allocation11], 4
      %s115 = int_to_ptr.vmem [resolvable:$true] %s114
      %117 = dma.hbm_to_vmem [thread:$0]  %s113, 16, %s115, [#allocation10]
    $region77: #{tpu_custom_call.1} parent=1 // pred_fallthru
      _
    // Predicated region
    $region78: #{tpu_custom_call.1} parent=1 // pred_check
      _
    $region79: #{tpu_custom_call.1} parent=1 // pred_check_branch
      %119 = sbr.rel (0) target = $region81
    $region80: #{tpu_custom_call.1} parent=1 // pred_region
      %121 = vsyncadd [#allocation13], 0
      %s122 = sshll.u32 %s19, 4
      %s123 = int_to_ptr.hbm [resolvable:$true] %s122
      %s124 = sshll.u32 [#allocation12], 4
      %s125 = int_to_ptr.vmem [resolvable:$true] %s124
      %130 = dma.hbm_to_vmem [thread:$0]  %s123, 512, %s125, [#allocation13], 128, 128, 8
    $region81: #{tpu_custom_call.1} parent=1 // pred_fallthru
      _
    // Predicated region
    $region82: #{tpu_custom_call.1} parent=1 // pred_check
      _
    $region83: #{tpu_custom_call.1} parent=1 // pred_check_branch
      %132 = sbr.rel (0) target = $region85
    $region84: #{tpu_custom_call.1} parent=1 // pred_region
      _
    $region85: #{tpu_custom_call.1} parent=1 // pred_fallthru
      _
    // Predicated region
    $region86: #{tpu_custom_call.1} parent=1 // pred_check
      _
    $region87: #{tpu_custom_call.1} parent=1 // pred_check_branch
      %134 = sbr.rel (0) target = $region89
    $region88: #{tpu_custom_call.1} parent=1 // pred_region
      %136 = dma.done [#allocation4], 512
    $region89: #{tpu_custom_call.1} parent=1 // pred_fallthru
      _
    // Predicated region
    $region90: #{tpu_custom_call.1} parent=1 // pred_check
      _
    $region91: #{tpu_custom_call.1} parent=1 // pred_check_branch
      %138 = sbr.rel (0) target = $region93
    $region92: #{tpu_custom_call.1} parent=1 // pred_region
      %140 = dma.done [#allocation7], 16
    $region93: #{tpu_custom_call.1} parent=1 // pred_fallthru
      _
    // Predicated region
    $region94: #{tpu_custom_call.1} parent=1 // pred_check
      _
    $region95: #{tpu_custom_call.1} parent=1 // pred_check_branch
      %142 = sbr.rel (0) target = $region97
    $region96: #{tpu_custom_call.1} parent=1 // pred_region
      %144 = dma.done [#allocation7], 16
    $region97: #{tpu_custom_call.1} parent=1 // pred_fallthru
      _
    // Predicated region
    $region98: #{tpu_custom_call.1} parent=1 // pred_check
      _
    $region99: #{tpu_custom_call.1} parent=1 // pred_check_branch
      %146 = sbr.rel (0) target = $region101
    $region100: #{tpu_custom_call.1} parent=1 // pred_region
      %148 = dma.done [#allocation10], 32
    $region101: #{tpu_custom_call.1} parent=1 // pred_fallthru
      _
    // Predicated region
    $region102: #{tpu_custom_call.1} parent=1 // pred_check
      _
    $region103: #{tpu_custom_call.1} parent=1 // pred_check_branch
      %150 = sbr.rel (0) target = $region105
    $region104: #{tpu_custom_call.1} parent=1 // pred_region
      %152 = dma.done [#allocation10], 16
    $region105: #{tpu_custom_call.1} parent=1 // pred_fallthru
      _
    // Predicated region
    $region106: #{tpu_custom_call.1} parent=1 // pred_check
      _
    $region107: #{tpu_custom_call.1} parent=1 // pred_check_branch
      %154 = sbr.rel (0) target = $region109
    $region108: #{tpu_custom_call.1} parent=1 // pred_region
      %156 = dma.done [#allocation13], 512
    $region109: #{tpu_custom_call.1} parent=1 // pred_fallthru
      _
    %v157 = vld [vmem:[#allocation3] sm:$0xff]
    %v158 = vld [vmem:[#allocation3 + $0x8] sm:$0xff]
    %v159 = vld [vmem:[#allocation3 + $0x10] sm:$0xff]
    %v160 = vld [vmem:[#allocation3 + $0x18] sm:$0xff]
    %v161 = vld [vmem:[%s1] sm:$0xff]
    %v162 = vld [vmem:[%s1 + $0x8] sm:$0xff]
    %v163 = vld [vmem:[%s1 + $0x10] sm:$0xff]
    %v164 = vld [vmem:[%s1 + $0x18] sm:$0xff]
    %v165 = vld [vmem:[%s1 + $0x20] sm:$0xff]
    %v166 = vld [vmem:[%s1 + $0x28] sm:$0xff]
    %v167 = vld [vmem:[#allocation6] sm:$0x1]
    %v169 = vperm.slane %v167, 0
    %vm171 = vcmask 392192
    %v173 = vsel %vm171, %v157, 0
    %v176 = vsel %vm171, %v158, 0
    %v179 = vsel %vm171, %v159, 0
    %v182 = vsel %vm171, %v160, 0
    %184 = vmatpush.msra.mxu0 0.0
    %185 = vmatpush.msra.mxu0 0.0
    %186 = vmatpush.msra.mxu0 0.0
    %187 = vmatpush.msra.mxu0 0.0
    %188 = vmatpush.msra.mxu0 0.0
    %189 = vmatpush.msra.mxu0 0.0
    %190 = vmatpush.msra.mxu0 0.0
    %191 = vmatpush.msra.mxu0 0.0
    %192 = vmatpush.msra.mxu0 0.0
    %193 = vmatpush.msra.mxu0 0.0
    %194 = vmatpush.msra.mxu0 %v166
    %195 = vmatpush.msra.mxu0 %v165
    %196 = vmatpush.msra.mxu0 %v164
    %197 = vmatpush.msra.mxu0 %v163
    %198 = vmatpush.msra.mxu0 %v162
    %199 = vmatpush.msra.mxu0 %v161
    %200 = vmatmul.f32.gmra.mxu0 %v173
    %v201 = vpop.f32.mrf.mxu0
    %v202 = vadd.f32 %v169, %v201
    %203 = vmatmul.f32.gmra.mxu0 %v176
    %v204 = vpop.f32.mrf.mxu0
    %v205 = vadd.f32 %v169, %v204
    %206 = vmatmul.f32.gmra.mxu0 %v179
    %v207 = vpop.f32.mrf.mxu0
    %v208 = vadd.f32 %v169, %v207
    %209 = vmatmul.f32.gmra.mxu0 %v182
    %v210 = vpop.f32.mrf.mxu0
    %v211 = vadd.f32 %v169, %v210
    %212 = vdwg.mxu0
    %v213 = vld [vmem:[%s4] sm:$0xff]
    %v214 = vld [vmem:[%s4 + $0x8] sm:$0xff]
    %v215 = vadd.f32 %v202, %v213
    %v216 = vadd.f32 %v205, %v214
    %v217 = vadd.f32 %v208, %v213
    %v218 = vadd.f32 %v211, %v214
    %v219 = vld [vmem:[#allocation8] sm:$0x1]
    %vm220 = vcmask 253952
    %221 = vst.msk [vmem:[#allocation2] sm:$0x1] %vm220, %v219
    %222 = vst.msk [vmem:[#allocation2 + $0x18] sm:$0x1] %vm220, %v219
    %vm223 = vcmask 261120
    %224 = vst.msk [vmem:[#allocation2 + $0x1] sm:$0xff] %vm223, %v215
    %225 = vst.msk [vmem:[#allocation2 + $0x9] sm:$0xff] %vm223, %v216
    %226 = vst.msk [vmem:[#allocation2 + $0x19] sm:$0xff] %vm223, %v217
    %227 = vst.msk [vmem:[#allocation2 + $0x21] sm:$0xff] %vm223, %v218
    %vm228 = vcmask 260096
    %229 = vst.msk [vmem:[#allocation2 + $0x11] sm:$0x7f] %vm228, 0.0
    %230 = vst.msk [vmem:[#allocation2 + $0x29] sm:$0x7f] %vm228, 0.0
    %v231 = vld [vmem:[#allocation2] sm:$0xff]
    %v232 = vld [vmem:[#allocation2 + $0x8] sm:$0xff]
    %v233 = vld [vmem:[#allocation2 + $0x10] sm:$0xff]
    %v234 = vld [vmem:[#allocation2 + $0x18] sm:$0xff]
    %v235 = vld [vmem:[#allocation2 + $0x20] sm:$0xff]
    %v236 = vld [vmem:[#allocation2 + $0x28] sm:$0xff]
    %v237 = vlaneseq
    %v238 = vand.u32 %v237, 127
    %vm239 = vcmp.lt.s32.totalorder %v238, 17
    %v240 = vld [vmem:[%s5] sm:$0x1]
    %v241 = vld [vmem:[%s6] sm:$0x1]
    %v242 = vsel %vm223, %v231, 0.0
    %243 = vadd.xlane.f32.xlu0 %v242
    %v244 = vpop.xlane.xlu0 %243
    %v245 = vsel %vm223, %v232, 0.0
    %246 = vadd.xlane.f32.xlu0 %v245
    %v247 = vpop.xlane.xlu0 %246
    %v248 = vsel %vm223, %v233, 0.0
    %249 = vadd.xlane.f32.xlu0 %v248
    %v250 = vpop.xlane.xlu0 %249
    %v251 = vsel %vm223, %v234, 0.0
    %252 = vadd.xlane.f32.xlu0 %v251
    %v253 = vpop.xlane.xlu0 %252
    %v254 = vsel %vm223, %v235, 0.0
    %255 = vadd.xlane.f32.xlu0 %v254
    %v256 = vpop.xlane.xlu0 %255
    %v257 = vsel %vm223, %v236, 0.0
    %258 = vadd.xlane.f32.xlu0 %v257
    %v259 = vpop.xlane.xlu0 %258
    %v260 = vrcp.pop 32.0
    %v261 = vmul.f32 32.0, %v260
    %v262 = vsub.f32 1.0, %v261
    %v263 = vmul.f32 %v260, %v262
    %v264 = vadd.f32 %v260, %v263
    %vm265 = vweird.f32 %v260
    %v266 = vsel %vm265, %v260, %v264
    %v267 = vmul.f32 %v244, %v266
    %v268 = vmul.f32 %v247, %v266
    %v269 = vmul.f32 %v250, %v266
    %v270 = vmul.f32 %v253, %v266
    %v271 = vmul.f32 %v256, %v266
    %v272 = vmul.f32 %v259, %v266
    %v273 = vsub.f32 %v231, %v267
    %v274 = vsub.f32 %v232, %v268
    %v275 = vsub.f32 %v233, %v269
    %v276 = vsub.f32 %v234, %v270
    %v277 = vsub.f32 %v235, %v271
    %v278 = vsub.f32 %v236, %v272
    %v279 = vmul.f32 %v273, %v273
    %v280 = vmul.f32 %v274, %v274
    %v281 = vmul.f32 %v275, %v275
    %v282 = vmul.f32 %v276, %v276
    %v283 = vmul.f32 %v277, %v277
    %v284 = vmul.f32 %v278, %v278
    %v285 = vsel %vm223, %v279, 0.0
    %286 = vadd.xlane.f32.xlu0 %v285
    %v287 = vpop.xlane.xlu0 %286
    %v288 = vsel %vm223, %v280, 0.0
    %289 = vadd.xlane.f32.xlu0 %v288
    %v290 = vpop.xlane.xlu0 %289
    %v291 = vsel %vm223, %v281, 0.0
    %292 = vadd.xlane.f32.xlu0 %v291
    %v293 = vpop.xlane.xlu0 %292
    %v294 = vsel %vm223, %v282, 0.0
    %295 = vadd.xlane.f32.xlu0 %v294
    %v296 = vpop.xlane.xlu0 %295
    %v297 = vsel %vm223, %v283, 0.0
    %298 = vadd.xlane.f32.xlu0 %v297
    %v299 = vpop.xlane.xlu0 %298
    %v300 = vsel %vm223, %v284, 0.0
    %301 = vadd.xlane.f32.xlu0 %v300
    %v302 = vpop.xlane.xlu0 %301
    %v303 = vmul.f32 %v287, %v266
    %v304 = vmul.f32 %v290, %v266
    %v305 = vmul.f32 %v293, %v266
    %v306 = vmul.f32 %v296, %v266
    %v307 = vmul.f32 %v299, %v266
    %v308 = vmul.f32 %v302, %v266
    %v309 = vadd.f32 %v303, 1e-05
    %v310 = vadd.f32 %v304, 1e-05
    %v311 = vadd.f32 %v305, 1e-05
    %v312 = vadd.f32 %v306, 1e-05
    %v313 = vadd.f32 %v307, 1e-05
    %v314 = vadd.f32 %v308, 1e-05
    %v315 = vrsqrt.pop %v309
    %v316 = vmul.f32 %v315, %v309
    %v317 = vmul.f32 %v316, %v315
    %v318 = vmul.f32 0.5, %v317
    %v319 = vsub.f32 1.5, %v318
    %v320 = vmul.f32 %v315, %v319
    %vm321 = vweird.f32 %v309
    %vm322 = vweird.f32 %v315
    %vm323 = vmor %vm321, %vm322
    %v324 = vsel %vm323, %v315, %v320
    %v325 = vrsqrt.pop %v310
    %v326 = vmul.f32 %v325, %v310
    %v327 = vmul.f32 %v326, %v325
    %v328 = vmul.f32 0.5, %v327
    %v329 = vsub.f32 1.5, %v328
    %v330 = vmul.f32 %v325, %v329
    %vm331 = vweird.f32 %v310
    %vm332 = vweird.f32 %v325
    %vm333 = vmor %vm331, %vm332
    %v334 = vsel %vm333, %v325, %v330
    %v335 = vrsqrt.pop %v311
    %v336 = vmul.f32 %v335, %v311
    %v337 = vmul.f32 %v336, %v335
    %v338 = vmul.f32 0.5, %v337
    %v339 = vsub.f32 1.5, %v338
    %v340 = vmul.f32 %v335, %v339
    %vm341 = vweird.f32 %v311
    %vm342 = vweird.f32 %v335
    %vm343 = vmor %vm341, %vm342
    %v344 = vsel %vm343, %v335, %v340
    %v345 = vrsqrt.pop %v312
    %v346 = vmul.f32 %v345, %v312
    %v347 = vmul.f32 %v346, %v345
    %v348 = vmul.f32 0.5, %v347
    %v349 = vsub.f32 1.5, %v348
    %v350 = vmul.f32 %v345, %v349
    %vm351 = vweird.f32 %v312
    %vm352 = vweird.f32 %v345
    %vm353 = vmor %vm351, %vm352
    %v354 = vsel %vm353, %v345, %v350
    %v355 = vrsqrt.pop %v313
    %v356 = vmul.f32 %v355, %v313
    %v357 = vmul.f32 %v356, %v355
    %v358 = vmul.f32 0.5, %v357
    %v359 = vsub.f32 1.5, %v358
    %v360 = vmul.f32 %v355, %v359
    %vm361 = vweird.f32 %v313
    %vm362 = vweird.f32 %v355
    %vm363 = vmor %vm361, %vm362
    %v364 = vsel %vm363, %v355, %v360
    %v365 = vrsqrt.pop %v314
    %v366 = vmul.f32 %v365, %v314
    %v367 = vmul.f32 %v366, %v365
    %v368 = vmul.f32 0.5, %v367
    %v369 = vsub.f32 1.5, %v368
    %v370 = vmul.f32 %v365, %v369
    %vm371 = vweird.f32 %v314
    %vm372 = vweird.f32 %v365
    %vm373 = vmor %vm371, %vm372
    %v374 = vsel %vm373, %v365, %v370
    %v375 = vmul.f32 %v273, %v324
    %v376 = vmul.f32 %v274, %v334
    %v377 = vmul.f32 %v275, %v344
    %v378 = vmul.f32 %v276, %v354
    %v379 = vmul.f32 %v277, %v364
    %v380 = vmul.f32 %v278, %v374
    %v382 = vperm.slane %v240, 0
    %v384 = vmul.f32 %v375, %v382
    %v385 = vmul.f32 %v376, %v382
    %v386 = vmul.f32 %v377, %v382
    %v387 = vmul.f32 %v378, %v382
    %v388 = vmul.f32 %v379, %v382
    %v389 = vmul.f32 %v380, %v382
    %v391 = vperm.slane %v241, 0
    %v393 = vadd.f32 %v384, %v391
    %v394 = vadd.f32 %v385, %v391
    %v395 = vadd.f32 %v386, %v391
    %v396 = vadd.f32 %v387, %v391
    %v397 = vadd.f32 %v388, %v391
    %v398 = vadd.f32 %v389, %v391
    %v399 = vld [vmem:[%s7] sm:$0xff]
    %v400 = vld [vmem:[%s7 + $0x8] sm:$0xff]
    %v401 = vld [vmem:[%s7 + $0x10] sm:$0xff]
    %v402 = vld [vmem:[%s7 + $0x18] sm:$0xff]
    %v403 = vld [vmem:[%s8] sm:$0x1]
    %v405 = vperm.slane %v403, 0
    %v408 = vsel %vm223, %v393, 0
    %v411 = vsel %vm223, %v394, 0
    %v414 = vsel %vm223, %v395, 0
    %v417 = vsel %vm223, %v396, 0
    %v420 = vsel %vm223, %v397, 0
    %v423 = vsel %vm223, %v398, 0
    %425 = vmatpush.msra.mxu0 0.0
    %426 = vmatpush.msra.mxu0 0.0
    %427 = vmatpush.msra.mxu0 0.0
    %428 = vmatpush.msra.mxu0 0.0
    %429 = vmatpush.msra.mxu0 0.0
    %430 = vmatpush.msra.mxu0 0.0
    %431 = vmatpush.msra.mxu0 0.0
    %432 = vmatpush.msra.mxu0 0.0
    %433 = vmatpush.msra.mxu0 0.0
    %434 = vmatpush.msra.mxu0 0.0
    %435 = vmatpush.msra.mxu0 0.0
    %436 = vmatpush.msra.mxu0 0.0
    %437 = vmatpush.msra.mxu0 %v402
    %438 = vmatpush.msra.mxu0 %v401
    %439 = vmatpush.msra.mxu0 %v400
    %440 = vmatpush.msra.mxu0 %v399
    %441 = vmatmul.f32.gmra.mxu0 %v408
    %v442 = vpop.f32.mrf.mxu0
    %v443 = vadd.f32 %v405, %v442
    %444 = vmatmul.f32.gmra.mxu0 %v411
    %v445 = vpop.f32.mrf.mxu0
    %v446 = vadd.f32 %v405, %v445
    %447 = vmatmul.f32.gmra.mxu0 %v414
    %v448 = vpop.f32.mrf.mxu0
    %v449 = vadd.f32 %v405, %v448
    %450 = vmatmul.f32.gmra.mxu0 %v417
    %v451 = vpop.f32.mrf.mxu0
    %v452 = vadd.f32 %v405, %v451
    %453 = vmatmul.f32.gmra.mxu0 %v420
    %v454 = vpop.f32.mrf.mxu0
    %v455 = vadd.f32 %v405, %v454
    %456 = vmatmul.f32.gmra.mxu0 %v423
    %v457 = vpop.f32.mrf.mxu0
    %v458 = vadd.f32 %v405, %v457
    %459 = vdwg.mxu0
    %463 = vrot.lane.b32.xlu0 %v443, 96
    %v464 = vpop.permute.xlu0 %463
    %465 = vrot.lane.b32.xlu0 %v446, 96
    %v466 = vpop.permute.xlu0 %465
    %467 = vrot.lane.b32.xlu0 %v449, 96
    %v468 = vpop.permute.xlu0 %467
    %vm469 = vcmask 64512
    %v470 = vsel %vm469, %v443, 0
    %v472 = vsel %vm469, %v446, 0
    %v474 = vsel %vm469, %v449, 0
    %v476 = vsel %vm469, %v464, 0
    %v478 = vsel %vm469, %v466, 0
    %v480 = vsel %vm469, %v468, 0
    %482 = vmatpush.xpose.msra.mxu0 0.0
    %483 = vmatpush.xpose.msra.mxu0 0.0
    %484 = vmatpush.xpose.msra.mxu0 0.0
    %485 = vmatpush.xpose.msra.mxu0 0.0
    %486 = vmatpush.xpose.msra.mxu0 0.0
    %487 = vmatpush.xpose.msra.mxu0 0.0
    %488 = vmatpush.xpose.msra.mxu0 0.0
    %489 = vmatpush.xpose.msra.mxu0 0.0
    %490 = vmatpush.xpose.msra.mxu0 0.0
    %491 = vmatpush.xpose.msra.mxu0 0.0
    %492 = vmatpush.xpose.msra.mxu0 0.0
    %493 = vmatpush.xpose.msra.mxu0 0.0
    %494 = vmatpush.xpose.msra.mxu0 0.0
    %495 = vmatpush.xpose.msra.mxu0 %v480
    %496 = vmatpush.xpose.msra.mxu0 %v478
    %497 = vmatpush.xpose.msra.mxu0 %v476
    %498 = vmatmul.f32.gmra.mxu0 %v470
    %v499 = vpop.f32.mrf.mxu0
    %v500 = vadd.f32 0.0, %v499
    %501 = vmatmul.f32.gmra.mxu0 %v472
    %v502 = vpop.f32.mrf.mxu0
    %v503 = vadd.f32 0.0, %v502
    %504 = vmatmul.f32.gmra.mxu0 %v474
    %v505 = vpop.f32.mrf.mxu0
    %v506 = vadd.f32 0.0, %v505
    %507 = vdwg.mxu0
    %511 = vrot.lane.b32.xlu0 %v452, 96
    %v512 = vpop.permute.xlu0 %511
    %513 = vrot.lane.b32.xlu0 %v455, 96
    %v514 = vpop.permute.xlu0 %513
    %515 = vrot.lane.b32.xlu0 %v458, 96
    %v516 = vpop.permute.xlu0 %515
    %v517 = vsel %vm469, %v452, 0
    %v519 = vsel %vm469, %v455, 0
    %v521 = vsel %vm469, %v458, 0
    %v523 = vsel %vm469, %v512, 0
    %v525 = vsel %vm469, %v514, 0
    %v527 = vsel %vm469, %v516, 0
    %529 = vmatpush.xpose.msra.mxu0 0.0
    %530 = vmatpush.xpose.msra.mxu0 0.0
    %531 = vmatpush.xpose.msra.mxu0 0.0
    %532 = vmatpush.xpose.msra.mxu0 0.0
    %533 = vmatpush.xpose.msra.mxu0 0.0
    %534 = vmatpush.xpose.msra.mxu0 0.0
    %535 = vmatpush.xpose.msra.mxu0 0.0
    %536 = vmatpush.xpose.msra.mxu0 0.0
    %537 = vmatpush.xpose.msra.mxu0 0.0
    %538 = vmatpush.xpose.msra.mxu0 0.0
    %539 = vmatpush.xpose.msra.mxu0 0.0
    %540 = vmatpush.xpose.msra.mxu0 0.0
    %541 = vmatpush.xpose.msra.mxu0 0.0
    %542 = vmatpush.xpose.msra.mxu0 %v527
    %543 = vmatpush.xpose.msra.mxu0 %v525
    %544 = vmatpush.xpose.msra.mxu0 %v523
    %545 = vmatmul.f32.gmra.mxu0 %v517
    %v546 = vpop.f32.mrf.mxu0
    %v547 = vadd.f32 0.0, %v546
    %548 = vmatmul.f32.gmra.mxu0 %v519
    %v549 = vpop.f32.mrf.mxu0
    %v550 = vadd.f32 0.0, %v549
    %551 = vmatmul.f32.gmra.mxu0 %v521
    %v552 = vpop.f32.mrf.mxu0
    %v553 = vadd.f32 0.0, %v552
    %554 = vdwg.mxu0
    %v555 = vmul.f32 %v500, 0.35355338
    %v556 = vmul.f32 %v503, 0.35355338
    %v557 = vmul.f32 %v506, 0.35355338
    %v558 = vmul.f32 %v547, 0.35355338
    %v559 = vmul.f32 %v550, 0.35355338
    %v560 = vmul.f32 %v553, 0.35355338
    %v561 = vsel %vm239, %v555, -1e+30
    %v562 = vsel %vm239, %v556, -1e+30
    %v563 = vsel %vm239, %v557, -1e+30
    %v564 = vsel %vm239, %v558, -1e+30
    %v565 = vsel %vm239, %v559, -1e+30
    %v566 = vsel %vm239, %v560, -1e+30
    %vm567 = vcmask 195584
    %v568 = vsel %vm567, %v561, -inf
    %569 = vmax.xlane.f32.xlu0 %v568
    %v570 = vpop.xlane.xlu0 %569
    %v571 = vsel %vm567, %v562, -inf
    %572 = vmax.xlane.f32.xlu0 %v571
    %v573 = vpop.xlane.xlu0 %572
    %v574 = vsel %vm567, %v563, -inf
    %575 = vmax.xlane.f32.xlu0 %v574
    %v576 = vpop.xlane.xlu0 %575
    %v577 = vsel %vm567, %v564, -inf
    %578 = vmax.xlane.f32.xlu0 %v577
    %v579 = vpop.xlane.xlu0 %578
    %v580 = vsel %vm567, %v565, -inf
    %581 = vmax.xlane.f32.xlu0 %v580
    %v582 = vpop.xlane.xlu0 %581
    %v583 = vsel %vm567, %v566, -inf
    %584 = vmax.xlane.f32.xlu0 %v583
    %v585 = vpop.xlane.xlu0 %584
    %v586 = vsub.f32 %v561, %v570
    %v587 = vsub.f32 %v562, %v573
    %v588 = vsub.f32 %v563, %v576
    %v589 = vsub.f32 %v564, %v579
    %v590 = vsub.f32 %v565, %v582
    %v591 = vsub.f32 %v566, %v585
    %v592 = vmul.f32 %v586, 1.442695
    %v593 = vpow.pop %v592
    %v594 = vmul.f32 %v587, 1.442695
    %v595 = vpow.pop %v594
    %v596 = vmul.f32 %v588, 1.442695
    %v597 = vpow.pop %v596
    %v598 = vmul.f32 %v589, 1.442695
    %v599 = vpow.pop %v598
    %v600 = vmul.f32 %v590, 1.442695
    %v601 = vpow.pop %v600
    %v602 = vmul.f32 %v591, 1.442695
    %v603 = vpow.pop %v602
    %v604 = vsel %vm567, %v593, 0.0
    %605 = vadd.xlane.f32.xlu0 %v604
    %v606 = vpop.xlane.xlu0 %605
    %v607 = vsel %vm567, %v595, 0.0
    %608 = vadd.xlane.f32.xlu0 %v607
    %v609 = vpop.xlane.xlu0 %608
    %v610 = vsel %vm567, %v597, 0.0
    %611 = vadd.xlane.f32.xlu0 %v610
    %v612 = vpop.xlane.xlu0 %611
    %v613 = vsel %vm567, %v599, 0.0
    %614 = vadd.xlane.f32.xlu0 %v613
    %v615 = vpop.xlane.xlu0 %614
    %v616 = vsel %vm567, %v601, 0.0
    %617 = vadd.xlane.f32.xlu0 %v616
    %v618 = vpop.xlane.xlu0 %617
    %v619 = vsel %vm567, %v603, 0.0
    %620 = vadd.xlane.f32.xlu0 %v619
    %v621 = vpop.xlane.xlu0 %620
    %v622 = vrcp.pop %v606
    %v623 = vrcp.pop %v609
    %v624 = vrcp.pop %v612
    %v625 = vrcp.pop %v615
    %v626 = vrcp.pop %v618
    %v627 = vrcp.pop %v621
    %v628 = vmul.f32 %v593, %v622
    %v629 = vmul.f32 %v595, %v623
    %v630 = vmul.f32 %v597, %v624
    %v631 = vmul.f32 %v599, %v625
    %v632 = vmul.f32 %v601, %v626
    %v633 = vmul.f32 %v603, %v627
    %634 = vrot.lane.b32.xlu0 %v443, 64
    %v635 = vpop.permute.xlu0 %634
    %636 = vrot.lane.b32.xlu0 %v446, 64
    %v637 = vpop.permute.xlu0 %636
    %638 = vrot.lane.b32.xlu0 %v449, 64
    %v639 = vpop.permute.xlu0 %638
    %v644 = vsel %vm567, %v628, 0
    %v647 = vsel %vm567, %v629, 0
    %v650 = vsel %vm567, %v630, 0
    %652 = vmatpush.msra.mxu0 0.0
    %653 = vmatpush.msra.mxu0 0.0
    %654 = vmatpush.msra.mxu0 0.0
    %655 = vmatpush.msra.mxu0 0.0
    %656 = vmatpush.msra.mxu0 0.0
    %657 = vmatpush.msra.mxu0 0.0
    %658 = vmatpush.msra.mxu0 0.0
    %659 = vmatpush.msra.mxu0 0.0
    %660 = vmatpush.msra.mxu0 0.0
    %661 = vmatpush.msra.mxu0 0.0
    %662 = vmatpush.msra.mxu0 0.0
    %663 = vmatpush.msra.mxu0 0.0
    %664 = vmatpush.msra.mxu0 0.0
    %665 = vmatpush.msra.mxu0 %v639
    %666 = vmatpush.msra.mxu0 %v637
    %667 = vmatpush.msra.mxu0 %v635
    %668 = vmatmul.f32.gmra.mxu0 %v644
    %v669 = vpop.f32.mrf.mxu0
    %v670 = vadd.f32 0.0, %v669
    %671 = vmatmul.f32.gmra.mxu0 %v647
    %v672 = vpop.f32.mrf.mxu0
    %v673 = vadd.f32 0.0, %v672
    %674 = vmatmul.f32.gmra.mxu0 %v650
    %v675 = vpop.f32.mrf.mxu0
    %v676 = vadd.f32 0.0, %v675
    %677 = vdwg.mxu0
    %678 = vrot.lane.b32.xlu0 %v452, 64
    %v679 = vpop.permute.xlu0 %678
    %680 = vrot.lane.b32.xlu0 %v455, 64
    %v681 = vpop.permute.xlu0 %680
    %682 = vrot.lane.b32.xlu0 %v458, 64
    %v683 = vpop.permute.xlu0 %682
    %v688 = vsel %vm567, %v631, 0
    %v691 = vsel %vm567, %v632, 0
    %v694 = vsel %vm567, %v633, 0
    %696 = vmatpush.msra.mxu0 0.0
    %697 = vmatpush.msra.mxu0 0.0
    %698 = vmatpush.msra.mxu0 0.0
    %699 = vmatpush.msra.mxu0 0.0
    %700 = vmatpush.msra.mxu0 0.0
    %701 = vmatpush.msra.mxu0 0.0
    %702 = vmatpush.msra.mxu0 0.0
    %703 = vmatpush.msra.mxu0 0.0
    %704 = vmatpush.msra.mxu0 0.0
    %705 = vmatpush.msra.mxu0 0.0
    %706 = vmatpush.msra.mxu0 0.0
    %707 = vmatpush.msra.mxu0 0.0
    %708 = vmatpush.msra.mxu0 0.0
    %709 = vmatpush.msra.mxu0 %v683
    %710 = vmatpush.msra.mxu0 %v681
    %711 = vmatpush.msra.mxu0 %v679
    %712 = vmatmul.f32.gmra.mxu0 %v688
    %v713 = vpop.f32.mrf.mxu0
    %v714 = vadd.f32 0.0, %v713
    %715 = vmatmul.f32.gmra.mxu0 %v691
    %v716 = vpop.f32.mrf.mxu0
    %v717 = vadd.f32 0.0, %v716
    %718 = vmatmul.f32.gmra.mxu0 %v694
    %v719 = vpop.f32.mrf.mxu0
    %v720 = vadd.f32 0.0, %v719
    %721 = vdwg.mxu0
    %v722 = vld [vmem:[%s9] sm:$0xff]
    %723 = vrot.lane.b32.xlu0 %v443, 120
    %v724 = vpop.permute.xlu0 %723
    %725 = vrot.lane.b32.xlu0 %v446, 120
    %v726 = vpop.permute.xlu0 %725
    %727 = vrot.lane.b32.xlu0 %v449, 120
    %v728 = vpop.permute.xlu0 %727
    %729 = vrot.lane.b32.xlu0 %v443, 88
    %v730 = vpop.permute.xlu0 %729
    %731 = vrot.lane.b32.xlu0 %v446, 88
    %v732 = vpop.permute.xlu0 %731
    %733 = vrot.lane.b32.xlu0 %v449, 88
    %v734 = vpop.permute.xlu0 %733
    %v735 = vsel %vm469, %v724, 0
    %v737 = vsel %vm469, %v726, 0
    %v739 = vsel %vm469, %v728, 0
    %v741 = vsel %vm469, %v730, 0
    %v743 = vsel %vm469, %v732, 0
    %v745 = vsel %vm469, %v734, 0
    %747 = vmatpush.xpose.msra.mxu0 0.0
    %748 = vmatpush.xpose.msra.mxu0 0.0
    %749 = vmatpush.xpose.msra.mxu0 0.0
    %750 = vmatpush.xpose.msra.mxu0 0.0
    %751 = vmatpush.xpose.msra.mxu0 0.0
    %752 = vmatpush.xpose.msra.mxu0 0.0
    %753 = vmatpush.xpose.msra.mxu0 0.0
    %754 = vmatpush.xpose.msra.mxu0 0.0
    %755 = vmatpush.xpose.msra.mxu0 0.0
    %756 = vmatpush.xpose.msra.mxu0 0.0
    %757 = vmatpush.xpose.msra.mxu0 0.0
    %758 = vmatpush.xpose.msra.mxu0 0.0
    %759 = vmatpush.xpose.msra.mxu0 0.0
    %760 = vmatpush.xpose.msra.mxu0 %v745
    %761 = vmatpush.xpose.msra.mxu0 %v743
    %762 = vmatpush.xpose.msra.mxu0 %v741
    %763 = vmatmul.f32.gmra.mxu0 %v735
    %v764 = vpop.f32.mrf.mxu0
    %v765 = vadd.f32 0.0, %v764
    %766 = vmatmul.f32.gmra.mxu0 %v737
    %v767 = vpop.f32.mrf.mxu0
    %v768 = vadd.f32 0.0, %v767
    %769 = vmatmul.f32.gmra.mxu0 %v739
    %v770 = vpop.f32.mrf.mxu0
    %v771 = vadd.f32 0.0, %v770
    %772 = vdwg.mxu0
    %773 = vrot.lane.b32.xlu0 %v452, 120
    %v774 = vpop.permute.xlu0 %773
    %775 = vrot.lane.b32.xlu0 %v455, 120
    %v776 = vpop.permute.xlu0 %775
    %777 = vrot.lane.b32.xlu0 %v458, 120
    %v778 = vpop.permute.xlu0 %777
    %779 = vrot.lane.b32.xlu0 %v452, 88
    %v780 = vpop.permute.xlu0 %779
    %781 = vrot.lane.b32.xlu0 %v455, 88
    %v782 = vpop.permute.xlu0 %781
    %783 = vrot.lane.b32.xlu0 %v458, 88
    %v784 = vpop.permute.xlu0 %783
    %v785 = vsel %vm469, %v774, 0
    %v787 = vsel %vm469, %v776, 0
    %v789 = vsel %vm469, %v778, 0
    %v791 = vsel %vm469, %v780, 0
    %v793 = vsel %vm469, %v782, 0
    %v795 = vsel %vm469, %v784, 0
    %797 = vmatpush.xpose.msra.mxu0 0.0
    %798 = vmatpush.xpose.msra.mxu0 0.0
    %799 = vmatpush.xpose.msra.mxu0 0.0
    %800 = vmatpush.xpose.msra.mxu0 0.0
    %801 = vmatpush.xpose.msra.mxu0 0.0
    %802 = vmatpush.xpose.msra.mxu0 0.0
    %803 = vmatpush.xpose.msra.mxu0 0.0
    %804 = vmatpush.xpose.msra.mxu0 0.0
    %805 = vmatpush.xpose.msra.mxu0 0.0
    %806 = vmatpush.xpose.msra.mxu0 0.0
    %807 = vmatpush.xpose.msra.mxu0 0.0
    %808 = vmatpush.xpose.msra.mxu0 0.0
    %809 = vmatpush.xpose.msra.mxu0 0.0
    %810 = vmatpush.xpose.msra.mxu0 %v795
    %811 = vmatpush.xpose.msra.mxu0 %v793
    %812 = vmatpush.xpose.msra.mxu0 %v791
    %813 = vmatmul.f32.gmra.mxu0 %v785
    %v814 = vpop.f32.mrf.mxu0
    %v815 = vadd.f32 0.0, %v814
    %816 = vmatmul.f32.gmra.mxu0 %v787
    %v817 = vpop.f32.mrf.mxu0
    %v818 = vadd.f32 0.0, %v817
    %819 = vmatmul.f32.gmra.mxu0 %v789
    %v820 = vpop.f32.mrf.mxu0
    %v821 = vadd.f32 0.0, %v820
    %822 = vdwg.mxu0
    %v823 = vmul.f32 %v765, 0.35355338
    %v824 = vmul.f32 %v768, 0.35355338
    %v825 = vmul.f32 %v771, 0.35355338
    %v826 = vmul.f32 %v815, 0.35355338
    %v827 = vmul.f32 %v818, 0.35355338
    %v828 = vmul.f32 %v821, 0.35355338
    %v829 = vsel %vm239, %v823, -1e+30
    %v830 = vsel %vm239, %v824, -1e+30
    %v831 = vsel %vm239, %v825, -1e+30
    %v832 = vsel %vm239, %v826, -1e+30
    %v833 = vsel %vm239, %v827, -1e+30
    %v834 = vsel %vm239, %v828, -1e+30
    %v835 = vsel %vm567, %v829, -inf
    %836 = vmax.xlane.f32.xlu0 %v835
    %v837 = vpop.xlane.xlu0 %836
    %v838 = vsel %vm567, %v830, -inf
    %839 = vmax.xlane.f32.xlu0 %v838
    %v840 = vpop.xlane.xlu0 %839
    %v841 = vsel %vm567, %v831, -inf
    %842 = vmax.xlane.f32.xlu0 %v841
    %v843 = vpop.xlane.xlu0 %842
    %v844 = vsel %vm567, %v832, -inf
    %845 = vmax.xlane.f32.xlu0 %v844
    %v846 = vpop.xlane.xlu0 %845
    %v847 = vsel %vm567, %v833, -inf
    %848 = vmax.xlane.f32.xlu0 %v847
    %v849 = vpop.xlane.xlu0 %848
    %v850 = vsel %vm567, %v834, -inf
    %851 = vmax.xlane.f32.xlu0 %v850
    %v852 = vpop.xlane.xlu0 %851
    %v853 = vsub.f32 %v829, %v837
    %v854 = vsub.f32 %v830, %v840
    %v855 = vsub.f32 %v831, %v843
    %v856 = vsub.f32 %v832, %v846
    %v857 = vsub.f32 %v833, %v849
    %v858 = vsub.f32 %v834, %v852
    %v859 = vmul.f32 %v853, 1.442695
    %v860 = vpow.pop %v859
    %v861 = vmul.f32 %v854, 1.442695
    %v862 = vpow.pop %v861
    %v863 = vmul.f32 %v855, 1.442695
    %v864 = vpow.pop %v863
    %v865 = vmul.f32 %v856, 1.442695
    %v866 = vpow.pop %v865
    %v867 = vmul.f32 %v857, 1.442695
    %v868 = vpow.pop %v867
    %v869 = vmul.f32 %v858, 1.442695
    %v870 = vpow.pop %v869
    %v871 = vsel %vm567, %v860, 0.0
    %872 = vadd.xlane.f32.xlu0 %v871
    %v873 = vpop.xlane.xlu0 %872
    %v874 = vsel %vm567, %v862, 0.0
    %875 = vadd.xlane.f32.xlu0 %v874
    %v876 = vpop.xlane.xlu0 %875
    %v877 = vsel %vm567, %v864, 0.0
    %878 = vadd.xlane.f32.xlu0 %v877
    %v879 = vpop.xlane.xlu0 %878
    %v880 = vsel %vm567, %v866, 0.0
    %881 = vadd.xlane.f32.xlu0 %v880
    %v882 = vpop.xlane.xlu0 %881
    %v883 = vsel %vm567, %v868, 0.0
    %884 = vadd.xlane.f32.xlu0 %v883
    %v885 = vpop.xlane.xlu0 %884
    %v886 = vsel %vm567, %v870, 0.0
    %887 = vadd.xlane.f32.xlu0 %v886
    %v888 = vpop.xlane.xlu0 %887
    %v889 = vrcp.pop %v873
    %v890 = vrcp.pop %v876
    %v891 = vrcp.pop %v879
    %v892 = vrcp.pop %v882
    %v893 = vrcp.pop %v885
    %v894 = vrcp.pop %v888
    %v895 = vmul.f32 %v860, %v889
    %v896 = vmul.f32 %v862, %v890
    %v897 = vmul.f32 %v864, %v891
    %v898 = vmul.f32 %v866, %v892
    %v899 = vmul.f32 %v868, %v893
    %v900 = vmul.f32 %v870, %v894
    %901 = vrot.lane.b32.xlu0 %v443, 56
    %v902 = vpop.permute.xlu0 %901
    %903 = vrot.lane.b32.xlu0 %v446, 56
    %v904 = vpop.permute.xlu0 %903
    %905 = vrot.lane.b32.xlu0 %v449, 56
    %v906 = vpop.permute.xlu0 %905
    %v911 = vsel %vm567, %v895, 0
    %v914 = vsel %vm567, %v896, 0
    %v917 = vsel %vm567, %v897, 0
    %919 = vmatpush.msra.mxu0 0.0
    %920 = vmatpush.msra.mxu0 0.0
    %921 = vmatpush.msra.mxu0 0.0
    %922 = vmatpush.msra.mxu0 0.0
    %923 = vmatpush.msra.mxu0 0.0
    %924 = vmatpush.msra.mxu0 0.0
    %925 = vmatpush.msra.mxu0 0.0
    %926 = vmatpush.msra.mxu0 0.0
    %927 = vmatpush.msra.mxu0 0.0
    %928 = vmatpush.msra.mxu0 0.0
    %929 = vmatpush.msra.mxu0 0.0
    %930 = vmatpush.msra.mxu0 0.0
    %931 = vmatpush.msra.mxu0 0.0
    %932 = vmatpush.msra.mxu0 %v906
    %933 = vmatpush.msra.mxu0 %v904
    %934 = vmatpush.msra.mxu0 %v902
    %935 = vmatmul.f32.gmra.mxu0 %v911
    %v936 = vpop.f32.mrf.mxu0
    %v937 = vadd.f32 0.0, %v936
    %938 = vmatmul.f32.gmra.mxu0 %v914
    %v939 = vpop.f32.mrf.mxu0
    %v940 = vadd.f32 0.0, %v939
    %941 = vmatmul.f32.gmra.mxu0 %v917
    %v942 = vpop.f32.mrf.mxu0
    %v943 = vadd.f32 0.0, %v942
    %944 = vdwg.mxu0
    %945 = vrot.lane.b32.xlu0 %v452, 56
    %v946 = vpop.permute.xlu0 %945
    %947 = vrot.lane.b32.xlu0 %v455, 56
    %v948 = vpop.permute.xlu0 %947
    %949 = vrot.lane.b32.xlu0 %v458, 56
    %v950 = vpop.permute.xlu0 %949
    %v955 = vsel %vm567, %v898, 0
    %v958 = vsel %vm567, %v899, 0
    %v961 = vsel %vm567, %v900, 0
    %963 = vmatpush.msra.mxu0 0.0
    %964 = vmatpush.msra.mxu0 0.0
    %965 = vmatpush.msra.mxu0 0.0
    %966 = vmatpush.msra.mxu0 0.0
    %967 = vmatpush.msra.mxu0 0.0
    %968 = vmatpush.msra.mxu0 0.0
    %969 = vmatpush.msra.mxu0 0.0
    %970 = vmatpush.msra.mxu0 0.0
    %971 = vmatpush.msra.mxu0 0.0
    %972 = vmatpush.msra.mxu0 0.0
    %973 = vmatpush.msra.mxu0 0.0
    %974 = vmatpush.msra.mxu0 0.0
    %975 = vmatpush.msra.mxu0 0.0
    %976 = vmatpush.msra.mxu0 %v950
    %977 = vmatpush.msra.mxu0 %v948
    %978 = vmatpush.msra.mxu0 %v946
    %979 = vmatmul.f32.gmra.mxu0 %v955
    %v980 = vpop.f32.mrf.mxu0
    %v981 = vadd.f32 0.0, %v980
    %982 = vmatmul.f32.gmra.mxu0 %v958
    %v983 = vpop.f32.mrf.mxu0
    %v984 = vadd.f32 0.0, %v983
    %985 = vmatmul.f32.gmra.mxu0 %v961
    %v986 = vpop.f32.mrf.mxu0
    %v987 = vadd.f32 0.0, %v986
    %988 = vdwg.mxu0
    %s989 = scalar_lea.vmem %s9, 8
    %v990 = vld [vmem:[%s989] sm:$0xff]
    %v992 = vsel %vm469, %v937, 0
    %v995 = vsel %vm469, %v940, 0
    %v998 = vsel %vm469, %v943, 0
    %v1001 = vsel %vm469, %v981, 0
    %v1004 = vsel %vm469, %v984, 0
    %v1007 = vsel %vm469, %v987, 0
    %1009 = vmatpush.msra.mxu0 0.0
    %1010 = vmatpush.msra.mxu0 0.0
    %1011 = vmatpush.msra.mxu0 0.0
    %1012 = vmatpush.msra.mxu0 0.0
    %1013 = vmatpush.msra.mxu0 0.0
    %1014 = vmatpush.msra.mxu0 0.0
    %1015 = vmatpush.msra.mxu0 0.0
    %1016 = vmatpush.msra.mxu0 0.0
    %1017 = vmatpush.msra.mxu0 0.0
    %1018 = vmatpush.msra.mxu0 0.0
    %1019 = vmatpush.msra.mxu0 0.0
    %1020 = vmatpush.msra.mxu0 0.0
    %1021 = vmatpush.msra.mxu0 0.0
    %1022 = vmatpush.msra.mxu0 0.0
    %1023 = vmatpush.msra.mxu0 0.0
    %1024 = vmatpush.msra.mxu0 %v990
    %1025 = vmatmul.f32.gmra.mxu0 %v992
    %v1026 = vpop.f32.mrf.mxu0
    %v1027 = vadd.f32 0.0, %v1026
    %1028 = vmatmul.f32.gmra.mxu0 %v995
    %v1029 = vpop.f32.mrf.mxu0
    %v1030 = vadd.f32 0.0, %v1029
    %1031 = vmatmul.f32.gmra.mxu0 %v998
    %v1032 = vpop.f32.mrf.mxu0
    %v1033 = vadd.f32 0.0, %v1032
    %1034 = vmatmul.f32.gmra.mxu0 %v1001
    %v1035 = vpop.f32.mrf.mxu0
    %v1036 = vadd.f32 0.0, %v1035
    %1037 = vmatmul.f32.gmra.mxu0 %v1004
    %v1038 = vpop.f32.mrf.mxu0
    %v1039 = vadd.f32 0.0, %v1038
    %1040 = vmatmul.f32.gmra.mxu0 %v1007
    %v1041 = vpop.f32.mrf.mxu0
    %v1042 = vadd.f32 0.0, %v1041
    %1043 = vdwg.mxu0
    %v1045 = vsel %vm469, %v670, 0
    %v1048 = vsel %vm469, %v673, 0
    %v1051 = vsel %vm469, %v676, 0
    %v1054 = vsel %vm469, %v714, 0
    %v1057 = vsel %vm469, %v717, 0
    %v1060 = vsel %vm469, %v720, 0
    %1062 = vmatpush.msra.mxu0 0.0
    %1063 = vmatpush.msra.mxu0 0.0
    %1064 = vmatpush.msra.mxu0 0.0
    %1065 = vmatpush.msra.mxu0 0.0
    %1066 = vmatpush.msra.mxu0 0.0
    %1067 = vmatpush.msra.mxu0 0.0
    %1068 = vmatpush.msra.mxu0 0.0
    %1069 = vmatpush.msra.mxu0 0.0
    %1070 = vmatpush.msra.mxu0 0.0
    %1071 = vmatpush.msra.mxu0 0.0
    %1072 = vmatpush.msra.mxu0 0.0
    %1073 = vmatpush.msra.mxu0 0.0
    %1074 = vmatpush.msra.mxu0 0.0
    %1075 = vmatpush.msra.mxu0 0.0
    %1076 = vmatpush.msra.mxu0 0.0
    %1077 = vmatpush.msra.mxu0 %v722
    %1078 = vmatmul.f32.gmra.mxu0 %v1045
    %v1079 = vpop.f32.mrf.mxu0
    %v1080 = vadd.f32 %v1027, %v1079
    %1081 = vmatmul.f32.gmra.mxu0 %v1048
    %v1082 = vpop.f32.mrf.mxu0
    %v1083 = vadd.f32 %v1030, %v1082
    %1084 = vmatmul.f32.gmra.mxu0 %v1051
    %v1085 = vpop.f32.mrf.mxu0
    %v1086 = vadd.f32 %v1033, %v1085
    %1087 = vmatmul.f32.gmra.mxu0 %v1054
    %v1088 = vpop.f32.mrf.mxu0
    %v1089 = vadd.f32 %v1036, %v1088
    %1090 = vmatmul.f32.gmra.mxu0 %v1057
    %v1091 = vpop.f32.mrf.mxu0
    %v1092 = vadd.f32 %v1039, %v1091
    %1093 = vmatmul.f32.gmra.mxu0 %v1060
    %v1094 = vpop.f32.mrf.mxu0
    %v1095 = vadd.f32 %v1042, %v1094
    %1096 = vdwg.mxu0
    %1097 = vrot.lane.b32.xlu0 %v443, 112
    %v1098 = vpop.permute.xlu0 %1097
    %1099 = vrot.lane.b32.xlu0 %v446, 112
    %v1100 = vpop.permute.xlu0 %1099
    %1101 = vrot.lane.b32.xlu0 %v449, 112
    %v1102 = vpop.permute.xlu0 %1101
    %1103 = vrot.lane.b32.xlu0 %v443, 80
    %v1104 = vpop.permute.xlu0 %1103
    %1105 = vrot.lane.b32.xlu0 %v446, 80
    %v1106 = vpop.permute.xlu0 %1105
    %1107 = vrot.lane.b32.xlu0 %v449, 80
    %v1108 = vpop.permute.xlu0 %1107
    %v1109 = vsel %vm469, %v1098, 0
    %v1111 = vsel %vm469, %v1100, 0
    %v1113 = vsel %vm469, %v1102, 0
    %v1115 = vsel %vm469, %v1104, 0
    %v1117 = vsel %vm469, %v1106, 0
    %v1119 = vsel %vm469, %v1108, 0
    %1121 = vmatpush.xpose.msra.mxu0 0.0
    %1122 = vmatpush.xpose.msra.mxu0 0.0
    %1123 = vmatpush.xpose.msra.mxu0 0.0
    %1124 = vmatpush.xpose.msra.mxu0 0.0
    %1125 = vmatpush.xpose.msra.mxu0 0.0
    %1126 = vmatpush.xpose.msra.mxu0 0.0
    %1127 = vmatpush.xpose.msra.mxu0 0.0
    %1128 = vmatpush.xpose.msra.mxu0 0.0
    %1129 = vmatpush.xpose.msra.mxu0 0.0
    %1130 = vmatpush.xpose.msra.mxu0 0.0
    %1131 = vmatpush.xpose.msra.mxu0 0.0
    %1132 = vmatpush.xpose.msra.mxu0 0.0
    %1133 = vmatpush.xpose.msra.mxu0 0.0
    %1134 = vmatpush.xpose.msra.mxu0 %v1119
    %1135 = vmatpush.xpose.msra.mxu0 %v1117
    %1136 = vmatpush.xpose.msra.mxu0 %v1115
    %1137 = vmatmul.f32.gmra.mxu0 %v1109
    %v1138 = vpop.f32.mrf.mxu0
    %v1139 = vadd.f32 0.0, %v1138
    %1140 = vmatmul.f32.gmra.mxu0 %v1111
    %v1141 = vpop.f32.mrf.mxu0
    %v1142 = vadd.f32 0.0, %v1141
    %1143 = vmatmul.f32.gmra.mxu0 %v1113
    %v1144 = vpop.f32.mrf.mxu0
    %v1145 = vadd.f32 0.0, %v1144
    %1146 = vdwg.mxu0
    %1147 = vrot.lane.b32.xlu0 %v452, 112
    %v1148 = vpop.permute.xlu0 %1147
    %1149 = vrot.lane.b32.xlu0 %v455, 112
    %v1150 = vpop.permute.xlu0 %1149
    %1151 = vrot.lane.b32.xlu0 %v458, 112
    %v1152 = vpop.permute.xlu0 %1151
    %1153 = vrot.lane.b32.xlu0 %v452, 80
    %v1154 = vpop.permute.xlu0 %1153
    %1155 = vrot.lane.b32.xlu0 %v455, 80
    %v1156 = vpop.permute.xlu0 %1155
    %1157 = vrot.lane.b32.xlu0 %v458, 80
    %v1158 = vpop.permute.xlu0 %1157
    %v1159 = vsel %vm469, %v1148, 0
    %v1161 = vsel %vm469, %v1150, 0
    %v1163 = vsel %vm469, %v1152, 0
    %v1165 = vsel %vm469, %v1154, 0
    %v1167 = vsel %vm469, %v1156, 0
    %v1169 = vsel %vm469, %v1158, 0
    %1171 = vmatpush.xpose.msra.mxu0 0.0
    %1172 = vmatpush.xpose.msra.mxu0 0.0
    %1173 = vmatpush.xpose.msra.mxu0 0.0
    %1174 = vmatpush.xpose.msra.mxu0 0.0
    %1175 = vmatpush.xpose.msra.mxu0 0.0
    %1176 = vmatpush.xpose.msra.mxu0 0.0
    %1177 = vmatpush.xpose.msra.mxu0 0.0
    %1178 = vmatpush.xpose.msra.mxu0 0.0
    %1179 = vmatpush.xpose.msra.mxu0 0.0
    %1180 = vmatpush.xpose.msra.mxu0 0.0
    %1181 = vmatpush.xpose.msra.mxu0 0.0
    %1182 = vmatpush.xpose.msra.mxu0 0.0
    %1183 = vmatpush.xpose.msra.mxu0 0.0
    %1184 = vmatpush.xpose.msra.mxu0 %v1169
    %1185 = vmatpush.xpose.msra.mxu0 %v1167
    %1186 = vmatpush.xpose.msra.mxu0 %v1165
    %1187 = vmatmul.f32.gmra.mxu0 %v1159
    %v1188 = vpop.f32.mrf.mxu0
    %v1189 = vadd.f32 0.0, %v1188
    %1190 = vmatmul.f32.gmra.mxu0 %v1161
    %v1191 = vpop.f32.mrf.mxu0
    %v1192 = vadd.f32 0.0, %v1191
    %1193 = vmatmul.f32.gmra.mxu0 %v1163
    %v1194 = vpop.f32.mrf.mxu0
    %v1195 = vadd.f32 0.0, %v1194
    %1196 = vdwg.mxu0
    %v1197 = vmul.f32 %v1139, 0.35355338
    %v1198 = vmul.f32 %v1142, 0.35355338
    %v1199 = vmul.f32 %v1145, 0.35355338
    %v1200 = vmul.f32 %v1189, 0.35355338
    %v1201 = vmul.f32 %v1192, 0.35355338
    %v1202 = vmul.f32 %v1195, 0.35355338
    %v1203 = vsel %vm239, %v1197, -1e+30
    %v1204 = vsel %vm239, %v1198, -1e+30
    %v1205 = vsel %vm239, %v1199, -1e+30
    %v1206 = vsel %vm239, %v1200, -1e+30
    %v1207 = vsel %vm239, %v1201, -1e+30
    %v1208 = vsel %vm239, %v1202, -1e+30
    %v1209 = vsel %vm567, %v1203, -inf
    %1210 = vmax.xlane.f32.xlu0 %v1209
    %v1211 = vpop.xlane.xlu0 %1210
    %v1212 = vsel %vm567, %v1204, -inf
    %1213 = vmax.xlane.f32.xlu0 %v1212
    %v1214 = vpop.xlane.xlu0 %1213
    %v1215 = vsel %vm567, %v1205, -inf
    %1216 = vmax.xlane.f32.xlu0 %v1215
    %v1217 = vpop.xlane.xlu0 %1216
    %v1218 = vsel %vm567, %v1206, -inf
    %1219 = vmax.xlane.f32.xlu0 %v1218
    %v1220 = vpop.xlane.xlu0 %1219
    %v1221 = vsel %vm567, %v1207, -inf
    %1222 = vmax.xlane.f32.xlu0 %v1221
    %v1223 = vpop.xlane.xlu0 %1222
    %v1224 = vsel %vm567, %v1208, -inf
    %1225 = vmax.xlane.f32.xlu0 %v1224
    %v1226 = vpop.xlane.xlu0 %1225
    %v1227 = vsub.f32 %v1203, %v1211
    %v1228 = vsub.f32 %v1204, %v1214
    %v1229 = vsub.f32 %v1205, %v1217
    %v1230 = vsub.f32 %v1206, %v1220
    %v1231 = vsub.f32 %v1207, %v1223
    %v1232 = vsub.f32 %v1208, %v1226
    %v1233 = vmul.f32 %v1227, 1.442695
    %v1234 = vpow.pop %v1233
    %v1235 = vmul.f32 %v1228, 1.442695
    %v1236 = vpow.pop %v1235
    %v1237 = vmul.f32 %v1229, 1.442695
    %v1238 = vpow.pop %v1237
    %v1239 = vmul.f32 %v1230, 1.442695
    %v1240 = vpow.pop %v1239
    %v1241 = vmul.f32 %v1231, 1.442695
    %v1242 = vpow.pop %v1241
    %v1243 = vmul.f32 %v1232, 1.442695
    %v1244 = vpow.pop %v1243
    %v1245 = vsel %vm567, %v1234, 0.0
    %1246 = vadd.xlane.f32.xlu0 %v1245
    %v1247 = vpop.xlane.xlu0 %1246
    %v1248 = vsel %vm567, %v1236, 0.0
    %1249 = vadd.xlane.f32.xlu0 %v1248
    %v1250 = vpop.xlane.xlu0 %1249
    %v1251 = vsel %vm567, %v1238, 0.0
    %1252 = vadd.xlane.f32.xlu0 %v1251
    %v1253 = vpop.xlane.xlu0 %1252
    %v1254 = vsel %vm567, %v1240, 0.0
    %1255 = vadd.xlane.f32.xlu0 %v1254
    %v1256 = vpop.xlane.xlu0 %1255
    %v1257 = vsel %vm567, %v1242, 0.0
    %1258 = vadd.xlane.f32.xlu0 %v1257
    %v1259 = vpop.xlane.xlu0 %1258
    %v1260 = vsel %vm567, %v1244, 0.0
    %1261 = vadd.xlane.f32.xlu0 %v1260
    %v1262 = vpop.xlane.xlu0 %1261
    %v1263 = vrcp.pop %v1247
    %v1264 = vrcp.pop %v1250
    %v1265 = vrcp.pop %v1253
    %v1266 = vrcp.pop %v1256
    %v1267 = vrcp.pop %v1259
    %v1268 = vrcp.pop %v1262
    %v1269 = vmul.f32 %v1234, %v1263
    %v1270 = vmul.f32 %v1236, %v1264
    %v1271 = vmul.f32 %v1238, %v1265
    %v1272 = vmul.f32 %v1240, %v1266
    %v1273 = vmul.f32 %v1242, %v1267
    %v1274 = vmul.f32 %v1244, %v1268
    %1275 = vrot.lane.b32.xlu0 %v443, 48
    %v1276 = vpop.permute.xlu0 %1275
    %1277 = vrot.lane.b32.xlu0 %v446, 48
    %v1278 = vpop.permute.xlu0 %1277
    %1279 = vrot.lane.b32.xlu0 %v449, 48
    %v1280 = vpop.permute.xlu0 %1279
    %v1285 = vsel %vm567, %v1269, 0
    %v1288 = vsel %vm567, %v1270, 0
    %v1291 = vsel %vm567, %v1271, 0
    %1293 = vmatpush.msra.mxu0 0.0
    %1294 = vmatpush.msra.mxu0 0.0
    %1295 = vmatpush.msra.mxu0 0.0
    %1296 = vmatpush.msra.mxu0 0.0
    %1297 = vmatpush.msra.mxu0 0.0
    %1298 = vmatpush.msra.mxu0 0.0
    %1299 = vmatpush.msra.mxu0 0.0
    %1300 = vmatpush.msra.mxu0 0.0
    %1301 = vmatpush.msra.mxu0 0.0
    %1302 = vmatpush.msra.mxu0 0.0
    %1303 = vmatpush.msra.mxu0 0.0
    %1304 = vmatpush.msra.mxu0 0.0
    %1305 = vmatpush.msra.mxu0 0.0
    %1306 = vmatpush.msra.mxu0 %v1280
    %1307 = vmatpush.msra.mxu0 %v1278
    %1308 = vmatpush.msra.mxu0 %v1276
    %1309 = vmatmul.f32.gmra.mxu0 %v1285
    %v1310 = vpop.f32.mrf.mxu0
    %v1311 = vadd.f32 0.0, %v1310
    %1312 = vmatmul.f32.gmra.mxu0 %v1288
    %v1313 = vpop.f32.mrf.mxu0
    %v1314 = vadd.f32 0.0, %v1313
    %1315 = vmatmul.f32.gmra.mxu0 %v1291
    %v1316 = vpop.f32.mrf.mxu0
    %v1317 = vadd.f32 0.0, %v1316
    %1318 = vdwg.mxu0
    %1319 = vrot.lane.b32.xlu0 %v452, 48
    %v1320 = vpop.permute.xlu0 %1319
    %1321 = vrot.lane.b32.xlu0 %v455, 48
    %v1322 = vpop.permute.xlu0 %1321
    %1323 = vrot.lane.b32.xlu0 %v458, 48
    %v1324 = vpop.permute.xlu0 %1323
    %v1329 = vsel %vm567, %v1272, 0
    %v1332 = vsel %vm567, %v1273, 0
    %v1335 = vsel %vm567, %v1274, 0
    %1337 = vmatpush.msra.mxu0 0.0
    %1338 = vmatpush.msra.mxu0 0.0
    %1339 = vmatpush.msra.mxu0 0.0
    %1340 = vmatpush.msra.mxu0 0.0
    %1341 = vmatpush.msra.mxu0 0.0
    %1342 = vmatpush.msra.mxu0 0.0
    %1343 = vmatpush.msra.mxu0 0.0
    %1344 = vmatpush.msra.mxu0 0.0
    %1345 = vmatpush.msra.mxu0 0.0
    %1346 = vmatpush.msra.mxu0 0.0
    %1347 = vmatpush.msra.mxu0 0.0
    %1348 = vmatpush.msra.mxu0 0.0
    %1349 = vmatpush.msra.mxu0 0.0
    %1350 = vmatpush.msra.mxu0 %v1324
    %1351 = vmatpush.msra.mxu0 %v1322
    %1352 = vmatpush.msra.mxu0 %v1320
    %1353 = vmatmul.f32.gmra.mxu0 %v1329
    %v1354 = vpop.f32.mrf.mxu0
    %v1355 = vadd.f32 0.0, %v1354
    %1356 = vmatmul.f32.gmra.mxu0 %v1332
    %v1357 = vpop.f32.mrf.mxu0
    %v1358 = vadd.f32 0.0, %v1357
    %1359 = vmatmul.f32.gmra.mxu0 %v1335
    %v1360 = vpop.f32.mrf.mxu0
    %v1361 = vadd.f32 0.0, %v1360
    %1362 = vdwg.mxu0
    %s1363 = scalar_lea.vmem %s9, 16
    %v1364 = vld [vmem:[%s1363] sm:$0xff]
    %v1366 = vsel %vm469, %v1311, 0
    %v1369 = vsel %vm469, %v1314, 0
    %v1372 = vsel %vm469, %v1317, 0
    %v1375 = vsel %vm469, %v1355, 0
    %v1378 = vsel %vm469, %v1358, 0
    %v1381 = vsel %vm469, %v1361, 0
    %1383 = vmatpush.msra.mxu0 0.0
    %1384 = vmatpush.msra.mxu0 0.0
    %1385 = vmatpush.msra.mxu0 0.0
    %1386 = vmatpush.msra.mxu0 0.0
    %1387 = vmatpush.msra.mxu0 0.0
    %1388 = vmatpush.msra.mxu0 0.0
    %1389 = vmatpush.msra.mxu0 0.0
    %1390 = vmatpush.msra.mxu0 0.0
    %1391 = vmatpush.msra.mxu0 0.0
    %1392 = vmatpush.msra.mxu0 0.0
    %1393 = vmatpush.msra.mxu0 0.0
    %1394 = vmatpush.msra.mxu0 0.0
    %1395 = vmatpush.msra.mxu0 0.0
    %1396 = vmatpush.msra.mxu0 0.0
    %1397 = vmatpush.msra.mxu0 0.0
    %1398 = vmatpush.msra.mxu0 %v1364
    %1399 = vmatmul.f32.gmra.mxu0 %v1366
    %v1400 = vpop.f32.mrf.mxu0
    %v1401 = vadd.f32 0.0, %v1400
    %1402 = vmatmul.f32.gmra.mxu0 %v1369
    %v1403 = vpop.f32.mrf.mxu0
    %v1404 = vadd.f32 0.0, %v1403
    %1405 = vmatmul.f32.gmra.mxu0 %v1372
    %v1406 = vpop.f32.mrf.mxu0
    %v1407 = vadd.f32 0.0, %v1406
    %1408 = vmatmul.f32.gmra.mxu0 %v1375
    %v1409 = vpop.f32.mrf.mxu0
    %v1410 = vadd.f32 0.0, %v1409
    %1411 = vmatmul.f32.gmra.mxu0 %v1378
    %v1412 = vpop.f32.mrf.mxu0
    %v1413 = vadd.f32 0.0, %v1412
    %1414 = vmatmul.f32.gmra.mxu0 %v1381
    %v1415 = vpop.f32.mrf.mxu0
    %v1416 = vadd.f32 0.0, %v1415
    %1417 = vdwg.mxu0
    %v1418 = vadd.f32 %v1080, %v1401
    %v1419 = vadd.f32 %v1083, %v1404
    %v1420 = vadd.f32 %v1086, %v1407
    %v1421 = vadd.f32 %v1089, %v1410
    %v1422 = vadd.f32 %v1092, %v1413
    %v1423 = vadd.f32 %v1095, %v1416
    %1424 = vrot.lane.b32.xlu0 %v443, 104
    %v1425 = vpop.permute.xlu0 %1424
    %1426 = vrot.lane.b32.xlu0 %v446, 104
    %v1427 = vpop.permute.xlu0 %1426
    %1428 = vrot.lane.b32.xlu0 %v449, 104
    %v1429 = vpop.permute.xlu0 %1428
    %1430 = vrot.lane.b32.xlu0 %v443, 72
    %v1431 = vpop.permute.xlu0 %1430
    %1432 = vrot.lane.b32.xlu0 %v446, 72
    %v1433 = vpop.permute.xlu0 %1432
    %1434 = vrot.lane.b32.xlu0 %v449, 72
    %v1435 = vpop.permute.xlu0 %1434
    %v1436 = vsel %vm469, %v1425, 0
    %v1438 = vsel %vm469, %v1427, 0
    %v1440 = vsel %vm469, %v1429, 0
    %v1442 = vsel %vm469, %v1431, 0
    %v1444 = vsel %vm469, %v1433, 0
    %v1446 = vsel %vm469, %v1435, 0
    %1448 = vmatpush.xpose.msra.mxu0 0.0
    %1449 = vmatpush.xpose.msra.mxu0 0.0
    %1450 = vmatpush.xpose.msra.mxu0 0.0
    %1451 = vmatpush.xpose.msra.mxu0 0.0
    %1452 = vmatpush.xpose.msra.mxu0 0.0
    %1453 = vmatpush.xpose.msra.mxu0 0.0
    %1454 = vmatpush.xpose.msra.mxu0 0.0
    %1455 = vmatpush.xpose.msra.mxu0 0.0
    %1456 = vmatpush.xpose.msra.mxu0 0.0
    %1457 = vmatpush.xpose.msra.mxu0 0.0
    %1458 = vmatpush.xpose.msra.mxu0 0.0
    %1459 = vmatpush.xpose.msra.mxu0 0.0
    %1460 = vmatpush.xpose.msra.mxu0 0.0
    %1461 = vmatpush.xpose.msra.mxu0 %v1446
    %1462 = vmatpush.xpose.msra.mxu0 %v1444
    %1463 = vmatpush.xpose.msra.mxu0 %v1442
    %1464 = vmatmul.f32.gmra.mxu0 %v1436
    %v1465 = vpop.f32.mrf.mxu0
    %v1466 = vadd.f32 0.0, %v1465
    %1467 = vmatmul.f32.gmra.mxu0 %v1438
    %v1468 = vpop.f32.mrf.mxu0
    %v1469 = vadd.f32 0.0, %v1468
    %1470 = vmatmul.f32.gmra.mxu0 %v1440
    %v1471 = vpop.f32.mrf.mxu0
    %v1472 = vadd.f32 0.0, %v1471
    %1473 = vdwg.mxu0
    %1474 = vrot.lane.b32.xlu0 %v452, 104
    %v1475 = vpop.permute.xlu0 %1474
    %1476 = vrot.lane.b32.xlu0 %v455, 104
    %v1477 = vpop.permute.xlu0 %1476
    %1478 = vrot.lane.b32.xlu0 %v458, 104
    %v1479 = vpop.permute.xlu0 %1478
    %1480 = vrot.lane.b32.xlu0 %v452, 72
    %v1481 = vpop.permute.xlu0 %1480
    %1482 = vrot.lane.b32.xlu0 %v455, 72
    %v1483 = vpop.permute.xlu0 %1482
    %1484 = vrot.lane.b32.xlu0 %v458, 72
    %v1485 = vpop.permute.xlu0 %1484
    %v1486 = vsel %vm469, %v1475, 0
    %v1488 = vsel %vm469, %v1477, 0
    %v1490 = vsel %vm469, %v1479, 0
    %v1492 = vsel %vm469, %v1481, 0
    %v1494 = vsel %vm469, %v1483, 0
    %v1496 = vsel %vm469, %v1485, 0
    %1498 = vmatpush.xpose.msra.mxu0 0.0
    %1499 = vmatpush.xpose.msra.mxu0 0.0
    %1500 = vmatpush.xpose.msra.mxu0 0.0
    %1501 = vmatpush.xpose.msra.mxu0 0.0
    %1502 = vmatpush.xpose.msra.mxu0 0.0
    %1503 = vmatpush.xpose.msra.mxu0 0.0
    %1504 = vmatpush.xpose.msra.mxu0 0.0
    %1505 = vmatpush.xpose.msra.mxu0 0.0
    %1506 = vmatpush.xpose.msra.mxu0 0.0
    %1507 = vmatpush.xpose.msra.mxu0 0.0
    %1508 = vmatpush.xpose.msra.mxu0 0.0
    %1509 = vmatpush.xpose.msra.mxu0 0.0
    %1510 = vmatpush.xpose.msra.mxu0 0.0
    %1511 = vmatpush.xpose.msra.mxu0 %v1496
    %1512 = vmatpush.xpose.msra.mxu0 %v1494
    %1513 = vmatpush.xpose.msra.mxu0 %v1492
    %1514 = vmatmul.f32.gmra.mxu0 %v1486
    %v1515 = vpop.f32.mrf.mxu0
    %v1516 = vadd.f32 0.0, %v1515
    %1517 = vmatmul.f32.gmra.mxu0 %v1488
    %v1518 = vpop.f32.mrf.mxu0
    %v1519 = vadd.f32 0.0, %v1518
    %1520 = vmatmul.f32.gmra.mxu0 %v1490
    %v1521 = vpop.f32.mrf.mxu0
    %v1522 = vadd.f32 0.0, %v1521
    %1523 = vdwg.mxu0
    %v1524 = vmul.f32 %v1466, 0.35355338
    %v1525 = vmul.f32 %v1469, 0.35355338
    %v1526 = vmul.f32 %v1472, 0.35355338
    %v1527 = vmul.f32 %v1516, 0.35355338
    %v1528 = vmul.f32 %v1519, 0.35355338
    %v1529 = vmul.f32 %v1522, 0.35355338
    %v1530 = vsel %vm239, %v1524, -1e+30
    %v1531 = vsel %vm239, %v1525, -1e+30
    %v1532 = vsel %vm239, %v1526, -1e+30
    %v1533 = vsel %vm239, %v1527, -1e+30
    %v1534 = vsel %vm239, %v1528, -1e+30
    %v1535 = vsel %vm239, %v1529, -1e+30
    %v1536 = vsel %vm567, %v1530, -inf
    %1537 = vmax.xlane.f32.xlu0 %v1536
    %v1538 = vpop.xlane.xlu0 %1537
    %v1539 = vsel %vm567, %v1531, -inf
    %1540 = vmax.xlane.f32.xlu0 %v1539
    %v1541 = vpop.xlane.xlu0 %1540
    %v1542 = vsel %vm567, %v1532, -inf
    %1543 = vmax.xlane.f32.xlu0 %v1542
    %v1544 = vpop.xlane.xlu0 %1543
    %v1545 = vsel %vm567, %v1533, -inf
    %1546 = vmax.xlane.f32.xlu0 %v1545
    %v1547 = vpop.xlane.xlu0 %1546
    %v1548 = vsel %vm567, %v1534, -inf
    %1549 = vmax.xlane.f32.xlu0 %v1548
    %v1550 = vpop.xlane.xlu0 %1549
    %v1551 = vsel %vm567, %v1535, -inf
    %1552 = vmax.xlane.f32.xlu0 %v1551
    %v1553 = vpop.xlane.xlu0 %1552
    %v1554 = vsub.f32 %v1530, %v1538
    %v1555 = vsub.f32 %v1531, %v1541
    %v1556 = vsub.f32 %v1532, %v1544
    %v1557 = vsub.f32 %v1533, %v1547
    %v1558 = vsub.f32 %v1534, %v1550
    %v1559 = vsub.f32 %v1535, %v1553
    %v1560 = vmul.f32 %v1554, 1.442695
    %v1561 = vpow.pop %v1560
    %v1562 = vmul.f32 %v1555, 1.442695
    %v1563 = vpow.pop %v1562
    %v1564 = vmul.f32 %v1556, 1.442695
    %v1565 = vpow.pop %v1564
    %v1566 = vmul.f32 %v1557, 1.442695
    %v1567 = vpow.pop %v1566
    %v1568 = vmul.f32 %v1558, 1.442695
    %v1569 = vpow.pop %v1568
    %v1570 = vmul.f32 %v1559, 1.442695
    %v1571 = vpow.pop %v1570
    %v1572 = vsel %vm567, %v1561, 0.0
    %1573 = vadd.xlane.f32.xlu0 %v1572
    %v1574 = vpop.xlane.xlu0 %1573
    %v1575 = vsel %vm567, %v1563, 0.0
    %1576 = vadd.xlane.f32.xlu0 %v1575
    %v1577 = vpop.xlane.xlu0 %1576
    %v1578 = vsel %vm567, %v1565, 0.0
    %1579 = vadd.xlane.f32.xlu0 %v1578
    %v1580 = vpop.xlane.xlu0 %1579
    %v1581 = vsel %vm567, %v1567, 0.0
    %1582 = vadd.xlane.f32.xlu0 %v1581
    %v1583 = vpop.xlane.xlu0 %1582
    %v1584 = vsel %vm567, %v1569, 0.0
    %1585 = vadd.xlane.f32.xlu0 %v1584
    %v1586 = vpop.xlane.xlu0 %1585
    %v1587 = vsel %vm567, %v1571, 0.0
    %1588 = vadd.xlane.f32.xlu0 %v1587
    %v1589 = vpop.xlane.xlu0 %1588
    %v1590 = vrcp.pop %v1574
    %v1591 = vrcp.pop %v1577
    %v1592 = vrcp.pop %v1580
    %v1593 = vrcp.pop %v1583
    %v1594 = vrcp.pop %v1586
    %v1595 = vrcp.pop %v1589
    %v1596 = vmul.f32 %v1561, %v1590
    %v1597 = vmul.f32 %v1563, %v1591
    %v1598 = vmul.f32 %v1565, %v1592
    %v1599 = vmul.f32 %v1567, %v1593
    %v1600 = vmul.f32 %v1569, %v1594
    %v1601 = vmul.f32 %v1571, %v1595
    %1602 = vrot.lane.b32.xlu0 %v443, 40
    %v1603 = vpop.permute.xlu0 %1602
    %1604 = vrot.lane.b32.xlu0 %v446, 40
    %v1605 = vpop.permute.xlu0 %1604
    %1606 = vrot.lane.b32.xlu0 %v449, 40
    %v1607 = vpop.permute.xlu0 %1606
    %v1612 = vsel %vm567, %v1596, 0
    %v1615 = vsel %vm567, %v1597, 0
    %v1618 = vsel %vm567, %v1598, 0
    %1620 = vmatpush.msra.mxu0 0.0
    %1621 = vmatpush.msra.mxu0 0.0
    %1622 = vmatpush.msra.mxu0 0.0
    %1623 = vmatpush.msra.mxu0 0.0
    %1624 = vmatpush.msra.mxu0 0.0
    %1625 = vmatpush.msra.mxu0 0.0
    %1626 = vmatpush.msra.mxu0 0.0
    %1627 = vmatpush.msra.mxu0 0.0
    %1628 = vmatpush.msra.mxu0 0.0
    %1629 = vmatpush.msra.mxu0 0.0
    %1630 = vmatpush.msra.mxu0 0.0
    %1631 = vmatpush.msra.mxu0 0.0
    %1632 = vmatpush.msra.mxu0 0.0
    %1633 = vmatpush.msra.mxu0 %v1607
    %1634 = vmatpush.msra.mxu0 %v1605
    %1635 = vmatpush.msra.mxu0 %v1603
    %1636 = vmatmul.f32.gmra.mxu0 %v1612
    %v1637 = vpop.f32.mrf.mxu0
    %v1638 = vadd.f32 0.0, %v1637
    %1639 = vmatmul.f32.gmra.mxu0 %v1615
    %v1640 = vpop.f32.mrf.mxu0
    %v1641 = vadd.f32 0.0, %v1640
    %1642 = vmatmul.f32.gmra.mxu0 %v1618
    %v1643 = vpop.f32.mrf.mxu0
    %v1644 = vadd.f32 0.0, %v1643
    %1645 = vdwg.mxu0
    %1646 = vrot.lane.b32.xlu0 %v452, 40
    %v1647 = vpop.permute.xlu0 %1646
    %1648 = vrot.lane.b32.xlu0 %v455, 40
    %v1649 = vpop.permute.xlu0 %1648
    %1650 = vrot.lane.b32.xlu0 %v458, 40
    %v1651 = vpop.permute.xlu0 %1650
    %v1656 = vsel %vm567, %v1599, 0
    %v1659 = vsel %vm567, %v1600, 0
    %v1662 = vsel %vm567, %v1601, 0
    %1664 = vmatpush.msra.mxu0 0.0
    %1665 = vmatpush.msra.mxu0 0.0
    %1666 = vmatpush.msra.mxu0 0.0
    %1667 = vmatpush.msra.mxu0 0.0
    %1668 = vmatpush.msra.mxu0 0.0
    %1669 = vmatpush.msra.mxu0 0.0
    %1670 = vmatpush.msra.mxu0 0.0
    %1671 = vmatpush.msra.mxu0 0.0
    %1672 = vmatpush.msra.mxu0 0.0
    %1673 = vmatpush.msra.mxu0 0.0
    %1674 = vmatpush.msra.mxu0 0.0
    %1675 = vmatpush.msra.mxu0 0.0
    %1676 = vmatpush.msra.mxu0 0.0
    %1677 = vmatpush.msra.mxu0 %v1651
    %1678 = vmatpush.msra.mxu0 %v1649
    %1679 = vmatpush.msra.mxu0 %v1647
    %1680 = vmatmul.f32.gmra.mxu0 %v1656
    %v1681 = vpop.f32.mrf.mxu0
    %v1682 = vadd.f32 0.0, %v1681
    %1683 = vmatmul.f32.gmra.mxu0 %v1659
    %v1684 = vpop.f32.mrf.mxu0
    %v1685 = vadd.f32 0.0, %v1684
    %1686 = vmatmul.f32.gmra.mxu0 %v1662
    %v1687 = vpop.f32.mrf.mxu0
    %v1688 = vadd.f32 0.0, %v1687
    %1689 = vdwg.mxu0
    %s1690 = scalar_lea.vmem %s9, 24
    %v1691 = vld [vmem:[%s1690] sm:$0xff]
    %v1693 = vsel %vm469, %v1638, 0
    %v1696 = vsel %vm469, %v1641, 0
    %v1699 = vsel %vm469, %v1644, 0
    %v1702 = vsel %vm469, %v1682, 0
    %v1705 = vsel %vm469, %v1685, 0
    %v1708 = vsel %vm469, %v1688, 0
    %1710 = vmatpush.msra.mxu0 0.0
    %1711 = vmatpush.msra.mxu0 0.0
    %1712 = vmatpush.msra.mxu0 0.0
    %1713 = vmatpush.msra.mxu0 0.0
    %1714 = vmatpush.msra.mxu0 0.0
    %1715 = vmatpush.msra.mxu0 0.0
    %1716 = vmatpush.msra.mxu0 0.0
    %1717 = vmatpush.msra.mxu0 0.0
    %1718 = vmatpush.msra.mxu0 0.0
    %1719 = vmatpush.msra.mxu0 0.0
    %1720 = vmatpush.msra.mxu0 0.0
    %1721 = vmatpush.msra.mxu0 0.0
    %1722 = vmatpush.msra.mxu0 0.0
    %1723 = vmatpush.msra.mxu0 0.0
    %1724 = vmatpush.msra.mxu0 0.0
    %1725 = vmatpush.msra.mxu0 %v1691
    %1726 = vmatmul.f32.gmra.mxu0 %v1693
    %v1727 = vpop.f32.mrf.mxu0
    %v1728 = vadd.f32 0.0, %v1727
    %1729 = vmatmul.f32.gmra.mxu0 %v1696
    %v1730 = vpop.f32.mrf.mxu0
    %v1731 = vadd.f32 0.0, %v1730
    %1732 = vmatmul.f32.gmra.mxu0 %v1699
    %v1733 = vpop.f32.mrf.mxu0
    %v1734 = vadd.f32 0.0, %v1733
    %1735 = vmatmul.f32.gmra.mxu0 %v1702
    %v1736 = vpop.f32.mrf.mxu0
    %v1737 = vadd.f32 0.0, %v1736
    %1738 = vmatmul.f32.gmra.mxu0 %v1705
    %v1739 = vpop.f32.mrf.mxu0
    %v1740 = vadd.f32 0.0, %v1739
    %1741 = vmatmul.f32.gmra.mxu0 %v1708
    %v1742 = vpop.f32.mrf.mxu0
    %v1743 = vadd.f32 0.0, %v1742
    %1744 = vdwg.mxu0
    %v1745 = vadd.f32 %v1418, %v1728
    %v1746 = vadd.f32 %v1419, %v1731
    %v1747 = vadd.f32 %v1420, %v1734
    %v1748 = vadd.f32 %v1421, %v1737
    %v1749 = vadd.f32 %v1422, %v1740
    %v1750 = vadd.f32 %v1423, %v1743
    %v1751 = vadd.f32 %v231, %v1745
    %v1752 = vadd.f32 %v232, %v1746
    %v1753 = vadd.f32 %v233, %v1747
    %v1754 = vadd.f32 %v234, %v1748
    %v1755 = vadd.f32 %v235, %v1749
    %v1756 = vadd.f32 %v236, %v1750
    %v1757 = vld [vmem:[%s10] sm:$0x1]
    %v1759 = vperm.slane %v1757, 0
    %v1761 = vadd.f32 %v1751, %v1759
    %v1762 = vadd.f32 %v1752, %v1759
    %v1763 = vadd.f32 %v1753, %v1759
    %v1764 = vadd.f32 %v1754, %v1759
    %v1765 = vadd.f32 %v1755, %v1759
    %v1766 = vadd.f32 %v1756, %v1759
    %v1767 = vld [vmem:[%s11] sm:$0x1]
    %v1768 = vld [vmem:[%s12] sm:$0x1]
    %v1769 = vsel %vm223, %v1761, 0.0
    %1770 = vadd.xlane.f32.xlu0 %v1769
    %v1771 = vpop.xlane.xlu0 %1770
    %v1772 = vsel %vm223, %v1762, 0.0
    %1773 = vadd.xlane.f32.xlu0 %v1772
    %v1774 = vpop.xlane.xlu0 %1773
    %v1775 = vsel %vm223, %v1763, 0.0
    %1776 = vadd.xlane.f32.xlu0 %v1775
    %v1777 = vpop.xlane.xlu0 %1776
    %v1778 = vsel %vm223, %v1764, 0.0
    %1779 = vadd.xlane.f32.xlu0 %v1778
    %v1780 = vpop.xlane.xlu0 %1779
    %v1781 = vsel %vm223, %v1765, 0.0
    %1782 = vadd.xlane.f32.xlu0 %v1781
    %v1783 = vpop.xlane.xlu0 %1782
    %v1784 = vsel %vm223, %v1766, 0.0
    %1785 = vadd.xlane.f32.xlu0 %v1784
    %v1786 = vpop.xlane.xlu0 %1785
    %v1787 = vmul.f32 %v1771, %v266
    %v1788 = vmul.f32 %v1774, %v266
    %v1789 = vmul.f32 %v1777, %v266
    %v1790 = vmul.f32 %v1780, %v266
    %v1791 = vmul.f32 %v1783, %v266
    %v1792 = vmul.f32 %v1786, %v266
    %v1793 = vsub.f32 %v1761, %v1787
    %v1794 = vsub.f32 %v1762, %v1788
    %v1795 = vsub.f32 %v1763, %v1789
    %v1796 = vsub.f32 %v1764, %v1790
    %v1797 = vsub.f32 %v1765, %v1791
    %v1798 = vsub.f32 %v1766, %v1792
    %v1799 = vmul.f32 %v1793, %v1793
    %v1800 = vmul.f32 %v1794, %v1794
    %v1801 = vmul.f32 %v1795, %v1795
    %v1802 = vmul.f32 %v1796, %v1796
    %v1803 = vmul.f32 %v1797, %v1797
    %v1804 = vmul.f32 %v1798, %v1798
    %v1805 = vsel %vm223, %v1799, 0.0
    %1806 = vadd.xlane.f32.xlu0 %v1805
    %v1807 = vpop.xlane.xlu0 %1806
    %v1808 = vsel %vm223, %v1800, 0.0
    %1809 = vadd.xlane.f32.xlu0 %v1808
    %v1810 = vpop.xlane.xlu0 %1809
    %v1811 = vsel %vm223, %v1801, 0.0
    %1812 = vadd.xlane.f32.xlu0 %v1811
    %v1813 = vpop.xlane.xlu0 %1812
    %v1814 = vsel %vm223, %v1802, 0.0
    %1815 = vadd.xlane.f32.xlu0 %v1814
    %v1816 = vpop.xlane.xlu0 %1815
    %v1817 = vsel %vm223, %v1803, 0.0
    %1818 = vadd.xlane.f32.xlu0 %v1817
    %v1819 = vpop.xlane.xlu0 %1818
    %v1820 = vsel %vm223, %v1804, 0.0
    %1821 = vadd.xlane.f32.xlu0 %v1820
    %v1822 = vpop.xlane.xlu0 %1821
    %v1823 = vmul.f32 %v1807, %v266
    %v1824 = vmul.f32 %v1810, %v266
    %v1825 = vmul.f32 %v1813, %v266
    %v1826 = vmul.f32 %v1816, %v266
    %v1827 = vmul.f32 %v1819, %v266
    %v1828 = vmul.f32 %v1822, %v266
    %v1829 = vadd.f32 %v1823, 1e-05
    %v1830 = vadd.f32 %v1824, 1e-05
    %v1831 = vadd.f32 %v1825, 1e-05
    %v1832 = vadd.f32 %v1826, 1e-05
    %v1833 = vadd.f32 %v1827, 1e-05
    %v1834 = vadd.f32 %v1828, 1e-05
    %v1835 = vrsqrt.pop %v1829
    %v1836 = vmul.f32 %v1835, %v1829
    %v1837 = vmul.f32 %v1836, %v1835
    %v1838 = vmul.f32 0.5, %v1837
    %v1839 = vsub.f32 1.5, %v1838
    %v1840 = vmul.f32 %v1835, %v1839
    %vm1841 = vweird.f32 %v1829
    %vm1842 = vweird.f32 %v1835
    %vm1843 = vmor %vm1841, %vm1842
    %v1844 = vsel %vm1843, %v1835, %v1840
    %v1845 = vrsqrt.pop %v1830
    %v1846 = vmul.f32 %v1845, %v1830
    %v1847 = vmul.f32 %v1846, %v1845
    %v1848 = vmul.f32 0.5, %v1847
    %v1849 = vsub.f32 1.5, %v1848
    %v1850 = vmul.f32 %v1845, %v1849
    %vm1851 = vweird.f32 %v1830
    %vm1852 = vweird.f32 %v1845
    %vm1853 = vmor %vm1851, %vm1852
    %v1854 = vsel %vm1853, %v1845, %v1850
    %v1855 = vrsqrt.pop %v1831
    %v1856 = vmul.f32 %v1855, %v1831
    %v1857 = vmul.f32 %v1856, %v1855
    %v1858 = vmul.f32 0.5, %v1857
    %v1859 = vsub.f32 1.5, %v1858
    %v1860 = vmul.f32 %v1855, %v1859
    %vm1861 = vweird.f32 %v1831
    %vm1862 = vweird.f32 %v1855
    %vm1863 = vmor %vm1861, %vm1862
    %v1864 = vsel %vm1863, %v1855, %v1860
    %v1865 = vrsqrt.pop %v1832
    %v1866 = vmul.f32 %v1865, %v1832
    %v1867 = vmul.f32 %v1866, %v1865
    %v1868 = vmul.f32 0.5, %v1867
    %v1869 = vsub.f32 1.5, %v1868
    %v1870 = vmul.f32 %v1865, %v1869
    %vm1871 = vweird.f32 %v1832
    %vm1872 = vweird.f32 %v1865
    %vm1873 = vmor %vm1871, %vm1872
    %v1874 = vsel %vm1873, %v1865, %v1870
    %v1875 = vrsqrt.pop %v1833
    %v1876 = vmul.f32 %v1875, %v1833
    %v1877 = vmul.f32 %v1876, %v1875
    %v1878 = vmul.f32 0.5, %v1877
    %v1879 = vsub.f32 1.5, %v1878
    %v1880 = vmul.f32 %v1875, %v1879
    %vm1881 = vweird.f32 %v1833
    %vm1882 = vweird.f32 %v1875
    %vm1883 = vmor %vm1881, %vm1882
    %v1884 = vsel %vm1883, %v1875, %v1880
    %v1885 = vrsqrt.pop %v1834
    %v1886 = vmul.f32 %v1885, %v1834
    %v1887 = vmul.f32 %v1886, %v1885
    %v1888 = vmul.f32 0.5, %v1887
    %v1889 = vsub.f32 1.5, %v1888
    %v1890 = vmul.f32 %v1885, %v1889
    %vm1891 = vweird.f32 %v1834
    %vm1892 = vweird.f32 %v1885
    %vm1893 = vmor %vm1891, %vm1892
    %v1894 = vsel %vm1893, %v1885, %v1890
    %v1895 = vmul.f32 %v1793, %v1844
    %v1896 = vmul.f32 %v1794, %v1854
    %v1897 = vmul.f32 %v1795, %v1864
    %v1898 = vmul.f32 %v1796, %v1874
    %v1899 = vmul.f32 %v1797, %v1884
    %v1900 = vmul.f32 %v1798, %v1894
    %v1902 = vperm.slane %v1767, 0
    %v1904 = vmul.f32 %v1895, %v1902
    %v1905 = vmul.f32 %v1896, %v1902
    %v1906 = vmul.f32 %v1897, %v1902
    %v1907 = vmul.f32 %v1898, %v1902
    %v1908 = vmul.f32 %v1899, %v1902
    %v1909 = vmul.f32 %v1900, %v1902
    %v1911 = vperm.slane %v1768, 0
    %v1913 = vadd.f32 %v1904, %v1911
    %v1914 = vadd.f32 %v1905, %v1911
    %v1915 = vadd.f32 %v1906, %v1911
    %v1916 = vadd.f32 %v1907, %v1911
    %v1917 = vadd.f32 %v1908, %v1911
    %v1918 = vadd.f32 %v1909, %v1911
    %v1919 = vld [vmem:[%s13] sm:$0xff]
    %v1920 = vld [vmem:[%s13 + $0x8] sm:$0xff]
    %v1921 = vld [vmem:[%s13 + $0x10] sm:$0xff]
    %v1922 = vld [vmem:[%s13 + $0x18] sm:$0xff]
    %v1923 = vld [vmem:[%s14] sm:$0x1]
    %v1925 = vperm.slane %v1923, 0
    %v1928 = vsel %vm223, %v1913, 0
    %v1931 = vsel %vm223, %v1914, 0
    %v1934 = vsel %vm223, %v1915, 0
    %v1937 = vsel %vm223, %v1916, 0
    %v1940 = vsel %vm223, %v1917, 0
    %v1943 = vsel %vm223, %v1918, 0
    %1945 = vmatpush.msra.mxu0 0.0
    %1946 = vmatpush.msra.mxu0 0.0
    %1947 = vmatpush.msra.mxu0 0.0
    %1948 = vmatpush.msra.mxu0 0.0
    %1949 = vmatpush.msra.mxu0 0.0
    %1950 = vmatpush.msra.mxu0 0.0
    %1951 = vmatpush.msra.mxu0 0.0
    %1952 = vmatpush.msra.mxu0 0.0
    %1953 = vmatpush.msra.mxu0 0.0
    %1954 = vmatpush.msra.mxu0 0.0
    %1955 = vmatpush.msra.mxu0 0.0
    %1956 = vmatpush.msra.mxu0 0.0
    %1957 = vmatpush.msra.mxu0 %v1922
    %1958 = vmatpush.msra.mxu0 %v1921
    %1959 = vmatpush.msra.mxu0 %v1920
    %1960 = vmatpush.msra.mxu0 %v1919
    %1961 = vmatmul.f32.gmra.mxu0 %v1928
    %v1962 = vpop.f32.mrf.mxu0
    %v1963 = vadd.f32 %v1925, %v1962
    %1964 = vmatmul.f32.gmra.mxu0 %v1931
    %v1965 = vpop.f32.mrf.mxu0
    %v1966 = vadd.f32 %v1925, %v1965
    %1967 = vmatmul.f32.gmra.mxu0 %v1934
    %v1968 = vpop.f32.mrf.mxu0
    %v1969 = vadd.f32 %v1925, %v1968
    %1970 = vmatmul.f32.gmra.mxu0 %v1937
    %v1971 = vpop.f32.mrf.mxu0
    %v1972 = vadd.f32 %v1925, %v1971
    %1973 = vmatmul.f32.gmra.mxu0 %v1940
    %v1974 = vpop.f32.mrf.mxu0
    %v1975 = vadd.f32 %v1925, %v1974
    %1976 = vmatmul.f32.gmra.mxu0 %v1943
    %v1977 = vpop.f32.mrf.mxu0
    %v1978 = vadd.f32 %v1925, %v1977
    %1979 = vdwg.mxu0
    %v1980 = vmul.f32 %v1963, %v1963
    %v1981 = vmul.f32 %v1966, %v1966
    %v1982 = vmul.f32 %v1969, %v1969
    %v1983 = vmul.f32 %v1972, %v1972
    %v1984 = vmul.f32 %v1975, %v1975
    %v1985 = vmul.f32 %v1978, %v1978
    %v1986 = vmul.f32 %v1963, %v1980
    %v1987 = vmul.f32 %v1966, %v1981
    %v1988 = vmul.f32 %v1969, %v1982
    %v1989 = vmul.f32 %v1972, %v1983
    %v1990 = vmul.f32 %v1975, %v1984
    %v1991 = vmul.f32 %v1978, %v1985
    %v1992 = vmul.f32 %v1986, 0.044715
    %v1993 = vmul.f32 %v1987, 0.044715
    %v1994 = vmul.f32 %v1988, 0.044715
    %v1995 = vmul.f32 %v1989, 0.044715
    %v1996 = vmul.f32 %v1990, 0.044715
    %v1997 = vmul.f32 %v1991, 0.044715
    %v1998 = vadd.f32 %v1963, %v1992
    %v1999 = vadd.f32 %v1966, %v1993
    %v2000 = vadd.f32 %v1969, %v1994
    %v2001 = vadd.f32 %v1972, %v1995
    %v2002 = vadd.f32 %v1975, %v1996
    %v2003 = vadd.f32 %v1978, %v1997
    %v2004 = vmul.f32 %v1998, 0.7978846
    %v2005 = vmul.f32 %v1999, 0.7978846
    %v2006 = vmul.f32 %v2000, 0.7978846
    %v2007 = vmul.f32 %v2001, 0.7978846
    %v2008 = vmul.f32 %v2002, 0.7978846
    %v2009 = vmul.f32 %v2003, 0.7978846
    %v2010 = vtanh.pop %v2004
    %v2011 = vtanh.pop %v2005
    %v2012 = vtanh.pop %v2006
    %v2013 = vtanh.pop %v2007
    %v2014 = vtanh.pop %v2008
    %v2015 = vtanh.pop %v2009
    %v2016 = vadd.f32 %v2010, 1.0
    %v2017 = vadd.f32 %v2011, 1.0
    %v2018 = vadd.f32 %v2012, 1.0
    %v2019 = vadd.f32 %v2013, 1.0
    %v2020 = vadd.f32 %v2014, 1.0
    %v2021 = vadd.f32 %v2015, 1.0
    %v2022 = vmul.f32 %v2016, 0.5
    %v2023 = vmul.f32 %v2017, 0.5
    %v2024 = vmul.f32 %v2018, 0.5
    %v2025 = vmul.f32 %v2019, 0.5
    %v2026 = vmul.f32 %v2020, 0.5
    %v2027 = vmul.f32 %v2021, 0.5
    %v2028 = vmul.f32 %v1963, %v2022
    %v2029 = vmul.f32 %v1966, %v2023
    %v2030 = vmul.f32 %v1969, %v2024
    %v2031 = vmul.f32 %v1972, %v2025
    %v2032 = vmul.f32 %v1975, %v2026
    %v2033 = vmul.f32 %v1978, %v2027
    %v2034 = vld [vmem:[%s15] sm:$0xff]
    %v2035 = vld [vmem:[%s15 + $0x8] sm:$0xff]
    %v2036 = vld [vmem:[%s15 + $0x10] sm:$0xff]
    %v2037 = vld [vmem:[%s15 + $0x18] sm:$0xff]
    %v2038 = vld [vmem:[%s15 + $0x20] sm:$0xff]
    %v2039 = vld [vmem:[%s15 + $0x28] sm:$0xff]
    %v2040 = vld [vmem:[%s15 + $0x30] sm:$0xff]
    %v2041 = vld [vmem:[%s15 + $0x38] sm:$0xff]
    %vm2042 = vcmask 523264
    %v2044 = vsel %vm2042, %v2028, 0
    %v2047 = vsel %vm2042, %v2029, 0
    %v2050 = vsel %vm2042, %v2030, 0
    %v2053 = vsel %vm2042, %v2031, 0
    %v2056 = vsel %vm2042, %v2032, 0
    %v2059 = vsel %vm2042, %v2033, 0
    %2061 = vmatpush.msra.mxu0 0.0
    %2062 = vmatpush.msra.mxu0 0.0
    %2063 = vmatpush.msra.mxu0 0.0
    %2064 = vmatpush.msra.mxu0 0.0
    %2065 = vmatpush.msra.mxu0 0.0
    %2066 = vmatpush.msra.mxu0 0.0
    %2067 = vmatpush.msra.mxu0 0.0
    %2068 = vmatpush.msra.mxu0 0.0
    %2069 = vmatpush.msra.mxu0 %v2041
    %2070 = vmatpush.msra.mxu0 %v2040
    %2071 = vmatpush.msra.mxu0 %v2039
    %2072 = vmatpush.msra.mxu0 %v2038
    %2073 = vmatpush.msra.mxu0 %v2037
    %2074 = vmatpush.msra.mxu0 %v2036
    %2075 = vmatpush.msra.mxu0 %v2035
    %2076 = vmatpush.msra.mxu0 %v2034
    %2077 = vmatmul.f32.gmra.mxu0 %v2044
    %v2078 = vpop.f32.mrf.mxu0
    %v2079 = vadd.f32 0.0, %v2078
    %2080 = vmatmul.f32.gmra.mxu0 %v2047
    %v2081 = vpop.f32.mrf.mxu0
    %v2082 = vadd.f32 0.0, %v2081
    %2083 = vmatmul.f32.gmra.mxu0 %v2050
    %v2084 = vpop.f32.mrf.mxu0
    %v2085 = vadd.f32 0.0, %v2084
    %2086 = vmatmul.f32.gmra.mxu0 %v2053
    %v2087 = vpop.f32.mrf.mxu0
    %v2088 = vadd.f32 0.0, %v2087
    %2089 = vmatmul.f32.gmra.mxu0 %v2056
    %v2090 = vpop.f32.mrf.mxu0
    %v2091 = vadd.f32 0.0, %v2090
    %2092 = vmatmul.f32.gmra.mxu0 %v2059
    %v2093 = vpop.f32.mrf.mxu0
    %v2094 = vadd.f32 0.0, %v2093
    %2095 = vdwg.mxu0
    %v2096 = vadd.f32 %v1761, %v2079
    %v2097 = vadd.f32 %v1762, %v2082
    %v2098 = vadd.f32 %v1763, %v2085
    %v2099 = vadd.f32 %v1764, %v2088
    %v2100 = vadd.f32 %v1765, %v2091
    %v2101 = vadd.f32 %v1766, %v2094
    %v2102 = vld [vmem:[#allocation9] sm:$0x1]
    %v2104 = vperm.slane %v2102, 0
    %v2106 = vadd.f32 %v2096, %v2104
    %v2107 = vadd.f32 %v2097, %v2104
    %v2108 = vadd.f32 %v2098, %v2104
    %v2109 = vadd.f32 %v2099, %v2104
    %v2110 = vadd.f32 %v2100, %v2104
    %v2111 = vadd.f32 %v2101, %v2104
    %s2112 = scalar_lea.vmem %s5, 1
    %v2113 = vld [vmem:[%s2112] sm:$0x1]
    %s2114 = scalar_lea.vmem %s6, 1
    %v2115 = vld [vmem:[%s2114] sm:$0x1]
    %v2116 = vsel %vm223, %v2106, 0.0
    %2117 = vadd.xlane.f32.xlu0 %v2116
    %v2118 = vpop.xlane.xlu0 %2117
    %v2119 = vsel %vm223, %v2107, 0.0
    %2120 = vadd.xlane.f32.xlu0 %v2119
    %v2121 = vpop.xlane.xlu0 %2120
    %v2122 = vsel %vm223, %v2108, 0.0
    %2123 = vadd.xlane.f32.xlu0 %v2122
    %v2124 = vpop.xlane.xlu0 %2123
    %v2125 = vsel %vm223, %v2109, 0.0
    %2126 = vadd.xlane.f32.xlu0 %v2125
    %v2127 = vpop.xlane.xlu0 %2126
    %v2128 = vsel %vm223, %v2110, 0.0
    %2129 = vadd.xlane.f32.xlu0 %v2128
    %v2130 = vpop.xlane.xlu0 %2129
    %v2131 = vsel %vm223, %v2111, 0.0
    %2132 = vadd.xlane.f32.xlu0 %v2131
    %v2133 = vpop.xlane.xlu0 %2132
    %v2134 = vmul.f32 %v2118, %v266
    %v2135 = vmul.f32 %v2121, %v266
    %v2136 = vmul.f32 %v2124, %v266
    %v2137 = vmul.f32 %v2127, %v266
    %v2138 = vmul.f32 %v2130, %v266
    %v2139 = vmul.f32 %v2133, %v266
    %v2140 = vsub.f32 %v2106, %v2134
    %v2141 = vsub.f32 %v2107, %v2135
    %v2142 = vsub.f32 %v2108, %v2136
    %v2143 = vsub.f32 %v2109, %v2137
    %v2144 = vsub.f32 %v2110, %v2138
    %v2145 = vsub.f32 %v2111, %v2139
    %v2146 = vmul.f32 %v2140, %v2140
    %v2147 = vmul.f32 %v2141, %v2141
    %v2148 = vmul.f32 %v2142, %v2142
    %v2149 = vmul.f32 %v2143, %v2143
    %v2150 = vmul.f32 %v2144, %v2144
    %v2151 = vmul.f32 %v2145, %v2145
    %v2152 = vsel %vm223, %v2146, 0.0
    %2153 = vadd.xlane.f32.xlu0 %v2152
    %v2154 = vpop.xlane.xlu0 %2153
    %v2155 = vsel %vm223, %v2147, 0.0
    %2156 = vadd.xlane.f32.xlu0 %v2155
    %v2157 = vpop.xlane.xlu0 %2156
    %v2158 = vsel %vm223, %v2148, 0.0
    %2159 = vadd.xlane.f32.xlu0 %v2158
    %v2160 = vpop.xlane.xlu0 %2159
    %v2161 = vsel %vm223, %v2149, 0.0
    %2162 = vadd.xlane.f32.xlu0 %v2161
    %v2163 = vpop.xlane.xlu0 %2162
    %v2164 = vsel %vm223, %v2150, 0.0
    %2165 = vadd.xlane.f32.xlu0 %v2164
    %v2166 = vpop.xlane.xlu0 %2165
    %v2167 = vsel %vm223, %v2151, 0.0
    %2168 = vadd.xlane.f32.xlu0 %v2167
    %v2169 = vpop.xlane.xlu0 %2168
    %v2170 = vmul.f32 %v2154, %v266
    %v2171 = vmul.f32 %v2157, %v266
    %v2172 = vmul.f32 %v2160, %v266
    %v2173 = vmul.f32 %v2163, %v266
    %v2174 = vmul.f32 %v2166, %v266
    %v2175 = vmul.f32 %v2169, %v266
    %v2176 = vadd.f32 %v2170, 1e-05
    %v2177 = vadd.f32 %v2171, 1e-05
    %v2178 = vadd.f32 %v2172, 1e-05
    %v2179 = vadd.f32 %v2173, 1e-05
    %v2180 = vadd.f32 %v2174, 1e-05
    %v2181 = vadd.f32 %v2175, 1e-05
    %v2182 = vrsqrt.pop %v2176
    %v2183 = vmul.f32 %v2182, %v2176
    %v2184 = vmul.f32 %v2183, %v2182
    %v2185 = vmul.f32 0.5, %v2184
    %v2186 = vsub.f32 1.5, %v2185
    %v2187 = vmul.f32 %v2182, %v2186
    %vm2188 = vweird.f32 %v2176
    %vm2189 = vweird.f32 %v2182
    %vm2190 = vmor %vm2188, %vm2189
    %v2191 = vsel %vm2190, %v2182, %v2187
    %v2192 = vrsqrt.pop %v2177
    %v2193 = vmul.f32 %v2192, %v2177
    %v2194 = vmul.f32 %v2193, %v2192
    %v2195 = vmul.f32 0.5, %v2194
    %v2196 = vsub.f32 1.5, %v2195
    %v2197 = vmul.f32 %v2192, %v2196
    %vm2198 = vweird.f32 %v2177
    %vm2199 = vweird.f32 %v2192
    %vm2200 = vmor %vm2198, %vm2199
    %v2201 = vsel %vm2200, %v2192, %v2197
    %v2202 = vrsqrt.pop %v2178
    %v2203 = vmul.f32 %v2202, %v2178
    %v2204 = vmul.f32 %v2203, %v2202
    %v2205 = vmul.f32 0.5, %v2204
    %v2206 = vsub.f32 1.5, %v2205
    %v2207 = vmul.f32 %v2202, %v2206
    %vm2208 = vweird.f32 %v2178
    %vm2209 = vweird.f32 %v2202
    %vm2210 = vmor %vm2208, %vm2209
    %v2211 = vsel %vm2210, %v2202, %v2207
    %v2212 = vrsqrt.pop %v2179
    %v2213 = vmul.f32 %v2212, %v2179
    %v2214 = vmul.f32 %v2213, %v2212
    %v2215 = vmul.f32 0.5, %v2214
    %v2216 = vsub.f32 1.5, %v2215
    %v2217 = vmul.f32 %v2212, %v2216
    %vm2218 = vweird.f32 %v2179
    %vm2219 = vweird.f32 %v2212
    %vm2220 = vmor %vm2218, %vm2219
    %v2221 = vsel %vm2220, %v2212, %v2217
    %v2222 = vrsqrt.pop %v2180
    %v2223 = vmul.f32 %v2222, %v2180
    %v2224 = vmul.f32 %v2223, %v2222
    %v2225 = vmul.f32 0.5, %v2224
    %v2226 = vsub.f32 1.5, %v2225
    %v2227 = vmul.f32 %v2222, %v2226
    %vm2228 = vweird.f32 %v2180
    %vm2229 = vweird.f32 %v2222
    %vm2230 = vmor %vm2228, %vm2229
    %v2231 = vsel %vm2230, %v2222, %v2227
    %v2232 = vrsqrt.pop %v2181
    %v2233 = vmul.f32 %v2232, %v2181
    %v2234 = vmul.f32 %v2233, %v2232
    %v2235 = vmul.f32 0.5, %v2234
    %v2236 = vsub.f32 1.5, %v2235
    %v2237 = vmul.f32 %v2232, %v2236
    %vm2238 = vweird.f32 %v2181
    %vm2239 = vweird.f32 %v2232
    %vm2240 = vmor %vm2238, %vm2239
    %v2241 = vsel %vm2240, %v2232, %v2237
    %v2242 = vmul.f32 %v2140, %v2191
    %v2243 = vmul.f32 %v2141, %v2201
    %v2244 = vmul.f32 %v2142, %v2211
    %v2245 = vmul.f32 %v2143, %v2221
    %v2246 = vmul.f32 %v2144, %v2231
    %v2247 = vmul.f32 %v2145, %v2241
    %v2249 = vperm.slane %v2113, 0
    %v2251 = vmul.f32 %v2242, %v2249
    %v2252 = vmul.f32 %v2243, %v2249
    %v2253 = vmul.f32 %v2244, %v2249
    %v2254 = vmul.f32 %v2245, %v2249
    %v2255 = vmul.f32 %v2246, %v2249
    %v2256 = vmul.f32 %v2247, %v2249
    %v2258 = vperm.slane %v2115, 0
    %v2260 = vadd.f32 %v2251, %v2258
    %v2261 = vadd.f32 %v2252, %v2258
    %v2262 = vadd.f32 %v2253, %v2258
    %v2263 = vadd.f32 %v2254, %v2258
    %v2264 = vadd.f32 %v2255, %v2258
    %v2265 = vadd.f32 %v2256, %v2258
    %s2266 = scalar_lea.vmem %s7, 32
    %v2267 = vld [vmem:[%s2266] sm:$0xff]
    %v2268 = vld [vmem:[%s2266 + $0x8] sm:$0xff]
    %v2269 = vld [vmem:[%s2266 + $0x10] sm:$0xff]
    %v2270 = vld [vmem:[%s2266 + $0x18] sm:$0xff]
    %s2271 = scalar_lea.vmem %s8, 1
    %v2272 = vld [vmem:[%s2271] sm:$0x1]
    %v2274 = vperm.slane %v2272, 0
    %v2277 = vsel %vm223, %v2260, 0
    %v2280 = vsel %vm223, %v2261, 0
    %v2283 = vsel %vm223, %v2262, 0
    %v2286 = vsel %vm223, %v2263, 0
    %v2289 = vsel %vm223, %v2264, 0
    %v2292 = vsel %vm223, %v2265, 0
    %2294 = vmatpush.msra.mxu0 0.0
    %2295 = vmatpush.msra.mxu0 0.0
    %2296 = vmatpush.msra.mxu0 0.0
    %2297 = vmatpush.msra.mxu0 0.0
    %2298 = vmatpush.msra.mxu0 0.0
    %2299 = vmatpush.msra.mxu0 0.0
    %2300 = vmatpush.msra.mxu0 0.0
    %2301 = vmatpush.msra.mxu0 0.0
    %2302 = vmatpush.msra.mxu0 0.0
    %2303 = vmatpush.msra.mxu0 0.0
    %2304 = vmatpush.msra.mxu0 0.0
    %2305 = vmatpush.msra.mxu0 0.0
    %2306 = vmatpush.msra.mxu0 %v2270
    %2307 = vmatpush.msra.mxu0 %v2269
    %2308 = vmatpush.msra.mxu0 %v2268
    %2309 = vmatpush.msra.mxu0 %v2267
    %2310 = vmatmul.f32.gmra.mxu0 %v2277
    %v2311 = vpop.f32.mrf.mxu0
    %v2312 = vadd.f32 %v2274, %v2311
    %2313 = vmatmul.f32.gmra.mxu0 %v2280
    %v2314 = vpop.f32.mrf.mxu0
    %v2315 = vadd.f32 %v2274, %v2314
    %2316 = vmatmul.f32.gmra.mxu0 %v2283
    %v2317 = vpop.f32.mrf.mxu0
    %v2318 = vadd.f32 %v2274, %v2317
    %2319 = vmatmul.f32.gmra.mxu0 %v2286
    %v2320 = vpop.f32.mrf.mxu0
    %v2321 = vadd.f32 %v2274, %v2320
    %2322 = vmatmul.f32.gmra.mxu0 %v2289
    %v2323 = vpop.f32.mrf.mxu0
    %v2324 = vadd.f32 %v2274, %v2323
    %2325 = vmatmul.f32.gmra.mxu0 %v2292
    %v2326 = vpop.f32.mrf.mxu0
    %v2327 = vadd.f32 %v2274, %v2326
    %2328 = vdwg.mxu0
    %2332 = vrot.lane.b32.xlu0 %v2312, 96
    %v2333 = vpop.permute.xlu0 %2332
    %2334 = vrot.lane.b32.xlu0 %v2315, 96
    %v2335 = vpop.permute.xlu0 %2334
    %2336 = vrot.lane.b32.xlu0 %v2318, 96
    %v2337 = vpop.permute.xlu0 %2336
    %v2338 = vsel %vm469, %v2312, 0
    %v2340 = vsel %vm469, %v2315, 0
    %v2342 = vsel %vm469, %v2318, 0
    %v2344 = vsel %vm469, %v2333, 0
    %v2346 = vsel %vm469, %v2335, 0
    %v2348 = vsel %vm469, %v2337, 0
    %2350 = vmatpush.xpose.msra.mxu0 0.0
    %2351 = vmatpush.xpose.msra.mxu0 0.0
    %2352 = vmatpush.xpose.msra.mxu0 0.0
    %2353 = vmatpush.xpose.msra.mxu0 0.0
    %2354 = vmatpush.xpose.msra.mxu0 0.0
    %2355 = vmatpush.xpose.msra.mxu0 0.0
    %2356 = vmatpush.xpose.msra.mxu0 0.0
    %2357 = vmatpush.xpose.msra.mxu0 0.0
    %2358 = vmatpush.xpose.msra.mxu0 0.0
    %2359 = vmatpush.xpose.msra.mxu0 0.0
    %2360 = vmatpush.xpose.msra.mxu0 0.0
    %2361 = vmatpush.xpose.msra.mxu0 0.0
    %2362 = vmatpush.xpose.msra.mxu0 0.0
    %2363 = vmatpush.xpose.msra.mxu0 %v2348
    %2364 = vmatpush.xpose.msra.mxu0 %v2346
    %2365 = vmatpush.xpose.msra.mxu0 %v2344
    %2366 = vmatmul.f32.gmra.mxu0 %v2338
    %v2367 = vpop.f32.mrf.mxu0
    %v2368 = vadd.f32 0.0, %v2367
    %2369 = vmatmul.f32.gmra.mxu0 %v2340
    %v2370 = vpop.f32.mrf.mxu0
    %v2371 = vadd.f32 0.0, %v2370
    %2372 = vmatmul.f32.gmra.mxu0 %v2342
    %v2373 = vpop.f32.mrf.mxu0
    %v2374 = vadd.f32 0.0, %v2373
    %2375 = vdwg.mxu0
    %2379 = vrot.lane.b32.xlu0 %v2321, 96
    %v2380 = vpop.permute.xlu0 %2379
    %2381 = vrot.lane.b32.xlu0 %v2324, 96
    %v2382 = vpop.permute.xlu0 %2381
    %2383 = vrot.lane.b32.xlu0 %v2327, 96
    %v2384 = vpop.permute.xlu0 %2383
    %v2385 = vsel %vm469, %v2321, 0
    %v2387 = vsel %vm469, %v2324, 0
    %v2389 = vsel %vm469, %v2327, 0
    %v2391 = vsel %vm469, %v2380, 0
    %v2393 = vsel %vm469, %v2382, 0
    %v2395 = vsel %vm469, %v2384, 0
    %2397 = vmatpush.xpose.msra.mxu0 0.0
    %2398 = vmatpush.xpose.msra.mxu0 0.0
    %2399 = vmatpush.xpose.msra.mxu0 0.0
    %2400 = vmatpush.xpose.msra.mxu0 0.0
    %2401 = vmatpush.xpose.msra.mxu0 0.0
    %2402 = vmatpush.xpose.msra.mxu0 0.0
    %2403 = vmatpush.xpose.msra.mxu0 0.0
    %2404 = vmatpush.xpose.msra.mxu0 0.0
    %2405 = vmatpush.xpose.msra.mxu0 0.0
    %2406 = vmatpush.xpose.msra.mxu0 0.0
    %2407 = vmatpush.xpose.msra.mxu0 0.0
    %2408 = vmatpush.xpose.msra.mxu0 0.0
    %2409 = vmatpush.xpose.msra.mxu0 0.0
    %2410 = vmatpush.xpose.msra.mxu0 %v2395
    %2411 = vmatpush.xpose.msra.mxu0 %v2393
    %2412 = vmatpush.xpose.msra.mxu0 %v2391
    %2413 = vmatmul.f32.gmra.mxu0 %v2385
    %v2414 = vpop.f32.mrf.mxu0
    %v2415 = vadd.f32 0.0, %v2414
    %2416 = vmatmul.f32.gmra.mxu0 %v2387
    %v2417 = vpop.f32.mrf.mxu0
    %v2418 = vadd.f32 0.0, %v2417
    %2419 = vmatmul.f32.gmra.mxu0 %v2389
    %v2420 = vpop.f32.mrf.mxu0
    %v2421 = vadd.f32 0.0, %v2420
    %2422 = vdwg.mxu0
    %v2423 = vmul.f32 %v2368, 0.35355338
    %v2424 = vmul.f32 %v2371, 0.35355338
    %v2425 = vmul.f32 %v2374, 0.35355338
    %v2426 = vmul.f32 %v2415, 0.35355338
    %v2427 = vmul.f32 %v2418, 0.35355338
    %v2428 = vmul.f32 %v2421, 0.35355338
    %v2429 = vsel %vm239, %v2423, -1e+30
    %v2430 = vsel %vm239, %v2424, -1e+30
    %v2431 = vsel %vm239, %v2425, -1e+30
    %v2432 = vsel %vm239, %v2426, -1e+30
    %v2433 = vsel %vm239, %v2427, -1e+30
    %v2434 = vsel %vm239, %v2428, -1e+30
    %v2435 = vsel %vm567, %v2429, -inf
    %2436 = vmax.xlane.f32.xlu0 %v2435
    %v2437 = vpop.xlane.xlu0 %2436
    %v2438 = vsel %vm567, %v2430, -inf
    %2439 = vmax.xlane.f32.xlu0 %v2438
    %v2440 = vpop.xlane.xlu0 %2439
    %v2441 = vsel %vm567, %v2431, -inf
    %2442 = vmax.xlane.f32.xlu0 %v2441
    %v2443 = vpop.xlane.xlu0 %2442
    %v2444 = vsel %vm567, %v2432, -inf
    %2445 = vmax.xlane.f32.xlu0 %v2444
    %v2446 = vpop.xlane.xlu0 %2445
    %v2447 = vsel %vm567, %v2433, -inf
    %2448 = vmax.xlane.f32.xlu0 %v2447
    %v2449 = vpop.xlane.xlu0 %2448
    %v2450 = vsel %vm567, %v2434, -inf
    %2451 = vmax.xlane.f32.xlu0 %v2450
    %v2452 = vpop.xlane.xlu0 %2451
    %v2453 = vsub.f32 %v2429, %v2437
    %v2454 = vsub.f32 %v2430, %v2440
    %v2455 = vsub.f32 %v2431, %v2443
    %v2456 = vsub.f32 %v2432, %v2446
    %v2457 = vsub.f32 %v2433, %v2449
    %v2458 = vsub.f32 %v2434, %v2452
    %v2459 = vmul.f32 %v2453, 1.442695
    %v2460 = vpow.pop %v2459
    %v2461 = vmul.f32 %v2454, 1.442695
    %v2462 = vpow.pop %v2461
    %v2463 = vmul.f32 %v2455, 1.442695
    %v2464 = vpow.pop %v2463
    %v2465 = vmul.f32 %v2456, 1.442695
    %v2466 = vpow.pop %v2465
    %v2467 = vmul.f32 %v2457, 1.442695
    %v2468 = vpow.pop %v2467
    %v2469 = vmul.f32 %v2458, 1.442695
    %v2470 = vpow.pop %v2469
    %v2471 = vsel %vm567, %v2460, 0.0
    %2472 = vadd.xlane.f32.xlu0 %v2471
    %v2473 = vpop.xlane.xlu0 %2472
    %v2474 = vsel %vm567, %v2462, 0.0
    %2475 = vadd.xlane.f32.xlu0 %v2474
    %v2476 = vpop.xlane.xlu0 %2475
    %v2477 = vsel %vm567, %v2464, 0.0
    %2478 = vadd.xlane.f32.xlu0 %v2477
    %v2479 = vpop.xlane.xlu0 %2478
    %v2480 = vsel %vm567, %v2466, 0.0
    %2481 = vadd.xlane.f32.xlu0 %v2480
    %v2482 = vpop.xlane.xlu0 %2481
    %v2483 = vsel %vm567, %v2468, 0.0
    %2484 = vadd.xlane.f32.xlu0 %v2483
    %v2485 = vpop.xlane.xlu0 %2484
    %v2486 = vsel %vm567, %v2470, 0.0
    %2487 = vadd.xlane.f32.xlu0 %v2486
    %v2488 = vpop.xlane.xlu0 %2487
    %v2489 = vrcp.pop %v2473
    %v2490 = vrcp.pop %v2476
    %v2491 = vrcp.pop %v2479
    %v2492 = vrcp.pop %v2482
    %v2493 = vrcp.pop %v2485
    %v2494 = vrcp.pop %v2488
    %v2495 = vmul.f32 %v2460, %v2489
    %v2496 = vmul.f32 %v2462, %v2490
    %v2497 = vmul.f32 %v2464, %v2491
    %v2498 = vmul.f32 %v2466, %v2492
    %v2499 = vmul.f32 %v2468, %v2493
    %v2500 = vmul.f32 %v2470, %v2494
    %2501 = vrot.lane.b32.xlu0 %v2312, 64
    %v2502 = vpop.permute.xlu0 %2501
    %2503 = vrot.lane.b32.xlu0 %v2315, 64
    %v2504 = vpop.permute.xlu0 %2503
    %2505 = vrot.lane.b32.xlu0 %v2318, 64
    %v2506 = vpop.permute.xlu0 %2505
    %v2511 = vsel %vm567, %v2495, 0
    %v2514 = vsel %vm567, %v2496, 0
    %v2517 = vsel %vm567, %v2497, 0
    %2519 = vmatpush.msra.mxu0 0.0
    %2520 = vmatpush.msra.mxu0 0.0
    %2521 = vmatpush.msra.mxu0 0.0
    %2522 = vmatpush.msra.mxu0 0.0
    %2523 = vmatpush.msra.mxu0 0.0
    %2524 = vmatpush.msra.mxu0 0.0
    %2525 = vmatpush.msra.mxu0 0.0
    %2526 = vmatpush.msra.mxu0 0.0
    %2527 = vmatpush.msra.mxu0 0.0
    %2528 = vmatpush.msra.mxu0 0.0
    %2529 = vmatpush.msra.mxu0 0.0
    %2530 = vmatpush.msra.mxu0 0.0
    %2531 = vmatpush.msra.mxu0 0.0
    %2532 = vmatpush.msra.mxu0 %v2506
    %2533 = vmatpush.msra.mxu0 %v2504
    %2534 = vmatpush.msra.mxu0 %v2502
    %2535 = vmatmul.f32.gmra.mxu0 %v2511
    %v2536 = vpop.f32.mrf.mxu0
    %v2537 = vadd.f32 0.0, %v2536
    %2538 = vmatmul.f32.gmra.mxu0 %v2514
    %v2539 = vpop.f32.mrf.mxu0
    %v2540 = vadd.f32 0.0, %v2539
    %2541 = vmatmul.f32.gmra.mxu0 %v2517
    %v2542 = vpop.f32.mrf.mxu0
    %v2543 = vadd.f32 0.0, %v2542
    %2544 = vdwg.mxu0
    %2545 = vrot.lane.b32.xlu0 %v2321, 64
    %v2546 = vpop.permute.xlu0 %2545
    %2547 = vrot.lane.b32.xlu0 %v2324, 64
    %v2548 = vpop.permute.xlu0 %2547
    %2549 = vrot.lane.b32.xlu0 %v2327, 64
    %v2550 = vpop.permute.xlu0 %2549
    %v2555 = vsel %vm567, %v2498, 0
    %v2558 = vsel %vm567, %v2499, 0
    %v2561 = vsel %vm567, %v2500, 0
    %2563 = vmatpush.msra.mxu0 0.0
    %2564 = vmatpush.msra.mxu0 0.0
    %2565 = vmatpush.msra.mxu0 0.0
    %2566 = vmatpush.msra.mxu0 0.0
    %2567 = vmatpush.msra.mxu0 0.0
    %2568 = vmatpush.msra.mxu0 0.0
    %2569 = vmatpush.msra.mxu0 0.0
    %2570 = vmatpush.msra.mxu0 0.0
    %2571 = vmatpush.msra.mxu0 0.0
    %2572 = vmatpush.msra.mxu0 0.0
    %2573 = vmatpush.msra.mxu0 0.0
    %2574 = vmatpush.msra.mxu0 0.0
    %2575 = vmatpush.msra.mxu0 0.0
    %2576 = vmatpush.msra.mxu0 %v2550
    %2577 = vmatpush.msra.mxu0 %v2548
    %2578 = vmatpush.msra.mxu0 %v2546
    %2579 = vmatmul.f32.gmra.mxu0 %v2555
    %v2580 = vpop.f32.mrf.mxu0
    %v2581 = vadd.f32 0.0, %v2580
    %2582 = vmatmul.f32.gmra.mxu0 %v2558
    %v2583 = vpop.f32.mrf.mxu0
    %v2584 = vadd.f32 0.0, %v2583
    %2585 = vmatmul.f32.gmra.mxu0 %v2561
    %v2586 = vpop.f32.mrf.mxu0
    %v2587 = vadd.f32 0.0, %v2586
    %2588 = vdwg.mxu0
    %s2589 = scalar_lea.vmem %s9, 32
    %v2590 = vld [vmem:[%s2589] sm:$0xff]
    %2591 = vrot.lane.b32.xlu0 %v2312, 120
    %v2592 = vpop.permute.xlu0 %2591
    %2593 = vrot.lane.b32.xlu0 %v2315, 120
    %v2594 = vpop.permute.xlu0 %2593
    %2595 = vrot.lane.b32.xlu0 %v2318, 120
    %v2596 = vpop.permute.xlu0 %2595
    %2597 = vrot.lane.b32.xlu0 %v2312, 88
    %v2598 = vpop.permute.xlu0 %2597
    %2599 = vrot.lane.b32.xlu0 %v2315, 88
    %v2600 = vpop.permute.xlu0 %2599
    %2601 = vrot.lane.b32.xlu0 %v2318, 88
    %v2602 = vpop.permute.xlu0 %2601
    %v2603 = vsel %vm469, %v2592, 0
    %v2605 = vsel %vm469, %v2594, 0
    %v2607 = vsel %vm469, %v2596, 0
    %v2609 = vsel %vm469, %v2598, 0
    %v2611 = vsel %vm469, %v2600, 0
    %v2613 = vsel %vm469, %v2602, 0
    %2615 = vmatpush.xpose.msra.mxu0 0.0
    %2616 = vmatpush.xpose.msra.mxu0 0.0
    %2617 = vmatpush.xpose.msra.mxu0 0.0
    %2618 = vmatpush.xpose.msra.mxu0 0.0
    %2619 = vmatpush.xpose.msra.mxu0 0.0
    %2620 = vmatpush.xpose.msra.mxu0 0.0
    %2621 = vmatpush.xpose.msra.mxu0 0.0
    %2622 = vmatpush.xpose.msra.mxu0 0.0
    %2623 = vmatpush.xpose.msra.mxu0 0.0
    %2624 = vmatpush.xpose.msra.mxu0 0.0
    %2625 = vmatpush.xpose.msra.mxu0 0.0
    %2626 = vmatpush.xpose.msra.mxu0 0.0
    %2627 = vmatpush.xpose.msra.mxu0 0.0
    %2628 = vmatpush.xpose.msra.mxu0 %v2613
    %2629 = vmatpush.xpose.msra.mxu0 %v2611
    %2630 = vmatpush.xpose.msra.mxu0 %v2609
    %2631 = vmatmul.f32.gmra.mxu0 %v2603
    %v2632 = vpop.f32.mrf.mxu0
    %v2633 = vadd.f32 0.0, %v2632
    %2634 = vmatmul.f32.gmra.mxu0 %v2605
    %v2635 = vpop.f32.mrf.mxu0
    %v2636 = vadd.f32 0.0, %v2635
    %2637 = vmatmul.f32.gmra.mxu0 %v2607
    %v2638 = vpop.f32.mrf.mxu0
    %v2639 = vadd.f32 0.0, %v2638
    %2640 = vdwg.mxu0
    %2641 = vrot.lane.b32.xlu0 %v2321, 120
    %v2642 = vpop.permute.xlu0 %2641
    %2643 = vrot.lane.b32.xlu0 %v2324, 120
    %v2644 = vpop.permute.xlu0 %2643
    %2645 = vrot.lane.b32.xlu0 %v2327, 120
    %v2646 = vpop.permute.xlu0 %2645
    %2647 = vrot.lane.b32.xlu0 %v2321, 88
    %v2648 = vpop.permute.xlu0 %2647
    %2649 = vrot.lane.b32.xlu0 %v2324, 88
    %v2650 = vpop.permute.xlu0 %2649
    %2651 = vrot.lane.b32.xlu0 %v2327, 88
    %v2652 = vpop.permute.xlu0 %2651
    %v2653 = vsel %vm469, %v2642, 0
    %v2655 = vsel %vm469, %v2644, 0
    %v2657 = vsel %vm469, %v2646, 0
    %v2659 = vsel %vm469, %v2648, 0
    %v2661 = vsel %vm469, %v2650, 0
    %v2663 = vsel %vm469, %v2652, 0
    %2665 = vmatpush.xpose.msra.mxu0 0.0
    %2666 = vmatpush.xpose.msra.mxu0 0.0
    %2667 = vmatpush.xpose.msra.mxu0 0.0
    %2668 = vmatpush.xpose.msra.mxu0 0.0
    %2669 = vmatpush.xpose.msra.mxu0 0.0
    %2670 = vmatpush.xpose.msra.mxu0 0.0
    %2671 = vmatpush.xpose.msra.mxu0 0.0
    %2672 = vmatpush.xpose.msra.mxu0 0.0
    %2673 = vmatpush.xpose.msra.mxu0 0.0
    %2674 = vmatpush.xpose.msra.mxu0 0.0
    %2675 = vmatpush.xpose.msra.mxu0 0.0
    %2676 = vmatpush.xpose.msra.mxu0 0.0
    %2677 = vmatpush.xpose.msra.mxu0 0.0
    %2678 = vmatpush.xpose.msra.mxu0 %v2663
    %2679 = vmatpush.xpose.msra.mxu0 %v2661
    %2680 = vmatpush.xpose.msra.mxu0 %v2659
    %2681 = vmatmul.f32.gmra.mxu0 %v2653
    %v2682 = vpop.f32.mrf.mxu0
    %v2683 = vadd.f32 0.0, %v2682
    %2684 = vmatmul.f32.gmra.mxu0 %v2655
    %v2685 = vpop.f32.mrf.mxu0
    %v2686 = vadd.f32 0.0, %v2685
    %2687 = vmatmul.f32.gmra.mxu0 %v2657
    %v2688 = vpop.f32.mrf.mxu0
    %v2689 = vadd.f32 0.0, %v2688
    %2690 = vdwg.mxu0
    %v2691 = vmul.f32 %v2633, 0.35355338
    %v2692 = vmul.f32 %v2636, 0.35355338
    %v2693 = vmul.f32 %v2639, 0.35355338
    %v2694 = vmul.f32 %v2683, 0.35355338
    %v2695 = vmul.f32 %v2686, 0.35355338
    %v2696 = vmul.f32 %v2689, 0.35355338
    %v2697 = vsel %vm239, %v2691, -1e+30
    %v2698 = vsel %vm239, %v2692, -1e+30
    %v2699 = vsel %vm239, %v2693, -1e+30
    %v2700 = vsel %vm239, %v2694, -1e+30
    %v2701 = vsel %vm239, %v2695, -1e+30
    %v2702 = vsel %vm239, %v2696, -1e+30
    %v2703 = vsel %vm567, %v2697, -inf
    %2704 = vmax.xlane.f32.xlu0 %v2703
    %v2705 = vpop.xlane.xlu0 %2704
    %v2706 = vsel %vm567, %v2698, -inf
    %2707 = vmax.xlane.f32.xlu0 %v2706
    %v2708 = vpop.xlane.xlu0 %2707
    %v2709 = vsel %vm567, %v2699, -inf
    %2710 = vmax.xlane.f32.xlu0 %v2709
    %v2711 = vpop.xlane.xlu0 %2710
    %v2712 = vsel %vm567, %v2700, -inf
    %2713 = vmax.xlane.f32.xlu0 %v2712
    %v2714 = vpop.xlane.xlu0 %2713
    %v2715 = vsel %vm567, %v2701, -inf
    %2716 = vmax.xlane.f32.xlu0 %v2715
    %v2717 = vpop.xlane.xlu0 %2716
    %v2718 = vsel %vm567, %v2702, -inf
    %2719 = vmax.xlane.f32.xlu0 %v2718
    %v2720 = vpop.xlane.xlu0 %2719
    %v2721 = vsub.f32 %v2697, %v2705
    %v2722 = vsub.f32 %v2698, %v2708
    %v2723 = vsub.f32 %v2699, %v2711
    %v2724 = vsub.f32 %v2700, %v2714
    %v2725 = vsub.f32 %v2701, %v2717
    %v2726 = vsub.f32 %v2702, %v2720
    %v2727 = vmul.f32 %v2721, 1.442695
    %v2728 = vpow.pop %v2727
    %v2729 = vmul.f32 %v2722, 1.442695
    %v2730 = vpow.pop %v2729
    %v2731 = vmul.f32 %v2723, 1.442695
    %v2732 = vpow.pop %v2731
    %v2733 = vmul.f32 %v2724, 1.442695
    %v2734 = vpow.pop %v2733
    %v2735 = vmul.f32 %v2725, 1.442695
    %v2736 = vpow.pop %v2735
    %v2737 = vmul.f32 %v2726, 1.442695
    %v2738 = vpow.pop %v2737
    %v2739 = vsel %vm567, %v2728, 0.0
    %2740 = vadd.xlane.f32.xlu0 %v2739
    %v2741 = vpop.xlane.xlu0 %2740
    %v2742 = vsel %vm567, %v2730, 0.0
    %2743 = vadd.xlane.f32.xlu0 %v2742
    %v2744 = vpop.xlane.xlu0 %2743
    %v2745 = vsel %vm567, %v2732, 0.0
    %2746 = vadd.xlane.f32.xlu0 %v2745
    %v2747 = vpop.xlane.xlu0 %2746
    %v2748 = vsel %vm567, %v2734, 0.0
    %2749 = vadd.xlane.f32.xlu0 %v2748
    %v2750 = vpop.xlane.xlu0 %2749
    %v2751 = vsel %vm567, %v2736, 0.0
    %2752 = vadd.xlane.f32.xlu0 %v2751
    %v2753 = vpop.xlane.xlu0 %2752
    %v2754 = vsel %vm567, %v2738, 0.0
    %2755 = vadd.xlane.f32.xlu0 %v2754
    %v2756 = vpop.xlane.xlu0 %2755
    %v2757 = vrcp.pop %v2741
    %v2758 = vrcp.pop %v2744
    %v2759 = vrcp.pop %v2747
    %v2760 = vrcp.pop %v2750
    %v2761 = vrcp.pop %v2753
    %v2762 = vrcp.pop %v2756
    %v2763 = vmul.f32 %v2728, %v2757
    %v2764 = vmul.f32 %v2730, %v2758
    %v2765 = vmul.f32 %v2732, %v2759
    %v2766 = vmul.f32 %v2734, %v2760
    %v2767 = vmul.f32 %v2736, %v2761
    %v2768 = vmul.f32 %v2738, %v2762
    %2769 = vrot.lane.b32.xlu0 %v2312, 56
    %v2770 = vpop.permute.xlu0 %2769
    %2771 = vrot.lane.b32.xlu0 %v2315, 56
    %v2772 = vpop.permute.xlu0 %2771
    %2773 = vrot.lane.b32.xlu0 %v2318, 56
    %v2774 = vpop.permute.xlu0 %2773
    %v2779 = vsel %vm567, %v2763, 0
    %v2782 = vsel %vm567, %v2764, 0
    %v2785 = vsel %vm567, %v2765, 0
    %2787 = vmatpush.msra.mxu0 0.0
    %2788 = vmatpush.msra.mxu0 0.0
    %2789 = vmatpush.msra.mxu0 0.0
    %2790 = vmatpush.msra.mxu0 0.0
    %2791 = vmatpush.msra.mxu0 0.0
    %2792 = vmatpush.msra.mxu0 0.0
    %2793 = vmatpush.msra.mxu0 0.0
    %2794 = vmatpush.msra.mxu0 0.0
    %2795 = vmatpush.msra.mxu0 0.0
    %2796 = vmatpush.msra.mxu0 0.0
    %2797 = vmatpush.msra.mxu0 0.0
    %2798 = vmatpush.msra.mxu0 0.0
    %2799 = vmatpush.msra.mxu0 0.0
    %2800 = vmatpush.msra.mxu0 %v2774
    %2801 = vmatpush.msra.mxu0 %v2772
    %2802 = vmatpush.msra.mxu0 %v2770
    %2803 = vmatmul.f32.gmra.mxu0 %v2779
    %v2804 = vpop.f32.mrf.mxu0
    %v2805 = vadd.f32 0.0, %v2804
    %2806 = vmatmul.f32.gmra.mxu0 %v2782
    %v2807 = vpop.f32.mrf.mxu0
    %v2808 = vadd.f32 0.0, %v2807
    %2809 = vmatmul.f32.gmra.mxu0 %v2785
    %v2810 = vpop.f32.mrf.mxu0
    %v2811 = vadd.f32 0.0, %v2810
    %2812 = vdwg.mxu0
    %2813 = vrot.lane.b32.xlu0 %v2321, 56
    %v2814 = vpop.permute.xlu0 %2813
    %2815 = vrot.lane.b32.xlu0 %v2324, 56
    %v2816 = vpop.permute.xlu0 %2815
    %2817 = vrot.lane.b32.xlu0 %v2327, 56
    %v2818 = vpop.permute.xlu0 %2817
    %v2823 = vsel %vm567, %v2766, 0
    %v2826 = vsel %vm567, %v2767, 0
    %v2829 = vsel %vm567, %v2768, 0
    %2831 = vmatpush.msra.mxu0 0.0
    %2832 = vmatpush.msra.mxu0 0.0
    %2833 = vmatpush.msra.mxu0 0.0
    %2834 = vmatpush.msra.mxu0 0.0
    %2835 = vmatpush.msra.mxu0 0.0
    %2836 = vmatpush.msra.mxu0 0.0
    %2837 = vmatpush.msra.mxu0 0.0
    %2838 = vmatpush.msra.mxu0 0.0
    %2839 = vmatpush.msra.mxu0 0.0
    %2840 = vmatpush.msra.mxu0 0.0
    %2841 = vmatpush.msra.mxu0 0.0
    %2842 = vmatpush.msra.mxu0 0.0
    %2843 = vmatpush.msra.mxu0 0.0
    %2844 = vmatpush.msra.mxu0 %v2818
    %2845 = vmatpush.msra.mxu0 %v2816
    %2846 = vmatpush.msra.mxu0 %v2814
    %2847 = vmatmul.f32.gmra.mxu0 %v2823
    %v2848 = vpop.f32.mrf.mxu0
    %v2849 = vadd.f32 0.0, %v2848
    %2850 = vmatmul.f32.gmra.mxu0 %v2826
    %v2851 = vpop.f32.mrf.mxu0
    %v2852 = vadd.f32 0.0, %v2851
    %2853 = vmatmul.f32.gmra.mxu0 %v2829
    %v2854 = vpop.f32.mrf.mxu0
    %v2855 = vadd.f32 0.0, %v2854
    %2856 = vdwg.mxu0
    %s2857 = scalar_lea.vmem %s9, 40
    %v2858 = vld [vmem:[%s2857] sm:$0xff]
    %v2860 = vsel %vm469, %v2805, 0
    %v2863 = vsel %vm469, %v2808, 0
    %v2866 = vsel %vm469, %v2811, 0
    %v2869 = vsel %vm469, %v2849, 0
    %v2872 = vsel %vm469, %v2852, 0
    %v2875 = vsel %vm469, %v2855, 0
    %2877 = vmatpush.msra.mxu0 0.0
    %2878 = vmatpush.msra.mxu0 0.0
    %2879 = vmatpush.msra.mxu0 0.0
    %2880 = vmatpush.msra.mxu0 0.0
    %2881 = vmatpush.msra.mxu0 0.0
    %2882 = vmatpush.msra.mxu0 0.0
    %2883 = vmatpush.msra.mxu0 0.0
    %2884 = vmatpush.msra.mxu0 0.0
    %2885 = vmatpush.msra.mxu0 0.0
    %2886 = vmatpush.msra.mxu0 0.0
    %2887 = vmatpush.msra.mxu0 0.0
    %2888 = vmatpush.msra.mxu0 0.0
    %2889 = vmatpush.msra.mxu0 0.0
    %2890 = vmatpush.msra.mxu0 0.0
    %2891 = vmatpush.msra.mxu0 0.0
    %2892 = vmatpush.msra.mxu0 %v2858
    %2893 = vmatmul.f32.gmra.mxu0 %v2860
    %v2894 = vpop.f32.mrf.mxu0
    %v2895 = vadd.f32 0.0, %v2894
    %2896 = vmatmul.f32.gmra.mxu0 %v2863
    %v2897 = vpop.f32.mrf.mxu0
    %v2898 = vadd.f32 0.0, %v2897
    %2899 = vmatmul.f32.gmra.mxu0 %v2866
    %v2900 = vpop.f32.mrf.mxu0
    %v2901 = vadd.f32 0.0, %v2900
    %2902 = vmatmul.f32.gmra.mxu0 %v2869
    %v2903 = vpop.f32.mrf.mxu0
    %v2904 = vadd.f32 0.0, %v2903
    %2905 = vmatmul.f32.gmra.mxu0 %v2872
    %v2906 = vpop.f32.mrf.mxu0
    %v2907 = vadd.f32 0.0, %v2906
    %2908 = vmatmul.f32.gmra.mxu0 %v2875
    %v2909 = vpop.f32.mrf.mxu0
    %v2910 = vadd.f32 0.0, %v2909
    %2911 = vdwg.mxu0
    %v2913 = vsel %vm469, %v2537, 0
    %v2916 = vsel %vm469, %v2540, 0
    %v2919 = vsel %vm469, %v2543, 0
    %v2922 = vsel %vm469, %v2581, 0
    %v2925 = vsel %vm469, %v2584, 0
    %v2928 = vsel %vm469, %v2587, 0
    %2930 = vmatpush.msra.mxu0 0.0
    %2931 = vmatpush.msra.mxu0 0.0
    %2932 = vmatpush.msra.mxu0 0.0
    %2933 = vmatpush.msra.mxu0 0.0
    %2934 = vmatpush.msra.mxu0 0.0
    %2935 = vmatpush.msra.mxu0 0.0
    %2936 = vmatpush.msra.mxu0 0.0
    %2937 = vmatpush.msra.mxu0 0.0
    %2938 = vmatpush.msra.mxu0 0.0
    %2939 = vmatpush.msra.mxu0 0.0
    %2940 = vmatpush.msra.mxu0 0.0
    %2941 = vmatpush.msra.mxu0 0.0
    %2942 = vmatpush.msra.mxu0 0.0
    %2943 = vmatpush.msra.mxu0 0.0
    %2944 = vmatpush.msra.mxu0 0.0
    %2945 = vmatpush.msra.mxu0 %v2590
    %2946 = vmatmul.f32.gmra.mxu0 %v2913
    %v2947 = vpop.f32.mrf.mxu0
    %v2948 = vadd.f32 %v2895, %v2947
    %2949 = vmatmul.f32.gmra.mxu0 %v2916
    %v2950 = vpop.f32.mrf.mxu0
    %v2951 = vadd.f32 %v2898, %v2950
    %2952 = vmatmul.f32.gmra.mxu0 %v2919
    %v2953 = vpop.f32.mrf.mxu0
    %v2954 = vadd.f32 %v2901, %v2953
    %2955 = vmatmul.f32.gmra.mxu0 %v2922
    %v2956 = vpop.f32.mrf.mxu0
    %v2957 = vadd.f32 %v2904, %v2956
    %2958 = vmatmul.f32.gmra.mxu0 %v2925
    %v2959 = vpop.f32.mrf.mxu0
    %v2960 = vadd.f32 %v2907, %v2959
    %2961 = vmatmul.f32.gmra.mxu0 %v2928
    %v2962 = vpop.f32.mrf.mxu0
    %v2963 = vadd.f32 %v2910, %v2962
    %2964 = vdwg.mxu0
    %2965 = vrot.lane.b32.xlu0 %v2312, 112
    %v2966 = vpop.permute.xlu0 %2965
    %2967 = vrot.lane.b32.xlu0 %v2315, 112
    %v2968 = vpop.permute.xlu0 %2967
    %2969 = vrot.lane.b32.xlu0 %v2318, 112
    %v2970 = vpop.permute.xlu0 %2969
    %2971 = vrot.lane.b32.xlu0 %v2312, 80
    %v2972 = vpop.permute.xlu0 %2971
    %2973 = vrot.lane.b32.xlu0 %v2315, 80
    %v2974 = vpop.permute.xlu0 %2973
    %2975 = vrot.lane.b32.xlu0 %v2318, 80
    %v2976 = vpop.permute.xlu0 %2975
    %v2977 = vsel %vm469, %v2966, 0
    %v2979 = vsel %vm469, %v2968, 0
    %v2981 = vsel %vm469, %v2970, 0
    %v2983 = vsel %vm469, %v2972, 0
    %v2985 = vsel %vm469, %v2974, 0
    %v2987 = vsel %vm469, %v2976, 0
    %2989 = vmatpush.xpose.msra.mxu0 0.0
    %2990 = vmatpush.xpose.msra.mxu0 0.0
    %2991 = vmatpush.xpose.msra.mxu0 0.0
    %2992 = vmatpush.xpose.msra.mxu0 0.0
    %2993 = vmatpush.xpose.msra.mxu0 0.0
    %2994 = vmatpush.xpose.msra.mxu0 0.0
    %2995 = vmatpush.xpose.msra.mxu0 0.0
    %2996 = vmatpush.xpose.msra.mxu0 0.0
    %2997 = vmatpush.xpose.msra.mxu0 0.0
    %2998 = vmatpush.xpose.msra.mxu0 0.0
    %2999 = vmatpush.xpose.msra.mxu0 0.0
    %3000 = vmatpush.xpose.msra.mxu0 0.0
    %3001 = vmatpush.xpose.msra.mxu0 0.0
    %3002 = vmatpush.xpose.msra.mxu0 %v2987
    %3003 = vmatpush.xpose.msra.mxu0 %v2985
    %3004 = vmatpush.xpose.msra.mxu0 %v2983
    %3005 = vmatmul.f32.gmra.mxu0 %v2977
    %v3006 = vpop.f32.mrf.mxu0
    %v3007 = vadd.f32 0.0, %v3006
    %3008 = vmatmul.f32.gmra.mxu0 %v2979
    %v3009 = vpop.f32.mrf.mxu0
    %v3010 = vadd.f32 0.0, %v3009
    %3011 = vmatmul.f32.gmra.mxu0 %v2981
    %v3012 = vpop.f32.mrf.mxu0
    %v3013 = vadd.f32 0.0, %v3012
    %3014 = vdwg.mxu0
    %3015 = vrot.lane.b32.xlu0 %v2321, 112
    %v3016 = vpop.permute.xlu0 %3015
    %3017 = vrot.lane.b32.xlu0 %v2324, 112
    %v3018 = vpop.permute.xlu0 %3017
    %3019 = vrot.lane.b32.xlu0 %v2327, 112
    %v3020 = vpop.permute.xlu0 %3019
    %3021 = vrot.lane.b32.xlu0 %v2321, 80
    %v3022 = vpop.permute.xlu0 %3021
    %3023 = vrot.lane.b32.xlu0 %v2324, 80
    %v3024 = vpop.permute.xlu0 %3023
    %3025 = vrot.lane.b32.xlu0 %v2327, 80
    %v3026 = vpop.permute.xlu0 %3025
    %v3027 = vsel %vm469, %v3016, 0
    %v3029 = vsel %vm469, %v3018, 0
    %v3031 = vsel %vm469, %v3020, 0
    %v3033 = vsel %vm469, %v3022, 0
    %v3035 = vsel %vm469, %v3024, 0
    %v3037 = vsel %vm469, %v3026, 0
    %3039 = vmatpush.xpose.msra.mxu0 0.0
    %3040 = vmatpush.xpose.msra.mxu0 0.0
    %3041 = vmatpush.xpose.msra.mxu0 0.0
    %3042 = vmatpush.xpose.msra.mxu0 0.0
    %3043 = vmatpush.xpose.msra.mxu0 0.0
    %3044 = vmatpush.xpose.msra.mxu0 0.0
    %3045 = vmatpush.xpose.msra.mxu0 0.0
    %3046 = vmatpush.xpose.msra.mxu0 0.0
    %3047 = vmatpush.xpose.msra.mxu0 0.0
    %3048 = vmatpush.xpose.msra.mxu0 0.0
    %3049 = vmatpush.xpose.msra.mxu0 0.0
    %3050 = vmatpush.xpose.msra.mxu0 0.0
    %3051 = vmatpush.xpose.msra.mxu0 0.0
    %3052 = vmatpush.xpose.msra.mxu0 %v3037
    %3053 = vmatpush.xpose.msra.mxu0 %v3035
    %3054 = vmatpush.xpose.msra.mxu0 %v3033
    %3055 = vmatmul.f32.gmra.mxu0 %v3027
    %v3056 = vpop.f32.mrf.mxu0
    %v3057 = vadd.f32 0.0, %v3056
    %3058 = vmatmul.f32.gmra.mxu0 %v3029
    %v3059 = vpop.f32.mrf.mxu0
    %v3060 = vadd.f32 0.0, %v3059
    %3061 = vmatmul.f32.gmra.mxu0 %v3031
    %v3062 = vpop.f32.mrf.mxu0
    %v3063 = vadd.f32 0.0, %v3062
    %3064 = vdwg.mxu0
    %v3065 = vmul.f32 %v3007, 0.35355338
    %v3066 = vmul.f32 %v3010, 0.35355338
    %v3067 = vmul.f32 %v3013, 0.35355338
    %v3068 = vmul.f32 %v3057, 0.35355338
    %v3069 = vmul.f32 %v3060, 0.35355338
    %v3070 = vmul.f32 %v3063, 0.35355338
    %v3071 = vsel %vm239, %v3065, -1e+30
    %v3072 = vsel %vm239, %v3066, -1e+30
    %v3073 = vsel %vm239, %v3067, -1e+30
    %v3074 = vsel %vm239, %v3068, -1e+30
    %v3075 = vsel %vm239, %v3069, -1e+30
    %v3076 = vsel %vm239, %v3070, -1e+30
    %v3077 = vsel %vm567, %v3071, -inf
    %3078 = vmax.xlane.f32.xlu0 %v3077
    %v3079 = vpop.xlane.xlu0 %3078
    %v3080 = vsel %vm567, %v3072, -inf
    %3081 = vmax.xlane.f32.xlu0 %v3080
    %v3082 = vpop.xlane.xlu0 %3081
    %v3083 = vsel %vm567, %v3073, -inf
    %3084 = vmax.xlane.f32.xlu0 %v3083
    %v3085 = vpop.xlane.xlu0 %3084
    %v3086 = vsel %vm567, %v3074, -inf
    %3087 = vmax.xlane.f32.xlu0 %v3086
    %v3088 = vpop.xlane.xlu0 %3087
    %v3089 = vsel %vm567, %v3075, -inf
    %3090 = vmax.xlane.f32.xlu0 %v3089
    %v3091 = vpop.xlane.xlu0 %3090
    %v3092 = vsel %vm567, %v3076, -inf
    %3093 = vmax.xlane.f32.xlu0 %v3092
    %v3094 = vpop.xlane.xlu0 %3093
    %v3095 = vsub.f32 %v3071, %v3079
    %v3096 = vsub.f32 %v3072, %v3082
    %v3097 = vsub.f32 %v3073, %v3085
    %v3098 = vsub.f32 %v3074, %v3088
    %v3099 = vsub.f32 %v3075, %v3091
    %v3100 = vsub.f32 %v3076, %v3094
    %v3101 = vmul.f32 %v3095, 1.442695
    %v3102 = vpow.pop %v3101
    %v3103 = vmul.f32 %v3096, 1.442695
    %v3104 = vpow.pop %v3103
    %v3105 = vmul.f32 %v3097, 1.442695
    %v3106 = vpow.pop %v3105
    %v3107 = vmul.f32 %v3098, 1.442695
    %v3108 = vpow.pop %v3107
    %v3109 = vmul.f32 %v3099, 1.442695
    %v3110 = vpow.pop %v3109
    %v3111 = vmul.f32 %v3100, 1.442695
    %v3112 = vpow.pop %v3111
    %v3113 = vsel %vm567, %v3102, 0.0
    %3114 = vadd.xlane.f32.xlu0 %v3113
    %v3115 = vpop.xlane.xlu0 %3114
    %v3116 = vsel %vm567, %v3104, 0.0
    %3117 = vadd.xlane.f32.xlu0 %v3116
    %v3118 = vpop.xlane.xlu0 %3117
    %v3119 = vsel %vm567, %v3106, 0.0
    %3120 = vadd.xlane.f32.xlu0 %v3119
    %v3121 = vpop.xlane.xlu0 %3120
    %v3122 = vsel %vm567, %v3108, 0.0
    %3123 = vadd.xlane.f32.xlu0 %v3122
    %v3124 = vpop.xlane.xlu0 %3123
    %v3125 = vsel %vm567, %v3110, 0.0
    %3126 = vadd.xlane.f32.xlu0 %v3125
    %v3127 = vpop.xlane.xlu0 %3126
    %v3128 = vsel %vm567, %v3112, 0.0
    %3129 = vadd.xlane.f32.xlu0 %v3128
    %v3130 = vpop.xlane.xlu0 %3129
    %v3131 = vrcp.pop %v3115
    %v3132 = vrcp.pop %v3118
    %v3133 = vrcp.pop %v3121
    %v3134 = vrcp.pop %v3124
    %v3135 = vrcp.pop %v3127
    %v3136 = vrcp.pop %v3130
    %v3137 = vmul.f32 %v3102, %v3131
    %v3138 = vmul.f32 %v3104, %v3132
    %v3139 = vmul.f32 %v3106, %v3133
    %v3140 = vmul.f32 %v3108, %v3134
    %v3141 = vmul.f32 %v3110, %v3135
    %v3142 = vmul.f32 %v3112, %v3136
    %3143 = vrot.lane.b32.xlu0 %v2312, 48
    %v3144 = vpop.permute.xlu0 %3143
    %3145 = vrot.lane.b32.xlu0 %v2315, 48
    %v3146 = vpop.permute.xlu0 %3145
    %3147 = vrot.lane.b32.xlu0 %v2318, 48
    %v3148 = vpop.permute.xlu0 %3147
    %v3153 = vsel %vm567, %v3137, 0
    %v3156 = vsel %vm567, %v3138, 0
    %v3159 = vsel %vm567, %v3139, 0
    %3161 = vmatpush.msra.mxu0 0.0
    %3162 = vmatpush.msra.mxu0 0.0
    %3163 = vmatpush.msra.mxu0 0.0
    %3164 = vmatpush.msra.mxu0 0.0
    %3165 = vmatpush.msra.mxu0 0.0
    %3166 = vmatpush.msra.mxu0 0.0
    %3167 = vmatpush.msra.mxu0 0.0
    %3168 = vmatpush.msra.mxu0 0.0
    %3169 = vmatpush.msra.mxu0 0.0
    %3170 = vmatpush.msra.mxu0 0.0
    %3171 = vmatpush.msra.mxu0 0.0
    %3172 = vmatpush.msra.mxu0 0.0
    %3173 = vmatpush.msra.mxu0 0.0
    %3174 = vmatpush.msra.mxu0 %v3148
    %3175 = vmatpush.msra.mxu0 %v3146
    %3176 = vmatpush.msra.mxu0 %v3144
    %3177 = vmatmul.f32.gmra.mxu0 %v3153
    %v3178 = vpop.f32.mrf.mxu0
    %v3179 = vadd.f32 0.0, %v3178
    %3180 = vmatmul.f32.gmra.mxu0 %v3156
    %v3181 = vpop.f32.mrf.mxu0
    %v3182 = vadd.f32 0.0, %v3181
    %3183 = vmatmul.f32.gmra.mxu0 %v3159
    %v3184 = vpop.f32.mrf.mxu0
    %v3185 = vadd.f32 0.0, %v3184
    %3186 = vdwg.mxu0
    %3187 = vrot.lane.b32.xlu0 %v2321, 48
    %v3188 = vpop.permute.xlu0 %3187
    %3189 = vrot.lane.b32.xlu0 %v2324, 48
    %v3190 = vpop.permute.xlu0 %3189
    %3191 = vrot.lane.b32.xlu0 %v2327, 48
    %v3192 = vpop.permute.xlu0 %3191
    %v3197 = vsel %vm567, %v3140, 0
    %v3200 = vsel %vm567, %v3141, 0
    %v3203 = vsel %vm567, %v3142, 0
    %3205 = vmatpush.msra.mxu0 0.0
    %3206 = vmatpush.msra.mxu0 0.0
    %3207 = vmatpush.msra.mxu0 0.0
    %3208 = vmatpush.msra.mxu0 0.0
    %3209 = vmatpush.msra.mxu0 0.0
    %3210 = vmatpush.msra.mxu0 0.0
    %3211 = vmatpush.msra.mxu0 0.0
    %3212 = vmatpush.msra.mxu0 0.0
    %3213 = vmatpush.msra.mxu0 0.0
    %3214 = vmatpush.msra.mxu0 0.0
    %3215 = vmatpush.msra.mxu0 0.0
    %3216 = vmatpush.msra.mxu0 0.0
    %3217 = vmatpush.msra.mxu0 0.0
    %3218 = vmatpush.msra.mxu0 %v3192
    %3219 = vmatpush.msra.mxu0 %v3190
    %3220 = vmatpush.msra.mxu0 %v3188
    %3221 = vmatmul.f32.gmra.mxu0 %v3197
    %v3222 = vpop.f32.mrf.mxu0
    %v3223 = vadd.f32 0.0, %v3222
    %3224 = vmatmul.f32.gmra.mxu0 %v3200
    %v3225 = vpop.f32.mrf.mxu0
    %v3226 = vadd.f32 0.0, %v3225
    %3227 = vmatmul.f32.gmra.mxu0 %v3203
    %v3228 = vpop.f32.mrf.mxu0
    %v3229 = vadd.f32 0.0, %v3228
    %3230 = vdwg.mxu0
    %s3231 = scalar_lea.vmem %s9, 48
    %v3232 = vld [vmem:[%s3231] sm:$0xff]
    %v3234 = vsel %vm469, %v3179, 0
    %v3237 = vsel %vm469, %v3182, 0
    %v3240 = vsel %vm469, %v3185, 0
    %v3243 = vsel %vm469, %v3223, 0
    %v3246 = vsel %vm469, %v3226, 0
    %v3249 = vsel %vm469, %v3229, 0
    %3251 = vmatpush.msra.mxu0 0.0
    %3252 = vmatpush.msra.mxu0 0.0
    %3253 = vmatpush.msra.mxu0 0.0
    %3254 = vmatpush.msra.mxu0 0.0
    %3255 = vmatpush.msra.mxu0 0.0
    %3256 = vmatpush.msra.mxu0 0.0
    %3257 = vmatpush.msra.mxu0 0.0
    %3258 = vmatpush.msra.mxu0 0.0
    %3259 = vmatpush.msra.mxu0 0.0
    %3260 = vmatpush.msra.mxu0 0.0
    %3261 = vmatpush.msra.mxu0 0.0
    %3262 = vmatpush.msra.mxu0 0.0
    %3263 = vmatpush.msra.mxu0 0.0
    %3264 = vmatpush.msra.mxu0 0.0
    %3265 = vmatpush.msra.mxu0 0.0
    %3266 = vmatpush.msra.mxu0 %v3232
    %3267 = vmatmul.f32.gmra.mxu0 %v3234
    %v3268 = vpop.f32.mrf.mxu0
    %v3269 = vadd.f32 0.0, %v3268
    %3270 = vmatmul.f32.gmra.mxu0 %v3237
    %v3271 = vpop.f32.mrf.mxu0
    %v3272 = vadd.f32 0.0, %v3271
    %3273 = vmatmul.f32.gmra.mxu0 %v3240
    %v3274 = vpop.f32.mrf.mxu0
    %v3275 = vadd.f32 0.0, %v3274
    %3276 = vmatmul.f32.gmra.mxu0 %v3243
    %v3277 = vpop.f32.mrf.mxu0
    %v3278 = vadd.f32 0.0, %v3277
    %3279 = vmatmul.f32.gmra.mxu0 %v3246
    %v3280 = vpop.f32.mrf.mxu0
    %v3281 = vadd.f32 0.0, %v3280
    %3282 = vmatmul.f32.gmra.mxu0 %v3249
    %v3283 = vpop.f32.mrf.mxu0
    %v3284 = vadd.f32 0.0, %v3283
    %3285 = vdwg.mxu0
    %v3286 = vadd.f32 %v2948, %v3269
    %v3287 = vadd.f32 %v2951, %v3272
    %v3288 = vadd.f32 %v2954, %v3275
    %v3289 = vadd.f32 %v2957, %v3278
    %v3290 = vadd.f32 %v2960, %v3281
    %v3291 = vadd.f32 %v2963, %v3284
    %3292 = vrot.lane.b32.xlu0 %v2312, 104
    %v3293 = vpop.permute.xlu0 %3292
    %3294 = vrot.lane.b32.xlu0 %v2315, 104
    %v3295 = vpop.permute.xlu0 %3294
    %3296 = vrot.lane.b32.xlu0 %v2318, 104
    %v3297 = vpop.permute.xlu0 %3296
    %3298 = vrot.lane.b32.xlu0 %v2312, 72
    %v3299 = vpop.permute.xlu0 %3298
    %3300 = vrot.lane.b32.xlu0 %v2315, 72
    %v3301 = vpop.permute.xlu0 %3300
    %3302 = vrot.lane.b32.xlu0 %v2318, 72
    %v3303 = vpop.permute.xlu0 %3302
    %v3304 = vsel %vm469, %v3293, 0
    %v3306 = vsel %vm469, %v3295, 0
    %v3308 = vsel %vm469, %v3297, 0
    %v3310 = vsel %vm469, %v3299, 0
    %v3312 = vsel %vm469, %v3301, 0
    %v3314 = vsel %vm469, %v3303, 0
    %3316 = vmatpush.xpose.msra.mxu0 0.0
    %3317 = vmatpush.xpose.msra.mxu0 0.0
    %3318 = vmatpush.xpose.msra.mxu0 0.0
    %3319 = vmatpush.xpose.msra.mxu0 0.0
    %3320 = vmatpush.xpose.msra.mxu0 0.0
    %3321 = vmatpush.xpose.msra.mxu0 0.0
    %3322 = vmatpush.xpose.msra.mxu0 0.0
    %3323 = vmatpush.xpose.msra.mxu0 0.0
    %3324 = vmatpush.xpose.msra.mxu0 0.0
    %3325 = vmatpush.xpose.msra.mxu0 0.0
    %3326 = vmatpush.xpose.msra.mxu0 0.0
    %3327 = vmatpush.xpose.msra.mxu0 0.0
    %3328 = vmatpush.xpose.msra.mxu0 0.0
    %3329 = vmatpush.xpose.msra.mxu0 %v3314
    %3330 = vmatpush.xpose.msra.mxu0 %v3312
    %3331 = vmatpush.xpose.msra.mxu0 %v3310
    %3332 = vmatmul.f32.gmra.mxu0 %v3304
    %v3333 = vpop.f32.mrf.mxu0
    %v3334 = vadd.f32 0.0, %v3333
    %3335 = vmatmul.f32.gmra.mxu0 %v3306
    %v3336 = vpop.f32.mrf.mxu0
    %v3337 = vadd.f32 0.0, %v3336
    %3338 = vmatmul.f32.gmra.mxu0 %v3308
    %v3339 = vpop.f32.mrf.mxu0
    %v3340 = vadd.f32 0.0, %v3339
    %3341 = vdwg.mxu0
    %3342 = vrot.lane.b32.xlu0 %v2321, 104
    %v3343 = vpop.permute.xlu0 %3342
    %3344 = vrot.lane.b32.xlu0 %v2324, 104
    %v3345 = vpop.permute.xlu0 %3344
    %3346 = vrot.lane.b32.xlu0 %v2327, 104
    %v3347 = vpop.permute.xlu0 %3346
    %3348 = vrot.lane.b32.xlu0 %v2321, 72
    %v3349 = vpop.permute.xlu0 %3348
    %3350 = vrot.lane.b32.xlu0 %v2324, 72
    %v3351 = vpop.permute.xlu0 %3350
    %3352 = vrot.lane.b32.xlu0 %v2327, 72
    %v3353 = vpop.permute.xlu0 %3352
    %v3354 = vsel %vm469, %v3343, 0
    %v3356 = vsel %vm469, %v3345, 0
    %v3358 = vsel %vm469, %v3347, 0
    %v3360 = vsel %vm469, %v3349, 0
    %v3362 = vsel %vm469, %v3351, 0
    %v3364 = vsel %vm469, %v3353, 0
    %3366 = vmatpush.xpose.msra.mxu0 0.0
    %3367 = vmatpush.xpose.msra.mxu0 0.0
    %3368 = vmatpush.xpose.msra.mxu0 0.0
    %3369 = vmatpush.xpose.msra.mxu0 0.0
    %3370 = vmatpush.xpose.msra.mxu0 0.0
    %3371 = vmatpush.xpose.msra.mxu0 0.0
    %3372 = vmatpush.xpose.msra.mxu0 0.0
    %3373 = vmatpush.xpose.msra.mxu0 0.0
    %3374 = vmatpush.xpose.msra.mxu0 0.0
    %3375 = vmatpush.xpose.msra.mxu0 0.0
    %3376 = vmatpush.xpose.msra.mxu0 0.0
    %3377 = vmatpush.xpose.msra.mxu0 0.0
    %3378 = vmatpush.xpose.msra.mxu0 0.0
    %3379 = vmatpush.xpose.msra.mxu0 %v3364
    %3380 = vmatpush.xpose.msra.mxu0 %v3362
    %3381 = vmatpush.xpose.msra.mxu0 %v3360
    %3382 = vmatmul.f32.gmra.mxu0 %v3354
    %v3383 = vpop.f32.mrf.mxu0
    %v3384 = vadd.f32 0.0, %v3383
    %3385 = vmatmul.f32.gmra.mxu0 %v3356
    %v3386 = vpop.f32.mrf.mxu0
    %v3387 = vadd.f32 0.0, %v3386
    %3388 = vmatmul.f32.gmra.mxu0 %v3358
    %v3389 = vpop.f32.mrf.mxu0
    %v3390 = vadd.f32 0.0, %v3389
    %3391 = vdwg.mxu0
    %v3392 = vmul.f32 %v3334, 0.35355338
    %v3393 = vmul.f32 %v3337, 0.35355338
    %v3394 = vmul.f32 %v3340, 0.35355338
    %v3395 = vmul.f32 %v3384, 0.35355338
    %v3396 = vmul.f32 %v3387, 0.35355338
    %v3397 = vmul.f32 %v3390, 0.35355338
    %v3398 = vsel %vm239, %v3392, -1e+30
    %v3399 = vsel %vm239, %v3393, -1e+30
    %v3400 = vsel %vm239, %v3394, -1e+30
    %v3401 = vsel %vm239, %v3395, -1e+30
    %v3402 = vsel %vm239, %v3396, -1e+30
    %v3403 = vsel %vm239, %v3397, -1e+30
    %v3404 = vsel %vm567, %v3398, -inf
    %3405 = vmax.xlane.f32.xlu0 %v3404
    %v3406 = vpop.xlane.xlu0 %3405
    %v3407 = vsel %vm567, %v3399, -inf
    %3408 = vmax.xlane.f32.xlu0 %v3407
    %v3409 = vpop.xlane.xlu0 %3408
    %v3410 = vsel %vm567, %v3400, -inf
    %3411 = vmax.xlane.f32.xlu0 %v3410
    %v3412 = vpop.xlane.xlu0 %3411
    %v3413 = vsel %vm567, %v3401, -inf
    %3414 = vmax.xlane.f32.xlu0 %v3413
    %v3415 = vpop.xlane.xlu0 %3414
    %v3416 = vsel %vm567, %v3402, -inf
    %3417 = vmax.xlane.f32.xlu0 %v3416
    %v3418 = vpop.xlane.xlu0 %3417
    %v3419 = vsel %vm567, %v3403, -inf
    %3420 = vmax.xlane.f32.xlu0 %v3419
    %v3421 = vpop.xlane.xlu0 %3420
    %v3422 = vsub.f32 %v3398, %v3406
    %v3423 = vsub.f32 %v3399, %v3409
    %v3424 = vsub.f32 %v3400, %v3412
    %v3425 = vsub.f32 %v3401, %v3415
    %v3426 = vsub.f32 %v3402, %v3418
    %v3427 = vsub.f32 %v3403, %v3421
    %v3428 = vmul.f32 %v3422, 1.442695
    %v3429 = vpow.pop %v3428
    %v3430 = vmul.f32 %v3423, 1.442695
    %v3431 = vpow.pop %v3430
    %v3432 = vmul.f32 %v3424, 1.442695
    %v3433 = vpow.pop %v3432
    %v3434 = vmul.f32 %v3425, 1.442695
    %v3435 = vpow.pop %v3434
    %v3436 = vmul.f32 %v3426, 1.442695
    %v3437 = vpow.pop %v3436
    %v3438 = vmul.f32 %v3427, 1.442695
    %v3439 = vpow.pop %v3438
    %v3440 = vsel %vm567, %v3429, 0.0
    %3441 = vadd.xlane.f32.xlu0 %v3440
    %v3442 = vpop.xlane.xlu0 %3441
    %v3443 = vsel %vm567, %v3431, 0.0
    %3444 = vadd.xlane.f32.xlu0 %v3443
    %v3445 = vpop.xlane.xlu0 %3444
    %v3446 = vsel %vm567, %v3433, 0.0
    %3447 = vadd.xlane.f32.xlu0 %v3446
    %v3448 = vpop.xlane.xlu0 %3447
    %v3449 = vsel %vm567, %v3435, 0.0
    %3450 = vadd.xlane.f32.xlu0 %v3449
    %v3451 = vpop.xlane.xlu0 %3450
    %v3452 = vsel %vm567, %v3437, 0.0
    %3453 = vadd.xlane.f32.xlu0 %v3452
    %v3454 = vpop.xlane.xlu0 %3453
    %v3455 = vsel %vm567, %v3439, 0.0
    %3456 = vadd.xlane.f32.xlu0 %v3455
    %v3457 = vpop.xlane.xlu0 %3456
    %v3458 = vrcp.pop %v3442
    %v3459 = vrcp.pop %v3445
    %v3460 = vrcp.pop %v3448
    %v3461 = vrcp.pop %v3451
    %v3462 = vrcp.pop %v3454
    %v3463 = vrcp.pop %v3457
    %v3464 = vmul.f32 %v3429, %v3458
    %v3465 = vmul.f32 %v3431, %v3459
    %v3466 = vmul.f32 %v3433, %v3460
    %v3467 = vmul.f32 %v3435, %v3461
    %v3468 = vmul.f32 %v3437, %v3462
    %v3469 = vmul.f32 %v3439, %v3463
    %3470 = vrot.lane.b32.xlu0 %v2312, 40
    %v3471 = vpop.permute.xlu0 %3470
    %3472 = vrot.lane.b32.xlu0 %v2315, 40
    %v3473 = vpop.permute.xlu0 %3472
    %3474 = vrot.lane.b32.xlu0 %v2318, 40
    %v3475 = vpop.permute.xlu0 %3474
    %v3480 = vsel %vm567, %v3464, 0
    %v3483 = vsel %vm567, %v3465, 0
    %v3486 = vsel %vm567, %v3466, 0
    %3488 = vmatpush.msra.mxu0 0.0
    %3489 = vmatpush.msra.mxu0 0.0
    %3490 = vmatpush.msra.mxu0 0.0
    %3491 = vmatpush.msra.mxu0 0.0
    %3492 = vmatpush.msra.mxu0 0.0
    %3493 = vmatpush.msra.mxu0 0.0
    %3494 = vmatpush.msra.mxu0 0.0
    %3495 = vmatpush.msra.mxu0 0.0
    %3496 = vmatpush.msra.mxu0 0.0
    %3497 = vmatpush.msra.mxu0 0.0
    %3498 = vmatpush.msra.mxu0 0.0
    %3499 = vmatpush.msra.mxu0 0.0
    %3500 = vmatpush.msra.mxu0 0.0
    %3501 = vmatpush.msra.mxu0 %v3475
    %3502 = vmatpush.msra.mxu0 %v3473
    %3503 = vmatpush.msra.mxu0 %v3471
    %3504 = vmatmul.f32.gmra.mxu0 %v3480
    %v3505 = vpop.f32.mrf.mxu0
    %v3506 = vadd.f32 0.0, %v3505
    %3507 = vmatmul.f32.gmra.mxu0 %v3483
    %v3508 = vpop.f32.mrf.mxu0
    %v3509 = vadd.f32 0.0, %v3508
    %3510 = vmatmul.f32.gmra.mxu0 %v3486
    %v3511 = vpop.f32.mrf.mxu0
    %v3512 = vadd.f32 0.0, %v3511
    %3513 = vdwg.mxu0
    %3514 = vrot.lane.b32.xlu0 %v2321, 40
    %v3515 = vpop.permute.xlu0 %3514
    %3516 = vrot.lane.b32.xlu0 %v2324, 40
    %v3517 = vpop.permute.xlu0 %3516
    %3518 = vrot.lane.b32.xlu0 %v2327, 40
    %v3519 = vpop.permute.xlu0 %3518
    %v3524 = vsel %vm567, %v3467, 0
    %v3527 = vsel %vm567, %v3468, 0
    %v3530 = vsel %vm567, %v3469, 0
    %3532 = vmatpush.msra.mxu0 0.0
    %3533 = vmatpush.msra.mxu0 0.0
    %3534 = vmatpush.msra.mxu0 0.0
    %3535 = vmatpush.msra.mxu0 0.0
    %3536 = vmatpush.msra.mxu0 0.0
    %3537 = vmatpush.msra.mxu0 0.0
    %3538 = vmatpush.msra.mxu0 0.0
    %3539 = vmatpush.msra.mxu0 0.0
    %3540 = vmatpush.msra.mxu0 0.0
    %3541 = vmatpush.msra.mxu0 0.0
    %3542 = vmatpush.msra.mxu0 0.0
    %3543 = vmatpush.msra.mxu0 0.0
    %3544 = vmatpush.msra.mxu0 0.0
    %3545 = vmatpush.msra.mxu0 %v3519
    %3546 = vmatpush.msra.mxu0 %v3517
    %3547 = vmatpush.msra.mxu0 %v3515
    %3548 = vmatmul.f32.gmra.mxu0 %v3524
    %v3549 = vpop.f32.mrf.mxu0
    %v3550 = vadd.f32 0.0, %v3549
    %3551 = vmatmul.f32.gmra.mxu0 %v3527
    %v3552 = vpop.f32.mrf.mxu0
    %v3553 = vadd.f32 0.0, %v3552
    %3554 = vmatmul.f32.gmra.mxu0 %v3530
    %v3555 = vpop.f32.mrf.mxu0
    %v3556 = vadd.f32 0.0, %v3555
    %3557 = vdwg.mxu0
    %s3558 = scalar_lea.vmem %s9, 56
    %v3559 = vld [vmem:[%s3558] sm:$0xff]
    %v3561 = vsel %vm469, %v3506, 0
    %v3564 = vsel %vm469, %v3509, 0
    %v3567 = vsel %vm469, %v3512, 0
    %v3570 = vsel %vm469, %v3550, 0
    %v3573 = vsel %vm469, %v3553, 0
    %v3576 = vsel %vm469, %v3556, 0
    %3578 = vmatpush.msra.mxu0 0.0
    %3579 = vmatpush.msra.mxu0 0.0
    %3580 = vmatpush.msra.mxu0 0.0
    %3581 = vmatpush.msra.mxu0 0.0
    %3582 = vmatpush.msra.mxu0 0.0
    %3583 = vmatpush.msra.mxu0 0.0
    %3584 = vmatpush.msra.mxu0 0.0
    %3585 = vmatpush.msra.mxu0 0.0
    %3586 = vmatpush.msra.mxu0 0.0
    %3587 = vmatpush.msra.mxu0 0.0
    %3588 = vmatpush.msra.mxu0 0.0
    %3589 = vmatpush.msra.mxu0 0.0
    %3590 = vmatpush.msra.mxu0 0.0
    %3591 = vmatpush.msra.mxu0 0.0
    %3592 = vmatpush.msra.mxu0 0.0
    %3593 = vmatpush.msra.mxu0 %v3559
    %3594 = vmatmul.f32.gmra.mxu0 %v3561
    %v3595 = vpop.f32.mrf.mxu0
    %v3596 = vadd.f32 0.0, %v3595
    %3597 = vmatmul.f32.gmra.mxu0 %v3564
    %v3598 = vpop.f32.mrf.mxu0
    %v3599 = vadd.f32 0.0, %v3598
    %3600 = vmatmul.f32.gmra.mxu0 %v3567
    %v3601 = vpop.f32.mrf.mxu0
    %v3602 = vadd.f32 0.0, %v3601
    %3603 = vmatmul.f32.gmra.mxu0 %v3570
    %v3604 = vpop.f32.mrf.mxu0
    %v3605 = vadd.f32 0.0, %v3604
    %3606 = vmatmul.f32.gmra.mxu0 %v3573
    %v3607 = vpop.f32.mrf.mxu0
    %v3608 = vadd.f32 0.0, %v3607
    %3609 = vmatmul.f32.gmra.mxu0 %v3576
    %v3610 = vpop.f32.mrf.mxu0
    %v3611 = vadd.f32 0.0, %v3610
    %3612 = vdwg.mxu0
    %v3613 = vadd.f32 %v3286, %v3596
    %v3614 = vadd.f32 %v3287, %v3599
    %v3615 = vadd.f32 %v3288, %v3602
    %v3616 = vadd.f32 %v3289, %v3605
    %v3617 = vadd.f32 %v3290, %v3608
    %v3618 = vadd.f32 %v3291, %v3611
    %v3619 = vadd.f32 %v2106, %v3613
    %v3620 = vadd.f32 %v2107, %v3614
    %v3621 = vadd.f32 %v2108, %v3615
    %v3622 = vadd.f32 %v2109, %v3616
    %v3623 = vadd.f32 %v2110, %v3617
    %v3624 = vadd.f32 %v2111, %v3618
    %s3625 = scalar_lea.vmem %s10, 1
    %v3626 = vld [vmem:[%s3625] sm:$0x1]
    %v3628 = vperm.slane %v3626, 0
    %v3630 = vadd.f32 %v3619, %v3628
    %v3631 = vadd.f32 %v3620, %v3628
    %v3632 = vadd.f32 %v3621, %v3628
    %v3633 = vadd.f32 %v3622, %v3628
    %v3634 = vadd.f32 %v3623, %v3628
    %v3635 = vadd.f32 %v3624, %v3628
    %s3636 = scalar_lea.vmem %s11, 1
    %v3637 = vld [vmem:[%s3636] sm:$0x1]
    %s3638 = scalar_lea.vmem %s12, 1
    %v3639 = vld [vmem:[%s3638] sm:$0x1]
    %v3640 = vsel %vm223, %v3630, 0.0
    %3641 = vadd.xlane.f32.xlu0 %v3640
    %v3642 = vpop.xlane.xlu0 %3641
    %v3643 = vsel %vm223, %v3631, 0.0
    %3644 = vadd.xlane.f32.xlu0 %v3643
    %v3645 = vpop.xlane.xlu0 %3644
    %v3646 = vsel %vm223, %v3632, 0.0
    %3647 = vadd.xlane.f32.xlu0 %v3646
    %v3648 = vpop.xlane.xlu0 %3647
    %v3649 = vsel %vm223, %v3633, 0.0
    %3650 = vadd.xlane.f32.xlu0 %v3649
    %v3651 = vpop.xlane.xlu0 %3650
    %v3652 = vsel %vm223, %v3634, 0.0
    %3653 = vadd.xlane.f32.xlu0 %v3652
    %v3654 = vpop.xlane.xlu0 %3653
    %v3655 = vsel %vm223, %v3635, 0.0
    %3656 = vadd.xlane.f32.xlu0 %v3655
    %v3657 = vpop.xlane.xlu0 %3656
    %v3658 = vmul.f32 %v3642, %v266
    %v3659 = vmul.f32 %v3645, %v266
    %v3660 = vmul.f32 %v3648, %v266
    %v3661 = vmul.f32 %v3651, %v266
    %v3662 = vmul.f32 %v3654, %v266
    %v3663 = vmul.f32 %v3657, %v266
    %v3664 = vsub.f32 %v3630, %v3658
    %v3665 = vsub.f32 %v3631, %v3659
    %v3666 = vsub.f32 %v3632, %v3660
    %v3667 = vsub.f32 %v3633, %v3661
    %v3668 = vsub.f32 %v3634, %v3662
    %v3669 = vsub.f32 %v3635, %v3663
    %v3670 = vmul.f32 %v3664, %v3664
    %v3671 = vmul.f32 %v3665, %v3665
    %v3672 = vmul.f32 %v3666, %v3666
    %v3673 = vmul.f32 %v3667, %v3667
    %v3674 = vmul.f32 %v3668, %v3668
    %v3675 = vmul.f32 %v3669, %v3669
    %v3676 = vsel %vm223, %v3670, 0.0
    %3677 = vadd.xlane.f32.xlu0 %v3676
    %v3678 = vpop.xlane.xlu0 %3677
    %v3679 = vsel %vm223, %v3671, 0.0
    %3680 = vadd.xlane.f32.xlu0 %v3679
    %v3681 = vpop.xlane.xlu0 %3680
    %v3682 = vsel %vm223, %v3672, 0.0
    %3683 = vadd.xlane.f32.xlu0 %v3682
    %v3684 = vpop.xlane.xlu0 %3683
    %v3685 = vsel %vm223, %v3673, 0.0
    %3686 = vadd.xlane.f32.xlu0 %v3685
    %v3687 = vpop.xlane.xlu0 %3686
    %v3688 = vsel %vm223, %v3674, 0.0
    %3689 = vadd.xlane.f32.xlu0 %v3688
    %v3690 = vpop.xlane.xlu0 %3689
    %v3691 = vsel %vm223, %v3675, 0.0
    %3692 = vadd.xlane.f32.xlu0 %v3691
    %v3693 = vpop.xlane.xlu0 %3692
    %v3694 = vmul.f32 %v3678, %v266
    %v3695 = vmul.f32 %v3681, %v266
    %v3696 = vmul.f32 %v3684, %v266
    %v3697 = vmul.f32 %v3687, %v266
    %v3698 = vmul.f32 %v3690, %v266
    %v3699 = vmul.f32 %v3693, %v266
    %v3700 = vadd.f32 %v3694, 1e-05
    %v3701 = vadd.f32 %v3695, 1e-05
    %v3702 = vadd.f32 %v3696, 1e-05
    %v3703 = vadd.f32 %v3697, 1e-05
    %v3704 = vadd.f32 %v3698, 1e-05
    %v3705 = vadd.f32 %v3699, 1e-05
    %v3706 = vrsqrt.pop %v3700
    %v3707 = vmul.f32 %v3706, %v3700
    %v3708 = vmul.f32 %v3707, %v3706
    %v3709 = vmul.f32 0.5, %v3708
    %v3710 = vsub.f32 1.5, %v3709
    %v3711 = vmul.f32 %v3706, %v3710
    %vm3712 = vweird.f32 %v3700
    %vm3713 = vweird.f32 %v3706
    %vm3714 = vmor %vm3712, %vm3713
    %v3715 = vsel %vm3714, %v3706, %v3711
    %v3716 = vrsqrt.pop %v3701
    %v3717 = vmul.f32 %v3716, %v3701
    %v3718 = vmul.f32 %v3717, %v3716
    %v3719 = vmul.f32 0.5, %v3718
    %v3720 = vsub.f32 1.5, %v3719
    %v3721 = vmul.f32 %v3716, %v3720
    %vm3722 = vweird.f32 %v3701
    %vm3723 = vweird.f32 %v3716
    %vm3724 = vmor %vm3722, %vm3723
    %v3725 = vsel %vm3724, %v3716, %v3721
    %v3726 = vrsqrt.pop %v3702
    %v3727 = vmul.f32 %v3726, %v3702
    %v3728 = vmul.f32 %v3727, %v3726
    %v3729 = vmul.f32 0.5, %v3728
    %v3730 = vsub.f32 1.5, %v3729
    %v3731 = vmul.f32 %v3726, %v3730
    %vm3732 = vweird.f32 %v3702
    %vm3733 = vweird.f32 %v3726
    %vm3734 = vmor %vm3732, %vm3733
    %v3735 = vsel %vm3734, %v3726, %v3731
    %v3736 = vrsqrt.pop %v3703
    %v3737 = vmul.f32 %v3736, %v3703
    %v3738 = vmul.f32 %v3737, %v3736
    %v3739 = vmul.f32 0.5, %v3738
    %v3740 = vsub.f32 1.5, %v3739
    %v3741 = vmul.f32 %v3736, %v3740
    %vm3742 = vweird.f32 %v3703
    %vm3743 = vweird.f32 %v3736
    %vm3744 = vmor %vm3742, %vm3743
    %v3745 = vsel %vm3744, %v3736, %v3741
    %v3746 = vrsqrt.pop %v3704
    %v3747 = vmul.f32 %v3746, %v3704
    %v3748 = vmul.f32 %v3747, %v3746
    %v3749 = vmul.f32 0.5, %v3748
    %v3750 = vsub.f32 1.5, %v3749
    %v3751 = vmul.f32 %v3746, %v3750
    %vm3752 = vweird.f32 %v3704
    %vm3753 = vweird.f32 %v3746
    %vm3754 = vmor %vm3752, %vm3753
    %v3755 = vsel %vm3754, %v3746, %v3751
    %v3756 = vrsqrt.pop %v3705
    %v3757 = vmul.f32 %v3756, %v3705
    %v3758 = vmul.f32 %v3757, %v3756
    %v3759 = vmul.f32 0.5, %v3758
    %v3760 = vsub.f32 1.5, %v3759
    %v3761 = vmul.f32 %v3756, %v3760
    %vm3762 = vweird.f32 %v3705
    %vm3763 = vweird.f32 %v3756
    %vm3764 = vmor %vm3762, %vm3763
    %v3765 = vsel %vm3764, %v3756, %v3761
    %v3766 = vmul.f32 %v3664, %v3715
    %v3767 = vmul.f32 %v3665, %v3725
    %v3768 = vmul.f32 %v3666, %v3735
    %v3769 = vmul.f32 %v3667, %v3745
    %v3770 = vmul.f32 %v3668, %v3755
    %v3771 = vmul.f32 %v3669, %v3765
    %v3773 = vperm.slane %v3637, 0
    %v3775 = vmul.f32 %v3766, %v3773
    %v3776 = vmul.f32 %v3767, %v3773
    %v3777 = vmul.f32 %v3768, %v3773
    %v3778 = vmul.f32 %v3769, %v3773
    %v3779 = vmul.f32 %v3770, %v3773
    %v3780 = vmul.f32 %v3771, %v3773
    %v3782 = vperm.slane %v3639, 0
    %v3784 = vadd.f32 %v3775, %v3782
    %v3785 = vadd.f32 %v3776, %v3782
    %v3786 = vadd.f32 %v3777, %v3782
    %v3787 = vadd.f32 %v3778, %v3782
    %v3788 = vadd.f32 %v3779, %v3782
    %v3789 = vadd.f32 %v3780, %v3782
    %s3790 = scalar_lea.vmem %s13, 32
    %v3791 = vld [vmem:[%s3790] sm:$0xff]
    %v3792 = vld [vmem:[%s3790 + $0x8] sm:$0xff]
    %v3793 = vld [vmem:[%s3790 + $0x10] sm:$0xff]
    %v3794 = vld [vmem:[%s3790 + $0x18] sm:$0xff]
    %s3795 = scalar_lea.vmem %s14, 1
    %v3796 = vld [vmem:[%s3795] sm:$0x1]
    %v3798 = vperm.slane %v3796, 0
    %v3801 = vsel %vm223, %v3784, 0
    %v3804 = vsel %vm223, %v3785, 0
    %v3807 = vsel %vm223, %v3786, 0
    %v3810 = vsel %vm223, %v3787, 0
    %v3813 = vsel %vm223, %v3788, 0
    %v3816 = vsel %vm223, %v3789, 0
    %3818 = vmatpush.msra.mxu0 0.0
    %3819 = vmatpush.msra.mxu0 0.0
    %3820 = vmatpush.msra.mxu0 0.0
    %3821 = vmatpush.msra.mxu0 0.0
    %3822 = vmatpush.msra.mxu0 0.0
    %3823 = vmatpush.msra.mxu0 0.0
    %3824 = vmatpush.msra.mxu0 0.0
    %3825 = vmatpush.msra.mxu0 0.0
    %3826 = vmatpush.msra.mxu0 0.0
    %3827 = vmatpush.msra.mxu0 0.0
    %3828 = vmatpush.msra.mxu0 0.0
    %3829 = vmatpush.msra.mxu0 0.0
    %3830 = vmatpush.msra.mxu0 %v3794
    %3831 = vmatpush.msra.mxu0 %v3793
    %3832 = vmatpush.msra.mxu0 %v3792
    %3833 = vmatpush.msra.mxu0 %v3791
    %3834 = vmatmul.f32.gmra.mxu0 %v3801
    %v3835 = vpop.f32.mrf.mxu0
    %v3836 = vadd.f32 %v3798, %v3835
    %3837 = vmatmul.f32.gmra.mxu0 %v3804
    %v3838 = vpop.f32.mrf.mxu0
    %v3839 = vadd.f32 %v3798, %v3838
    %3840 = vmatmul.f32.gmra.mxu0 %v3807
    %v3841 = vpop.f32.mrf.mxu0
    %v3842 = vadd.f32 %v3798, %v3841
    %3843 = vmatmul.f32.gmra.mxu0 %v3810
    %v3844 = vpop.f32.mrf.mxu0
    %v3845 = vadd.f32 %v3798, %v3844
    %3846 = vmatmul.f32.gmra.mxu0 %v3813
    %v3847 = vpop.f32.mrf.mxu0
    %v3848 = vadd.f32 %v3798, %v3847
    %3849 = vmatmul.f32.gmra.mxu0 %v3816
    %v3850 = vpop.f32.mrf.mxu0
    %v3851 = vadd.f32 %v3798, %v3850
    %3852 = vdwg.mxu0
    %v3853 = vmul.f32 %v3836, %v3836
    %v3854 = vmul.f32 %v3839, %v3839
    %v3855 = vmul.f32 %v3842, %v3842
    %v3856 = vmul.f32 %v3845, %v3845
    %v3857 = vmul.f32 %v3848, %v3848
    %v3858 = vmul.f32 %v3851, %v3851
    %v3859 = vmul.f32 %v3836, %v3853
    %v3860 = vmul.f32 %v3839, %v3854
    %v3861 = vmul.f32 %v3842, %v3855
    %v3862 = vmul.f32 %v3845, %v3856
    %v3863 = vmul.f32 %v3848, %v3857
    %v3864 = vmul.f32 %v3851, %v3858
    %v3865 = vmul.f32 %v3859, 0.044715
    %v3866 = vmul.f32 %v3860, 0.044715
    %v3867 = vmul.f32 %v3861, 0.044715
    %v3868 = vmul.f32 %v3862, 0.044715
    %v3869 = vmul.f32 %v3863, 0.044715
    %v3870 = vmul.f32 %v3864, 0.044715
    %v3871 = vadd.f32 %v3836, %v3865
    %v3872 = vadd.f32 %v3839, %v3866
    %v3873 = vadd.f32 %v3842, %v3867
    %v3874 = vadd.f32 %v3845, %v3868
    %v3875 = vadd.f32 %v3848, %v3869
    %v3876 = vadd.f32 %v3851, %v3870
    %v3877 = vmul.f32 %v3871, 0.7978846
    %v3878 = vmul.f32 %v3872, 0.7978846
    %v3879 = vmul.f32 %v3873, 0.7978846
    %v3880 = vmul.f32 %v3874, 0.7978846
    %v3881 = vmul.f32 %v3875, 0.7978846
    %v3882 = vmul.f32 %v3876, 0.7978846
    %v3883 = vtanh.pop %v3877
    %v3884 = vtanh.pop %v3878
    %v3885 = vtanh.pop %v3879
    %v3886 = vtanh.pop %v3880
    %v3887 = vtanh.pop %v3881
    %v3888 = vtanh.pop %v3882
    %v3889 = vadd.f32 %v3883, 1.0
    %v3890 = vadd.f32 %v3884, 1.0
    %v3891 = vadd.f32 %v3885, 1.0
    %v3892 = vadd.f32 %v3886, 1.0
    %v3893 = vadd.f32 %v3887, 1.0
    %v3894 = vadd.f32 %v3888, 1.0
    %v3895 = vmul.f32 %v3889, 0.5
    %v3896 = vmul.f32 %v3890, 0.5
    %v3897 = vmul.f32 %v3891, 0.5
    %v3898 = vmul.f32 %v3892, 0.5
    %v3899 = vmul.f32 %v3893, 0.5
    %v3900 = vmul.f32 %v3894, 0.5
    %v3901 = vmul.f32 %v3836, %v3895
    %v3902 = vmul.f32 %v3839, %v3896
    %v3903 = vmul.f32 %v3842, %v3897
    %v3904 = vmul.f32 %v3845, %v3898
    %v3905 = vmul.f32 %v3848, %v3899
    %v3906 = vmul.f32 %v3851, %v3900
    %s3907 = scalar_lea.vmem %s15, 64
    %v3908 = vld [vmem:[%s3907] sm:$0xff]
    %v3909 = vld [vmem:[%s3907 + $0x8] sm:$0xff]
    %v3910 = vld [vmem:[%s3907 + $0x10] sm:$0xff]
    %v3911 = vld [vmem:[%s3907 + $0x18] sm:$0xff]
    %v3912 = vld [vmem:[%s3907 + $0x20] sm:$0xff]
    %v3913 = vld [vmem:[%s3907 + $0x28] sm:$0xff]
    %v3914 = vld [vmem:[%s3907 + $0x30] sm:$0xff]
    %v3915 = vld [vmem:[%s3907 + $0x38] sm:$0xff]
    %v3917 = vsel %vm2042, %v3901, 0
    %v3920 = vsel %vm2042, %v3902, 0
    %v3923 = vsel %vm2042, %v3903, 0
    %v3926 = vsel %vm2042, %v3904, 0
    %v3929 = vsel %vm2042, %v3905, 0
    %v3932 = vsel %vm2042, %v3906, 0
    %3934 = vmatpush.msra.mxu0 0.0
    %3935 = vmatpush.msra.mxu0 0.0
    %3936 = vmatpush.msra.mxu0 0.0
    %3937 = vmatpush.msra.mxu0 0.0
    %3938 = vmatpush.msra.mxu0 0.0
    %3939 = vmatpush.msra.mxu0 0.0
    %3940 = vmatpush.msra.mxu0 0.0
    %3941 = vmatpush.msra.mxu0 0.0
    %3942 = vmatpush.msra.mxu0 %v3915
    %3943 = vmatpush.msra.mxu0 %v3914
    %3944 = vmatpush.msra.mxu0 %v3913
    %3945 = vmatpush.msra.mxu0 %v3912
    %3946 = vmatpush.msra.mxu0 %v3911
    %3947 = vmatpush.msra.mxu0 %v3910
    %3948 = vmatpush.msra.mxu0 %v3909
    %3949 = vmatpush.msra.mxu0 %v3908
    %3950 = vmatmul.f32.gmra.mxu0 %v3917
    %v3951 = vpop.f32.mrf.mxu0
    %v3952 = vadd.f32 0.0, %v3951
    %3953 = vmatmul.f32.gmra.mxu0 %v3920
    %v3954 = vpop.f32.mrf.mxu0
    %3955 = vmatmul.f32.gmra.mxu0 %v3923
    %v3956 = vpop.f32.mrf.mxu0
    %3957 = vmatmul.f32.gmra.mxu0 %v3926
    %v3958 = vpop.f32.mrf.mxu0
    %v3959 = vadd.f32 0.0, %v3958
    %3960 = vmatmul.f32.gmra.mxu0 %v3929
    %v3961 = vpop.f32.mrf.mxu0
    %3962 = vmatmul.f32.gmra.mxu0 %v3932
    %v3963 = vpop.f32.mrf.mxu0
    %3964 = vdwg.mxu0
    %v3965 = vadd.f32 %v3630, %v3952
    %v3966 = vadd.f32 %v3633, %v3959
    %s3967 = scalar_lea.vmem [#allocation9], 1
    %v3968 = vld [vmem:[%s3967] sm:$0x1]
    %v3970 = vperm.slane %v3968, 0
    %v3972 = vadd.f32 %v3965, %v3970
    %v3973 = vadd.f32 %v3966, %v3970
    %v3974 = vld [vmem:[%s17] sm:$0x1]
    %v3975 = vld [vmem:[#allocation11] sm:$0x1]
    %v3978 = vrot.slane %v3973, 7
    %vm3979 = vcmask 1041409
    %v3980 = vsel %vm3979, %v3978, %v3972
    %vm3982 = vcmask 254976
    %v3983 = vsel %vm3982, %v3980, 0.0
    %3984 = vadd.xlane.f32.xlu0 %v3983
    %v3985 = vpop.xlane.xlu0 %3984
    %v3986 = vmul.f32 %v3985, %v266
    %v3988 = vrot.slane %v3986, 1
    %v3991 = vsub.f32 %v3972, %v3986
    %v3992 = vsub.f32 %v3973, %v3988
    %v3993 = vmul.f32 %v3991, %v3991
    %v3994 = vmul.f32 %v3992, %v3992
    %v3997 = vrot.slane %v3994, 7
    %v3998 = vsel %vm3979, %v3997, %v3993
    %v4000 = vsel %vm3982, %v3998, 0.0
    %4001 = vadd.xlane.f32.xlu0 %v4000
    %v4002 = vpop.xlane.xlu0 %4001
    %v4003 = vmul.f32 %v4002, %v266
    %v4004 = vadd.f32 %v4003, 1e-05
    %v4005 = vrsqrt.pop %v4004
    %v4006 = vmul.f32 %v4005, %v4004
    %v4007 = vmul.f32 %v4006, %v4005
    %v4008 = vmul.f32 0.5, %v4007
    %v4009 = vsub.f32 1.5, %v4008
    %v4010 = vmul.f32 %v4005, %v4009
    %vm4011 = vweird.f32 %v4004
    %vm4012 = vweird.f32 %v4005
    %vm4013 = vmor %vm4011, %vm4012
    %v4014 = vsel %vm4013, %v4005, %v4010
    %v4016 = vrot.slane %v4014, 1
    %v4019 = vmul.f32 %v3991, %v4014
    %v4020 = vmul.f32 %v3992, %v4016
    %v4022 = vperm.slane %v3974, 0
    %v4024 = vmul.f32 %v4019, %v4022
    %v4025 = vmul.f32 %v4020, %v4022
    %v4027 = vperm.slane %v3975, 0
    %v4029 = vadd.f32 %v4024, %v4027
    %v4030 = vadd.f32 %v4025, %v4027
    %v4031 = vld [vmem:[#allocation12] sm:$0xff]
    %v4032 = vld [vmem:[#allocation12 + $0x8] sm:$0xff]
    %v4033 = vld [vmem:[#allocation12 + $0x10] sm:$0xff]
    %v4034 = vld [vmem:[#allocation12 + $0x18] sm:$0xff]
    %v4035 = vld [vmem:[%s20] sm:$0x1]
    %v4037 = vperm.slane %v4035, 0
    %v4041 = vrot.slane %v4030, 7
    %v4042 = vsel %vm3979, %v4041, %v4029
    %v4043 = vsel %vm223, %v4042, 0
    %4045 = vmatpush.msra.mxu0 0.0
    %4046 = vmatpush.msra.mxu0 0.0
    %4047 = vmatpush.msra.mxu0 0.0
    %4048 = vmatpush.msra.mxu0 0.0
    %4049 = vmatpush.msra.mxu0 0.0
    %4050 = vmatpush.msra.mxu0 0.0
    %4051 = vmatpush.msra.mxu0 0.0
    %4052 = vmatpush.msra.mxu0 0.0
    %4053 = vmatpush.msra.mxu0 0.0
    %4054 = vmatpush.msra.mxu0 0.0
    %4055 = vmatpush.msra.mxu0 0.0
    %4056 = vmatpush.msra.mxu0 0.0
    %4057 = vmatpush.msra.mxu0 %v4034
    %4058 = vmatpush.msra.mxu0 %v4033
    %4059 = vmatpush.msra.mxu0 %v4032
    %4060 = vmatpush.msra.mxu0 %v4031
    %4061 = vmatmul.f32.gmra.mxu0 %v4043
    %v4062 = vpop.f32.mrf.mxu0
    %v4063 = vadd.f32 %v4037, %v4062
    %4064 = vdwg.mxu0
    %4065 = vst [vmem:[#allocation14] sm:$0x3] %v4063
    // Predicated region
    $region110: #{tpu_custom_call.1} parent=1 // pred_check
      _
    $region111: #{tpu_custom_call.1} parent=1 // pred_check_branch
      %4067 = sbr.rel (0) target = $region113
    $region112: #{tpu_custom_call.1} parent=1 // pred_region
      %4069 = vsyncadd [#allocation5], 0
      %s4071 = sshll.u32 [#allocation14], 4
      %s4072 = int_to_ptr.vmem [resolvable:$true] %s4071
      %s4073 = sshll.u32 %s21, 4
      %s4074 = int_to_ptr.hbm [resolvable:$true] %s4073
      %4076 = dma.vmem_to_hbm [thread:$0]  %s4072, 32, %s4074, [#allocation5]
    $region113: #{tpu_custom_call.1} parent=1 // pred_fallthru
      _
    // Predicated region
    $region114: #{tpu_custom_call.1} parent=1 // pred_check
      _
    $region115: #{tpu_custom_call.1} parent=1 // pred_check_branch
      %4078 = sbr.rel (0) target = $region117
    $region116: #{tpu_custom_call.1} parent=1 // pred_region
      %4080 = dma.done [#allocation5], 32
    $region117: #{tpu_custom_call.1} parent=1 // pred_fallthru
      _
    %4081 = vsyncpa [#allocation4], 1
    %4082 = vsyncpa [#allocation7], 1
    %4083 = vsyncpa [#allocation10], 1
    %4084 = vsyncpa [#allocation13], 1
    %4085 = vsyncpa [#allocation5], 1

</llo_original>
